<compile_context>
chip_gen: v6e
topology: v6e:2x2x1
jax: 0.10.0
libtpu: 0.0.40
codegen_flags: <defaults>
</compile_context>

<pallas_src>
import functools

import jax
import jax.numpy as jnp
import numpy as np
from jax.experimental import pallas as pl
from jax.experimental.pallas import tpu as pltpu


def _round_up(x, m):
    return ((x + m - 1) // m) * m


# ----------------------------------------------------------------------------
# Fused Pallas kernel (all GRU layers + FC + sigmoid)
# ----------------------------------------------------------------------------
def _make_fused_kernel(num_layers, t_chunk, b_pad, h_pad, o_pad):
    L, Tt, Bp, Hp, Op = num_layers, t_chunk, b_pad, h_pad, o_pad

    def kernel(*refs):
        # refs = x, (w_ih, w_hh, b_gx, b_hn) * L, fc_w, fc_b, y, h_state
        x_ref = refs[0]
        layer_refs = [refs[1 + 4 * l: 5 + 4 * l] for l in range(L)]
        fc_w_ref = refs[1 + 4 * L]
        fc_b_ref = refs[2 + 4 * L]
        y_ref = refs[3 + 4 * L]
        h_state = refs[4 + 4 * L]          # (L, Bp, Hp) VMEM, persists across chunks

        @pl.when(pl.program_id(0) == 0)
        def _init():
            h_state[...] = jnp.zeros_like(h_state)

        cur = x_ref[...]                    # (Tt*Bp, D) time-major rows of this chunk

        for l in range(L):
            w_ih_ref, w_hh_ref, b_gx_ref, b_hn_ref = layer_refs[l]

            # Hoisted input projection for the whole chunk: one big MXU matmul.
            # b_gx already folds b_ih (all gates) + b_hh (r,z gates).
            gx = jnp.dot(cur, w_ih_ref[...],
                         preferred_element_type=jnp.float32) + b_gx_ref[...]

            w_hh = w_hh_ref[...]            # (Hp, 3Hp)
            b_hn = b_hn_ref[...]            # (1, Hp)
            h = h_state[l]                  # (Bp, Hp) carried across chunks

            outs = []
            for t in range(Tt):             # fully unrolled recurrence
                gh = jnp.dot(h, w_hh, preferred_element_type=jnp.float32)  # (Bp, 3Hp)
                gx_t = gx[t * Bp:(t + 1) * Bp, :]                          # aligned slice
                r = jax.nn.sigmoid(gx_t[:, :Hp] + gh[:, :Hp])
                z = jax.nn.sigmoid(gx_t[:, Hp:2 * Hp] + gh[:, Hp:2 * Hp])
                n = jnp.tanh(gx_t[:, 2 * Hp:] + r * (gh[:, 2 * Hp:] + b_hn))
                h = (1.0 - z) * n + z * h
                outs.append(h)

            h_state[l] = h
            cur = jnp.concatenate(outs, axis=0)     # (Tt*Bp, Hp), next layer's input

        # FC + sigmoid epilogue on the whole chunk (lane-dense Op output).
        y = jnp.dot(cur, fc_w_ref[...],
                    preferred_element_type=jnp.float32) + fc_b_ref[...]
        y_ref[...] = jax.nn.sigmoid(y)

    return kernel


# ----------------------------------------------------------------------------
# One-time parameter preparation: transpose, pad to (8,128)-friendly layouts,
# fold biases.  PyTorch layouts in, kernel layouts out.
# ----------------------------------------------------------------------------
def prepare_params(params, hidden_size, output_size):
    H = hidden_size
    Hp = _round_up(H, 128)
    Op = _round_up(output_size, 128)
    flat = []
    for l, (w_ih, w_hh, b_ih, b_hh) in enumerate(params["gru"]):
        d_real = w_ih.shape[1]                      # input_size for l==0 else H
        d_pad = d_real if l == 0 else Hp
        w_ih_p = jnp.zeros((d_pad, 3 * Hp), jnp.float32)
        w_hh_p = jnp.zeros((Hp, 3 * Hp), jnp.float32)
        b_gx = jnp.zeros((1, 3 * Hp), jnp.float32)
        for g in range(3):                          # gate order (r, z, n), lane-aligned slabs
            w_ih_p = w_ih_p.at[:d_real, g * Hp:g * Hp + H].set(
                w_ih[g * H:(g + 1) * H, :].T)
            w_hh_p = w_hh_p.at[:H, g * Hp:g * Hp + H].set(
                w_hh[g * H:(g + 1) * H, :].T)
        # Fold b_ih (all gates) + b_hh (r,z only) into the hoisted projection bias;
        # b_hn must stay inside r*(...) per the PyTorch GRU definition.
        b_gx = b_gx.at[0, 0:H].set(b_ih[0:H] + b_hh[0:H])
        b_gx = b_gx.at[0, Hp:Hp + H].set(b_ih[H:2 * H] + b_hh[H:2 * H])
        b_gx = b_gx.at[0, 2 * Hp:2 * Hp + H].set(b_ih[2 * H:3 * H])
        b_hn = jnp.zeros((1, Hp), jnp.float32).at[0, :H].set(b_hh[2 * H:3 * H])
        flat += [w_ih_p, w_hh_p, b_gx, b_hn]

    fc_w_p = jnp.zeros((Hp, Op), jnp.float32).at[:H, :output_size].set(params["fc_w"].T)
    fc_b_p = jnp.zeros((1, Op), jnp.float32).at[0, :output_size].set(params["fc_b"])
    flat += [fc_w_p, fc_b_p]
    return flat


# ----------------------------------------------------------------------------
# Forward wrapper
# ----------------------------------------------------------------------------
@functools.partial(jax.jit, static_argnames=("output_size", "t_chunk"))
def gru_model_forward(x, flat_params, *, output_size, t_chunk):
    """x: (B, T, input_size) batch-first, like the PyTorch module.  Returns (B*T, output_size)."""
    B, T, D = x.shape
    L = (len(flat_params) - 2) // 4
    Hp = flat_params[1].shape[0]        # layer-0 w_hh_p: (Hp, 3Hp)
    Op = flat_params[-1].shape[1]       # fc_b: (1, Op)
    Bp = _round_up(B, 8)
    Tt = t_chunk
    assert T % Tt == 0, "seq_len must be divisible by t_chunk"

    # Pad batch to a sublane multiple, go time-major, flatten to rows.
    x_p = jnp.zeros((Bp, T, D), x.dtype).at[:B].set(x)
    x_tm = jnp.swapaxes(x_p, 0, 1).reshape(T * Bp, D)

    rows = Tt * Bp
    kernel = _make_fused_kernel(L, Tt, Bp, Hp, Op)

    in_specs = [pl.BlockSpec((rows, D), lambda c: (c, 0))]
    for p in flat_params:               # weights: full-array blocks, resident once
        in_specs.append(pl.BlockSpec(p.shape, lambda c: (0, 0)))

    y_flat = pl.pallas_call(
        kernel,
        out_shape=jax.ShapeDtypeStruct((T * Bp, Op), jnp.float32),
        grid=(T // Tt,),
        in_specs=in_specs,
        out_specs=pl.BlockSpec((rows, Op), lambda c: (c, 0)),
        scratch_shapes=[pltpu.VMEM((L, Bp, Hp), jnp.float32)],
        compiler_params=pltpu.CompilerParams(
            dimension_semantics=("arbitrary",)),   # time chunks are sequential (h carry)
    )(x_tm, *flat_params)

    # (T*Bp, Op) time-major -> batch-first (B*T, output_size), matching
    # PyTorch's out.contiguous().view(-1, hidden_size) row order.
    y = y_flat.reshape(T, Bp, Op)[:, :B, :]
    y = jnp.swapaxes(y, 0, 1).reshape(B * T, Op)[:, :output_size]
    return y


# ----------------------------------------------------------------------------
# Pure-JAX reference (unpadded, PyTorch-layout params) for a numerical check
# ----------------------------------------------------------------------------
def gru_model_reference(x, params):
    B, T, _ = x.shape
    seq = x
    for (w_ih, w_hh, b_ih, b_hh) in params["gru"]:
        H = w_hh.shape[1]
        hs = []
        h = jnp.zeros((B, H), jnp.float32)
        for t in range(T):
            gx = seq[:, t, :] @ w_ih.T + b_ih
            gh = seq.dtype.type(0) + h @ w_hh.T + b_hh
            r = jax.nn.sigmoid(gx[:, :H] + gh[:, :H])
            z = jax.nn.sigmoid(gx[:, H:2 * H] + gh[:, H:2 * H])
            n = jnp.tanh(gx[:, 2 * H:] + r * gh[:, 2 * H:])
            h = (1.0 - z) * n + z * h
            hs.append(h)
        seq = jnp.stack(hs, axis=1)  # (B, T, H)
    out = seq.reshape(B * T, -1)
    return jax.nn.sigmoid(out @ params["fc_w"].T + params["fc_b"])


# ----------------------------------------------------------------------------
# Deterministic parameter construction (matches nn.GRU / nn.Linear shapes)
# ----------------------------------------------------------------------------
def init_params(key, input_size, hidden_size, layer_size, output_size):
    stdv = 1.0 / np.sqrt(hidden_size)
    gru_params = []
    for l in range(layer_size):
        d_in = input_size if l == 0 else hidden_size
        key, k1, k2, k3, k4 = jax.random.split(key, 5)
        w_ih = jax.random.uniform(k1, (3 * hidden_size, d_in), jnp.float32, -stdv, stdv)
        w_hh = jax.random.uniform(k2, (3 * hidden_size, hidden_size), jnp.float32, -stdv, stdv)
        b_ih = jax.random.uniform(k3, (3 * hidden_size,), jnp.float32, -stdv, stdv)
        b_hh = jax.random.uniform(k4, (3 * hidden_size,), jnp.float32, -stdv, stdv)
        gru_params.append((w_ih, w_hh, b_ih, b_hh))
    key, k5, k6 = jax.random.split(key, 3)
    fc_w = jax.random.uniform(k5, (output_size, hidden_size), jnp.float32, -stdv, stdv)
    fc_b = jax.random.uniform(k6, (output_size,), jnp.float32, -stdv, stdv)
    return {"gru": gru_params, "fc_w": fc_w, "fc_b": fc_b}


if __name__ == "__main__":
    batch, seq_len = 2, 8
    input_size, hidden_size, layer_size, output_size = 16, 32, 2, 4

    key = jax.random.PRNGKey(0)
    kx, kp = jax.random.split(key)
    x = jax.random.normal(kx, (batch, seq_len, input_size), jnp.float32)
    params = init_params(kp, input_size, hidden_size, layer_size, output_size)

    # One-time layout prep (transpose / pad / bias-fold), outside the jitted forward.
    flat_params = prepare_params(params, hidden_size, output_size)

    # t_chunk=4 -> grid of 2 time chunks, exercising the persistent-h pipeline.
    y = gru_model_forward(x, flat_params, output_size=output_size, t_chunk=4)
    y = jax.block_until_ready(y)

    assert y.shape == (batch * seq_len, output_size), y.shape

    y_ref = gru_model_reference(x, params)
    np.testing.assert_allclose(np.asarray(y), np.asarray(y_ref), rtol=1e-2, atol=1e-2)

    print("KERNEL_OK")
</pallas_src>

<mosaic_0001>
module attributes {stable_mosaic.version = 11 : i64} {
  func.func @kernel(%arg0: i32, %arg1: memref<32x16xf32, #tpu.memory_space<vmem>>, %arg2: memref<16x384xf32, #tpu.memory_space<vmem>>, %arg3: memref<128x384xf32, #tpu.memory_space<vmem>>, %arg4: memref<1x384xf32, #tpu.memory_space<vmem>>, %arg5: memref<1x128xf32, #tpu.memory_space<vmem>>, %arg6: memref<128x384xf32, #tpu.memory_space<vmem>>, %arg7: memref<128x384xf32, #tpu.memory_space<vmem>>, %arg8: memref<1x384xf32, #tpu.memory_space<vmem>>, %arg9: memref<1x128xf32, #tpu.memory_space<vmem>>, %arg10: memref<128x128xf32, #tpu.memory_space<vmem>>, %arg11: memref<1x128xf32, #tpu.memory_space<vmem>>, %arg12: memref<32x128xf32, #tpu.memory_space<vmem>>, %arg13: memref<2x8x128xf32, #tpu.memory_space<vmem>>) attributes {dimension_semantics = [#tpu.dimension_semantics<arbitrary>], iteration_bounds = array<i64: 2>, scalar_prefetch = 0 : i64, scratch_operands = 1 : i64, tpu.core_type = #tpu.core_type<tc>, window_params = [{transform_indices = @transform_0, window_bounds = array<i64: 32, 16>}, {pipeline_mode = #tpu.pipeline_mode<synchronous>, transform_indices = @transform_1, window_bounds = array<i64: 16, 384>}, {pipeline_mode = #tpu.pipeline_mode<synchronous>, transform_indices = @transform_2, window_bounds = array<i64: 128, 384>}, {pipeline_mode = #tpu.pipeline_mode<synchronous>, transform_indices = @transform_3, window_bounds = array<i64: 1, 384>}, {pipeline_mode = #tpu.pipeline_mode<synchronous>, transform_indices = @transform_4, window_bounds = array<i64: 1, 128>}, {pipeline_mode = #tpu.pipeline_mode<synchronous>, transform_indices = @transform_5, window_bounds = array<i64: 128, 384>}, {pipeline_mode = #tpu.pipeline_mode<synchronous>, transform_indices = @transform_6, window_bounds = array<i64: 128, 384>}, {pipeline_mode = #tpu.pipeline_mode<synchronous>, transform_indices = @transform_7, window_bounds = array<i64: 1, 384>}, {pipeline_mode = #tpu.pipeline_mode<synchronous>, transform_indices = @transform_8, window_bounds = array<i64: 1, 128>}, {pipeline_mode = #tpu.pipeline_mode<synchronous>, transform_indices = @transform_9, window_bounds = array<i64: 128, 128>}, {pipeline_mode = #tpu.pipeline_mode<synchronous>, transform_indices = @transform_10, window_bounds = array<i64: 1, 128>}, {transform_indices = @transform_11, window_bounds = array<i64: 32, 128>}]} {
    %c0_i32 = arith.constant 0 : i32
    %0 = arith.cmpi eq, %arg0, %c0_i32 : i32
    %1 = arith.extui %0 : i1 to i32
    %c0_i32_0 = arith.constant 0 : i32
    %2 = arith.cmpi ne, %1, %c0_i32_0 : i32
    scf.if %2 {
      %cst_70 = arith.constant 0.000000e+00 : f32
      %281 = vector.broadcast %cst_70 : f32 to vector<2x8x128xf32>
      %c0_71 = arith.constant 0 : index
      %c0_72 = arith.constant 0 : index
      %c0_73 = arith.constant 0 : index
      %282 = vector.load %arg13[%c0_71, %c0_72, %c0_73] : memref<2x8x128xf32, #tpu.memory_space<vmem>>, vector<2x8x128xf32>
      tpu.vector_store %arg13[%c0_71, %c0_72, %c0_73], %281 {strides = array<i32>} : memref<2x8x128xf32, #tpu.memory_space<vmem>>, vector<2x8x128xf32>,
    } else {
    }
    %c0 = arith.constant 0 : index
    %c0_1 = arith.constant 0 : index
    %3 = vector.load %arg1[%c0, %c0_1] : memref<32x16xf32, #tpu.memory_space<vmem>>, vector<32x16xf32>
    %c0_2 = arith.constant 0 : index
    %c0_3 = arith.constant 0 : index
    %4 = vector.load %arg2[%c0_2, %c0_3] : memref<16x384xf32, #tpu.memory_space<vmem>>, vector<16x384xf32>
    %cst = arith.constant dense<0.000000e+00> : vector<32x384xf32>
    %5 = tpu.matmul %3, %4, %cst {dimension_numbers = #tpu.dot_dimension_numbers<[1], [0], [0], [1], [0, 0, 1, 1], [], []>} : vector<32x16xf32>, vector<16x384xf32>, vector<32x384xf32> -> vector<32x384xf32>
    %c0_4 = arith.constant 0 : index
    %c0_5 = arith.constant 0 : index
    %6 = vector.load %arg4[%c0_4, %c0_5] : memref<1x384xf32, #tpu.memory_space<vmem>>, vector<1x384xf32>
    %7 = vector.broadcast %6 : vector<1x384xf32> to vector<32x384xf32>
    %8 = arith.addf %5, %7 : vector<32x384xf32>
    %c0_6 = arith.constant 0 : index
    %c0_7 = arith.constant 0 : index
    %9 = vector.load %arg3[%c0_6, %c0_7] : memref<128x384xf32, #tpu.memory_space<vmem>>, vector<128x384xf32>
    %c0_8 = arith.constant 0 : index
    %c0_9 = arith.constant 0 : index
    %10 = vector.load %arg5[%c0_8, %c0_9] : memref<1x128xf32, #tpu.memory_space<vmem>>, vector<1x128xf32>
    %c0_10 = arith.constant 0 : index
    %c0_11 = arith.constant 0 : index
    %c0_12 = arith.constant 0 : index
    %11 = vector.load %arg13[%c0_10, %c0_11, %c0_12] : memref<2x8x128xf32, #tpu.memory_space<vmem>>, vector<1x8x128xf32>
    %12 = vector.shape_cast %11 : vector<1x8x128xf32> to vector<8x128xf32>
    %cst_13 = arith.constant dense<0.000000e+00> : vector<8x384xf32>
    %13 = tpu.matmul %12, %9, %cst_13 {dimension_numbers = #tpu.dot_dimension_numbers<[1], [0], [0], [1], [0, 0, 1, 1], [], []>} : vector<8x128xf32>, vector<128x384xf32>, vector<8x384xf32> -> vector<8x384xf32>
    %14 = vector.extract_strided_slice %8 {offsets = [0, 0], sizes = [8, 384], strides = [1, 1]} : vector<32x384xf32> to vector<8x384xf32>
    %15 = vector.extract_strided_slice %14 {offsets = [0, 0], sizes = [8, 128], strides = [1, 1]} : vector<8x384xf32> to vector<8x128xf32>
    %16 = vector.extract_strided_slice %13 {offsets = [0, 0], sizes = [8, 128], strides = [1, 1]} : vector<8x384xf32> to vector<8x128xf32>
    %17 = arith.addf %15, %16 : vector<8x128xf32>
    %18 = arith.negf %17 : vector<8x128xf32>
    %19 = math.exp %18 : vector<8x128xf32>
    %cst_14 = arith.constant 1.000000e+00 : f32
    %20 = vector.broadcast %cst_14 : f32 to vector<8x128xf32>
    %21 = arith.addf %20, %19 : vector<8x128xf32>
    %22 = arith.divf %20, %21 : vector<8x128xf32>
    %23 = vector.extract_strided_slice %14 {offsets = [0, 128], sizes = [8, 128], strides = [1, 1]} : vector<8x384xf32> to vector<8x128xf32>
    %24 = vector.extract_strided_slice %13 {offsets = [0, 128], sizes = [8, 128], strides = [1, 1]} : vector<8x384xf32> to vector<8x128xf32>
    %25 = arith.addf %23, %24 : vector<8x128xf32>
    %26 = arith.negf %25 : vector<8x128xf32>
    %27 = math.exp %26 : vector<8x128xf32>
    %cst_15 = arith.constant 1.000000e+00 : f32
    %28 = vector.broadcast %cst_15 : f32 to vector<8x128xf32>
    %29 = arith.addf %28, %27 : vector<8x128xf32>
    %30 = arith.divf %28, %29 : vector<8x128xf32>
    %31 = vector.extract_strided_slice %14 {offsets = [0, 256], sizes = [8, 128], strides = [1, 1]} : vector<8x384xf32> to vector<8x128xf32>
    %32 = vector.extract_strided_slice %13 {offsets = [0, 256], sizes = [8, 128], strides = [1, 1]} : vector<8x384xf32> to vector<8x128xf32>
    %33 = vector.broadcast %10 : vector<1x128xf32> to vector<8x128xf32>
    %34 = arith.addf %32, %33 : vector<8x128xf32>
    %35 = arith.mulf %22, %34 : vector<8x128xf32>
    %36 = arith.addf %31, %35 : vector<8x128xf32>
    %37 = math.tanh %36 : vector<8x128xf32>
    %cst_16 = arith.constant 1.000000e+00 : f32
    %38 = vector.broadcast %cst_16 : f32 to vector<8x128xf32>
    %39 = arith.subf %38, %30 : vector<8x128xf32>
    %40 = arith.mulf %39, %37 : vector<8x128xf32>
    %41 = arith.mulf %30, %12 : vector<8x128xf32>
    %42 = arith.addf %40, %41 : vector<8x128xf32>
    %cst_17 = arith.constant dense<0.000000e+00> : vector<8x384xf32>
    %43 = tpu.matmul %42, %9, %cst_17 {dimension_numbers = #tpu.dot_dimension_numbers<[1], [0], [0], [1], [0, 0, 1, 1], [], []>} : vector<8x128xf32>, vector<128x384xf32>, vector<8x384xf32> -> vector<8x384xf32>
    %44 = vector.extract_strided_slice %8 {offsets = [8, 0], sizes = [8, 384], strides = [1, 1]} : vector<32x384xf32> to vector<8x384xf32>
    %45 = vector.extract_strided_slice %44 {offsets = [0, 0], sizes = [8, 128], strides = [1, 1]} : vector<8x384xf32> to vector<8x128xf32>
    %46 = vector.extract_strided_slice %43 {offsets = [0, 0], sizes = [8, 128], strides = [1, 1]} : vector<8x384xf32> to vector<8x128xf32>
    %47 = arith.addf %45, %46 : vector<8x128xf32>
    %48 = arith.negf %47 : vector<8x128xf32>
    %49 = math.exp %48 : vector<8x128xf32>
    %cst_18 = arith.constant 1.000000e+00 : f32
    %50 = vector.broadcast %cst_18 : f32 to vector<8x128xf32>
    %51 = arith.addf %50, %49 : vector<8x128xf32>
    %52 = arith.divf %50, %51 : vector<8x128xf32>
    %53 = vector.extract_strided_slice %44 {offsets = [0, 128], sizes = [8, 128], strides = [1, 1]} : vector<8x384xf32> to vector<8x128xf32>
    %54 = vector.extract_strided_slice %43 {offsets = [0, 128], sizes = [8, 128], strides = [1, 1]} : vector<8x384xf32> to vector<8x128xf32>
    %55 = arith.addf %53, %54 : vector<8x128xf32>
    %56 = arith.negf %55 : vector<8x128xf32>
    %57 = math.exp %56 : vector<8x128xf32>
    %cst_19 = arith.constant 1.000000e+00 : f32
    %58 = vector.broadcast %cst_19 : f32 to vector<8x128xf32>
    %59 = arith.addf %58, %57 : vector<8x128xf32>
    %60 = arith.divf %58, %59 : vector<8x128xf32>
    %61 = vector.extract_strided_slice %44 {offsets = [0, 256], sizes = [8, 128], strides = [1, 1]} : vector<8x384xf32> to vector<8x128xf32>
    %62 = vector.extract_strided_slice %43 {offsets = [0, 256], sizes = [8, 128], strides = [1, 1]} : vector<8x384xf32> to vector<8x128xf32>
    %63 = vector.broadcast %10 : vector<1x128xf32> to vector<8x128xf32>
    %64 = arith.addf %62, %63 : vector<8x128xf32>
    %65 = arith.mulf %52, %64 : vector<8x128xf32>
    %66 = arith.addf %61, %65 : vector<8x128xf32>
    %67 = math.tanh %66 : vector<8x128xf32>
    %cst_20 = arith.constant 1.000000e+00 : f32
    %68 = vector.broadcast %cst_20 : f32 to vector<8x128xf32>
    %69 = arith.subf %68, %60 : vector<8x128xf32>
    %70 = arith.mulf %69, %67 : vector<8x128xf32>
    %71 = arith.mulf %60, %42 : vector<8x128xf32>
    %72 = arith.addf %70, %71 : vector<8x128xf32>
    %cst_21 = arith.constant dense<0.000000e+00> : vector<8x384xf32>
    %73 = tpu.matmul %72, %9, %cst_21 {dimension_numbers = #tpu.dot_dimension_numbers<[1], [0], [0], [1], [0, 0, 1, 1], [], []>} : vector<8x128xf32>, vector<128x384xf32>, vector<8x384xf32> -> vector<8x384xf32>
    %74 = vector.extract_strided_slice %8 {offsets = [16, 0], sizes = [8, 384], strides = [1, 1]} : vector<32x384xf32> to vector<8x384xf32>
    %75 = vector.extract_strided_slice %74 {offsets = [0, 0], sizes = [8, 128], strides = [1, 1]} : vector<8x384xf32> to vector<8x128xf32>
    %76 = vector.extract_strided_slice %73 {offsets = [0, 0], sizes = [8, 128], strides = [1, 1]} : vector<8x384xf32> to vector<8x128xf32>
    %77 = arith.addf %75, %76 : vector<8x128xf32>
    %78 = arith.negf %77 : vector<8x128xf32>
    %79 = math.exp %78 : vector<8x128xf32>
    %cst_22 = arith.constant 1.000000e+00 : f32
    %80 = vector.broadcast %cst_22 : f32 to vector<8x128xf32>
    %81 = arith.addf %80, %79 : vector<8x128xf32>
    %82 = arith.divf %80, %81 : vector<8x128xf32>
    %83 = vector.extract_strided_slice %74 {offsets = [0, 128], sizes = [8, 128], strides = [1, 1]} : vector<8x384xf32> to vector<8x128xf32>
    %84 = vector.extract_strided_slice %73 {offsets = [0, 128], sizes = [8, 128], strides = [1, 1]} : vector<8x384xf32> to vector<8x128xf32>
    %85 = arith.addf %83, %84 : vector<8x128xf32>
    %86 = arith.negf %85 : vector<8x128xf32>
    %87 = math.exp %86 : vector<8x128xf32>
    %cst_23 = arith.constant 1.000000e+00 : f32
    %88 = vector.broadcast %cst_23 : f32 to vector<8x128xf32>
    %89 = arith.addf %88, %87 : vector<8x128xf32>
    %90 = arith.divf %88, %89 : vector<8x128xf32>
    %91 = vector.extract_strided_slice %74 {offsets = [0, 256], sizes = [8, 128], strides = [1, 1]} : vector<8x384xf32> to vector<8x128xf32>
    %92 = vector.extract_strided_slice %73 {offsets = [0, 256], sizes = [8, 128], strides = [1, 1]} : vector<8x384xf32> to vector<8x128xf32>
    %93 = vector.broadcast %10 : vector<1x128xf32> to vector<8x128xf32>
    %94 = arith.addf %92, %93 : vector<8x128xf32>
    %95 = arith.mulf %82, %94 : vector<8x128xf32>
    %96 = arith.addf %91, %95 : vector<8x128xf32>
    %97 = math.tanh %96 : vector<8x128xf32>
    %cst_24 = arith.constant 1.000000e+00 : f32
    %98 = vector.broadcast %cst_24 : f32 to vector<8x128xf32>
    %99 = arith.subf %98, %90 : vector<8x128xf32>
    %100 = arith.mulf %99, %97 : vector<8x128xf32>
    %101 = arith.mulf %90, %72 : vector<8x128xf32>
    %102 = arith.addf %100, %101 : vector<8x128xf32>
    %cst_25 = arith.constant dense<0.000000e+00> : vector<8x384xf32>
    %103 = tpu.matmul %102, %9, %cst_25 {dimension_numbers = #tpu.dot_dimension_numbers<[1], [0], [0], [1], [0, 0, 1, 1], [], []>} : vector<8x128xf32>, vector<128x384xf32>, vector<8x384xf32> -> vector<8x384xf32>
    %104 = vector.extract_strided_slice %8 {offsets = [24, 0], sizes = [8, 384], strides = [1, 1]} : vector<32x384xf32> to vector<8x384xf32>
    %105 = vector.extract_strided_slice %104 {offsets = [0, 0], sizes = [8, 128], strides = [1, 1]} : vector<8x384xf32> to vector<8x128xf32>
    %106 = vector.extract_strided_slice %103 {offsets = [0, 0], sizes = [8, 128], strides = [1, 1]} : vector<8x384xf32> to vector<8x128xf32>
    %107 = arith.addf %105, %106 : vector<8x128xf32>
    %108 = arith.negf %107 : vector<8x128xf32>
    %109 = math.exp %108 : vector<8x128xf32>
    %cst_26 = arith.constant 1.000000e+00 : f32
    %110 = vector.broadcast %cst_26 : f32 to vector<8x128xf32>
    %111 = arith.addf %110, %109 : vector<8x128xf32>
    %112 = arith.divf %110, %111 : vector<8x128xf32>
    %113 = vector.extract_strided_slice %104 {offsets = [0, 128], sizes = [8, 128], strides = [1, 1]} : vector<8x384xf32> to vector<8x128xf32>
    %114 = vector.extract_strided_slice %103 {offsets = [0, 128], sizes = [8, 128], strides = [1, 1]} : vector<8x384xf32> to vector<8x128xf32>
    %115 = arith.addf %113, %114 : vector<8x128xf32>
    %116 = arith.negf %115 : vector<8x128xf32>
    %117 = math.exp %116 : vector<8x128xf32>
    %cst_27 = arith.constant 1.000000e+00 : f32
    %118 = vector.broadcast %cst_27 : f32 to vector<8x128xf32>
    %119 = arith.addf %118, %117 : vector<8x128xf32>
    %120 = arith.divf %118, %119 : vector<8x128xf32>
    %121 = vector.extract_strided_slice %104 {offsets = [0, 256], sizes = [8, 128], strides = [1, 1]} : vector<8x384xf32> to vector<8x128xf32>
    %122 = vector.extract_strided_slice %103 {offsets = [0, 256], sizes = [8, 128], strides = [1, 1]} : vector<8x384xf32> to vector<8x128xf32>
    %123 = vector.broadcast %10 : vector<1x128xf32> to vector<8x128xf32>
    %124 = arith.addf %122, %123 : vector<8x128xf32>
    %125 = arith.mulf %112, %124 : vector<8x128xf32>
    %126 = arith.addf %121, %125 : vector<8x128xf32>
    %127 = math.tanh %126 : vector<8x128xf32>
    %cst_28 = arith.constant 1.000000e+00 : f32
    %128 = vector.broadcast %cst_28 : f32 to vector<8x128xf32>
    %129 = arith.subf %128, %120 : vector<8x128xf32>
    %130 = arith.mulf %129, %127 : vector<8x128xf32>
    %131 = arith.mulf %120, %102 : vector<8x128xf32>
    %132 = arith.addf %130, %131 : vector<8x128xf32>
    %c0_29 = arith.constant 0 : index
    %c0_30 = arith.constant 0 : index
    %c0_31 = arith.constant 0 : index
    %133 = vector.load %arg13[%c0_29, %c0_30, %c0_31] : memref<2x8x128xf32, #tpu.memory_space<vmem>>, vector<1x8x128xf32>
    %134 = vector.shape_cast %133 : vector<1x8x128xf32> to vector<8x128xf32>
    %135 = vector.shape_cast %132 : vector<8x128xf32> to vector<1x8x128xf32>
    tpu.vector_store %arg13[%c0_29, %c0_30, %c0_31], %135 {strides = array<i32>} : memref<2x8x128xf32, #tpu.memory_space<vmem>>, vector<1x8x128xf32>,
    %136 = tpu.concatenate %42, %72, %102, %132 in 0 : vector<8x128xf32>, vector<8x128xf32>, vector<8x128xf32>, vector<8x128xf32> -> vector<32x128xf32>
    %c0_32 = arith.constant 0 : index
    %c0_33 = arith.constant 0 : index
    %137 = vector.load %arg6[%c0_32, %c0_33] : memref<128x384xf32, #tpu.memory_space<vmem>>, vector<128x384xf32>
    %cst_34 = arith.constant dense<0.000000e+00> : vector<32x384xf32>
    %138 = tpu.matmul %136, %137, %cst_34 {dimension_numbers = #tpu.dot_dimension_numbers<[1], [0], [0], [1], [0, 0, 1, 1], [], []>} : vector<32x128xf32>, vector<128x384xf32>, vector<32x384xf32> -> vector<32x384xf32>
    %c0_35 = arith.constant 0 : index
    %c0_36 = arith.constant 0 : index
    %139 = vector.load %arg8[%c0_35, %c0_36] : memref<1x384xf32, #tpu.memory_space<vmem>>, vector<1x384xf32>
    %140 = vector.broadcast %139 : vector<1x384xf32> to vector<32x384xf32>
    %141 = arith.addf %138, %140 : vector<32x384xf32>
    %c0_37 = arith.constant 0 : index
    %c0_38 = arith.constant 0 : index
    %142 = vector.load %arg7[%c0_37, %c0_38] : memref<128x384xf32, #tpu.memory_space<vmem>>, vector<128x384xf32>
    %c0_39 = arith.constant 0 : index
    %c0_40 = arith.constant 0 : index
    %143 = vector.load %arg9[%c0_39, %c0_40] : memref<1x128xf32, #tpu.memory_space<vmem>>, vector<1x128xf32>
    %c1 = arith.constant 1 : index
    %c0_41 = arith.constant 0 : index
    %c0_42 = arith.constant 0 : index
    %144 = vector.load %arg13[%c1, %c0_41, %c0_42] : memref<2x8x128xf32, #tpu.memory_space<vmem>>, vector<1x8x128xf32>
    %145 = vector.shape_cast %144 : vector<1x8x128xf32> to vector<8x128xf32>
    %cst_43 = arith.constant dense<0.000000e+00> : vector<8x384xf32>
    %146 = tpu.matmul %145, %142, %cst_43 {dimension_numbers = #tpu.dot_dimension_numbers<[1], [0], [0], [1], [0, 0, 1, 1], [], []>} : vector<8x128xf32>, vector<128x384xf32>, vector<8x384xf32> -> vector<8x384xf32>
    %147 = vector.extract_strided_slice %141 {offsets = [0, 0], sizes = [8, 384], strides = [1, 1]} : vector<32x384xf32> to vector<8x384xf32>
    %148 = vector.extract_strided_slice %147 {offsets = [0, 0], sizes = [8, 128], strides = [1, 1]} : vector<8x384xf32> to vector<8x128xf32>
    %149 = vector.extract_strided_slice %146 {offsets = [0, 0], sizes = [8, 128], strides = [1, 1]} : vector<8x384xf32> to vector<8x128xf32>
    %150 = arith.addf %148, %149 : vector<8x128xf32>
    %151 = arith.negf %150 : vector<8x128xf32>
    %152 = math.exp %151 : vector<8x128xf32>
    %cst_44 = arith.constant 1.000000e+00 : f32
    %153 = vector.broadcast %cst_44 : f32 to vector<8x128xf32>
    %154 = arith.addf %153, %152 : vector<8x128xf32>
    %155 = arith.divf %153, %154 : vector<8x128xf32>
    %156 = vector.extract_strided_slice %147 {offsets = [0, 128], sizes = [8, 128], strides = [1, 1]} : vector<8x384xf32> to vector<8x128xf32>
    %157 = vector.extract_strided_slice %146 {offsets = [0, 128], sizes = [8, 128], strides = [1, 1]} : vector<8x384xf32> to vector<8x128xf32>
    %158 = arith.addf %156, %157 : vector<8x128xf32>
    %159 = arith.negf %158 : vector<8x128xf32>
    %160 = math.exp %159 : vector<8x128xf32>
    %cst_45 = arith.constant 1.000000e+00 : f32
    %161 = vector.broadcast %cst_45 : f32 to vector<8x128xf32>
    %162 = arith.addf %161, %160 : vector<8x128xf32>
    %163 = arith.divf %161, %162 : vector<8x128xf32>
    %164 = vector.extract_strided_slice %147 {offsets = [0, 256], sizes = [8, 128], strides = [1, 1]} : vector<8x384xf32> to vector<8x128xf32>
    %165 = vector.extract_strided_slice %146 {offsets = [0, 256], sizes = [8, 128], strides = [1, 1]} : vector<8x384xf32> to vector<8x128xf32>
    %166 = vector.broadcast %143 : vector<1x128xf32> to vector<8x128xf32>
    %167 = arith.addf %165, %166 : vector<8x128xf32>
    %168 = arith.mulf %155, %167 : vector<8x128xf32>
    %169 = arith.addf %164, %168 : vector<8x128xf32>
    %170 = math.tanh %169 : vector<8x128xf32>
    %cst_46 = arith.constant 1.000000e+00 : f32
    %171 = vector.broadcast %cst_46 : f32 to vector<8x128xf32>
    %172 = arith.subf %171, %163 : vector<8x128xf32>
    %173 = arith.mulf %172, %170 : vector<8x128xf32>
    %174 = arith.mulf %163, %145 : vector<8x128xf32>
    %175 = arith.addf %173, %174 : vector<8x128xf32>
    %cst_47 = arith.constant dense<0.000000e+00> : vector<8x384xf32>
    %176 = tpu.matmul %175, %142, %cst_47 {dimension_numbers = #tpu.dot_dimension_numbers<[1], [0], [0], [1], [0, 0, 1, 1], [], []>} : vector<8x128xf32>, vector<128x384xf32>, vector<8x384xf32> -> vector<8x384xf32>
    %177 = vector.extract_strided_slice %141 {offsets = [8, 0], sizes = [8, 384], strides = [1, 1]} : vector<32x384xf32> to vector<8x384xf32>
    %178 = vector.extract_strided_slice %177 {offsets = [0, 0], sizes = [8, 128], strides = [1, 1]} : vector<8x384xf32> to vector<8x128xf32>
    %179 = vector.extract_strided_slice %176 {offsets = [0, 0], sizes = [8, 128], strides = [1, 1]} : vector<8x384xf32> to vector<8x128xf32>
    %180 = arith.addf %178, %179 : vector<8x128xf32>
    %181 = arith.negf %180 : vector<8x128xf32>
    %182 = math.exp %181 : vector<8x128xf32>
    %cst_48 = arith.constant 1.000000e+00 : f32
    %183 = vector.broadcast %cst_48 : f32 to vector<8x128xf32>
    %184 = arith.addf %183, %182 : vector<8x128xf32>
    %185 = arith.divf %183, %184 : vector<8x128xf32>
    %186 = vector.extract_strided_slice %177 {offsets = [0, 128], sizes = [8, 128], strides = [1, 1]} : vector<8x384xf32> to vector<8x128xf32>
    %187 = vector.extract_strided_slice %176 {offsets = [0, 128], sizes = [8, 128], strides = [1, 1]} : vector<8x384xf32> to vector<8x128xf32>
    %188 = arith.addf %186, %187 : vector<8x128xf32>
    %189 = arith.negf %188 : vector<8x128xf32>
    %190 = math.exp %189 : vector<8x128xf32>
    %cst_49 = arith.constant 1.000000e+00 : f32
    %191 = vector.broadcast %cst_49 : f32 to vector<8x128xf32>
    %192 = arith.addf %191, %190 : vector<8x128xf32>
    %193 = arith.divf %191, %192 : vector<8x128xf32>
    %194 = vector.extract_strided_slice %177 {offsets = [0, 256], sizes = [8, 128], strides = [1, 1]} : vector<8x384xf32> to vector<8x128xf32>
    %195 = vector.extract_strided_slice %176 {offsets = [0, 256], sizes = [8, 128], strides = [1, 1]} : vector<8x384xf32> to vector<8x128xf32>
    %196 = vector.broadcast %143 : vector<1x128xf32> to vector<8x128xf32>
    %197 = arith.addf %195, %196 : vector<8x128xf32>
    %198 = arith.mulf %185, %197 : vector<8x128xf32>
    %199 = arith.addf %194, %198 : vector<8x128xf32>
    %200 = math.tanh %199 : vector<8x128xf32>
    %cst_50 = arith.constant 1.000000e+00 : f32
    %201 = vector.broadcast %cst_50 : f32 to vector<8x128xf32>
    %202 = arith.subf %201, %193 : vector<8x128xf32>
    %203 = arith.mulf %202, %200 : vector<8x128xf32>
    %204 = arith.mulf %193, %175 : vector<8x128xf32>
    %205 = arith.addf %203, %204 : vector<8x128xf32>
    %cst_51 = arith.constant dense<0.000000e+00> : vector<8x384xf32>
    %206 = tpu.matmul %205, %142, %cst_51 {dimension_numbers = #tpu.dot_dimension_numbers<[1], [0], [0], [1], [0, 0, 1, 1], [], []>} : vector<8x128xf32>, vector<128x384xf32>, vector<8x384xf32> -> vector<8x384xf32>
    %207 = vector.extract_strided_slice %141 {offsets = [16, 0], sizes = [8, 384], strides = [1, 1]} : vector<32x384xf32> to vector<8x384xf32>
    %208 = vector.extract_strided_slice %207 {offsets = [0, 0], sizes = [8, 128], strides = [1, 1]} : vector<8x384xf32> to vector<8x128xf32>
    %209 = vector.extract_strided_slice %206 {offsets = [0, 0], sizes = [8, 128], strides = [1, 1]} : vector<8x384xf32> to vector<8x128xf32>
    %210 = arith.addf %208, %209 : vector<8x128xf32>
    %211 = arith.negf %210 : vector<8x128xf32>
    %212 = math.exp %211 : vector<8x128xf32>
    %cst_52 = arith.constant 1.000000e+00 : f32
    %213 = vector.broadcast %cst_52 : f32 to vector<8x128xf32>
    %214 = arith.addf %213, %212 : vector<8x128xf32>
    %215 = arith.divf %213, %214 : vector<8x128xf32>
    %216 = vector.extract_strided_slice %207 {offsets = [0, 128], sizes = [8, 128], strides = [1, 1]} : vector<8x384xf32> to vector<8x128xf32>
    %217 = vector.extract_strided_slice %206 {offsets = [0, 128], sizes = [8, 128], strides = [1, 1]} : vector<8x384xf32> to vector<8x128xf32>
    %218 = arith.addf %216, %217 : vector<8x128xf32>
    %219 = arith.negf %218 : vector<8x128xf32>
    %220 = math.exp %219 : vector<8x128xf32>
    %cst_53 = arith.constant 1.000000e+00 : f32
    %221 = vector.broadcast %cst_53 : f32 to vector<8x128xf32>
    %222 = arith.addf %221, %220 : vector<8x128xf32>
    %223 = arith.divf %221, %222 : vector<8x128xf32>
    %224 = vector.extract_strided_slice %207 {offsets = [0, 256], sizes = [8, 128], strides = [1, 1]} : vector<8x384xf32> to vector<8x128xf32>
    %225 = vector.extract_strided_slice %206 {offsets = [0, 256], sizes = [8, 128], strides = [1, 1]} : vector<8x384xf32> to vector<8x128xf32>
    %226 = vector.broadcast %143 : vector<1x128xf32> to vector<8x128xf32>
    %227 = arith.addf %225, %226 : vector<8x128xf32>
    %228 = arith.mulf %215, %227 : vector<8x128xf32>
    %229 = arith.addf %224, %228 : vector<8x128xf32>
    %230 = math.tanh %229 : vector<8x128xf32>
    %cst_54 = arith.constant 1.000000e+00 : f32
    %231 = vector.broadcast %cst_54 : f32 to vector<8x128xf32>
    %232 = arith.subf %231, %223 : vector<8x128xf32>
    %233 = arith.mulf %232, %230 : vector<8x128xf32>
    %234 = arith.mulf %223, %205 : vector<8x128xf32>
    %235 = arith.addf %233, %234 : vector<8x128xf32>
    %cst_55 = arith.constant dense<0.000000e+00> : vector<8x384xf32>
    %236 = tpu.matmul %235, %142, %cst_55 {dimension_numbers = #tpu.dot_dimension_numbers<[1], [0], [0], [1], [0, 0, 1, 1], [], []>} : vector<8x128xf32>, vector<128x384xf32>, vector<8x384xf32> -> vector<8x384xf32>
    %237 = vector.extract_strided_slice %141 {offsets = [24, 0], sizes = [8, 384], strides = [1, 1]} : vector<32x384xf32> to vector<8x384xf32>
    %238 = vector.extract_strided_slice %237 {offsets = [0, 0], sizes = [8, 128], strides = [1, 1]} : vector<8x384xf32> to vector<8x128xf32>
    %239 = vector.extract_strided_slice %236 {offsets = [0, 0], sizes = [8, 128], strides = [1, 1]} : vector<8x384xf32> to vector<8x128xf32>
    %240 = arith.addf %238, %239 : vector<8x128xf32>
    %241 = arith.negf %240 : vector<8x128xf32>
    %242 = math.exp %241 : vector<8x128xf32>
    %cst_56 = arith.constant 1.000000e+00 : f32
    %243 = vector.broadcast %cst_56 : f32 to vector<8x128xf32>
    %244 = arith.addf %243, %242 : vector<8x128xf32>
    %245 = arith.divf %243, %244 : vector<8x128xf32>
    %246 = vector.extract_strided_slice %237 {offsets = [0, 128], sizes = [8, 128], strides = [1, 1]} : vector<8x384xf32> to vector<8x128xf32>
    %247 = vector.extract_strided_slice %236 {offsets = [0, 128], sizes = [8, 128], strides = [1, 1]} : vector<8x384xf32> to vector<8x128xf32>
    %248 = arith.addf %246, %247 : vector<8x128xf32>
    %249 = arith.negf %248 : vector<8x128xf32>
    %250 = math.exp %249 : vector<8x128xf32>
    %cst_57 = arith.constant 1.000000e+00 : f32
    %251 = vector.broadcast %cst_57 : f32 to vector<8x128xf32>
    %252 = arith.addf %251, %250 : vector<8x128xf32>
    %253 = arith.divf %251, %252 : vector<8x128xf32>
    %254 = vector.extract_strided_slice %237 {offsets = [0, 256], sizes = [8, 128], strides = [1, 1]} : vector<8x384xf32> to vector<8x128xf32>
    %255 = vector.extract_strided_slice %236 {offsets = [0, 256], sizes = [8, 128], strides = [1, 1]} : vector<8x384xf32> to vector<8x128xf32>
    %256 = vector.broadcast %143 : vector<1x128xf32> to vector<8x128xf32>
    %257 = arith.addf %255, %256 : vector<8x128xf32>
    %258 = arith.mulf %245, %257 : vector<8x128xf32>
    %259 = arith.addf %254, %258 : vector<8x128xf32>
    %260 = math.tanh %259 : vector<8x128xf32>
    %cst_58 = arith.constant 1.000000e+00 : f32
    %261 = vector.broadcast %cst_58 : f32 to vector<8x128xf32>
    %262 = arith.subf %261, %253 : vector<8x128xf32>
    %263 = arith.mulf %262, %260 : vector<8x128xf32>
    %264 = arith.mulf %253, %235 : vector<8x128xf32>
    %265 = arith.addf %263, %264 : vector<8x128xf32>
    %c1_59 = arith.constant 1 : index
    %c0_60 = arith.constant 0 : index
    %c0_61 = arith.constant 0 : index
    %266 = vector.load %arg13[%c1_59, %c0_60, %c0_61] : memref<2x8x128xf32, #tpu.memory_space<vmem>>, vector<1x8x128xf32>
    %267 = vector.shape_cast %266 : vector<1x8x128xf32> to vector<8x128xf32>
    %268 = vector.shape_cast %265 : vector<8x128xf32> to vector<1x8x128xf32>
    tpu.vector_store %arg13[%c1_59, %c0_60, %c0_61], %268 {strides = array<i32>} : memref<2x8x128xf32, #tpu.memory_space<vmem>>, vector<1x8x128xf32>,
    %269 = tpu.concatenate %175, %205, %235, %265 in 0 : vector<8x128xf32>, vector<8x128xf32>, vector<8x128xf32>, vector<8x128xf32> -> vector<32x128xf32>
    %c0_62 = arith.constant 0 : index
    %c0_63 = arith.constant 0 : index
    %270 = vector.load %arg10[%c0_62, %c0_63] : memref<128x128xf32, #tpu.memory_space<vmem>>, vector<128x128xf32>
    %cst_64 = arith.constant dense<0.000000e+00> : vector<32x128xf32>
    %271 = tpu.matmul %269, %270, %cst_64 {dimension_numbers = #tpu.dot_dimension_numbers<[1], [0], [0], [1], [0, 0, 1, 1], [], []>} : vector<32x128xf32>, vector<128x128xf32>, vector<32x128xf32> -> vector<32x128xf32>
    %c0_65 = arith.constant 0 : index
    %c0_66 = arith.constant 0 : index
    %272 = vector.load %arg11[%c0_65, %c0_66] : memref<1x128xf32, #tpu.memory_space<vmem>>, vector<1x128xf32>
    %273 = vector.broadcast %272 : vector<1x128xf32> to vector<32x128xf32>
    %274 = arith.addf %271, %273 : vector<32x128xf32>
    %275 = arith.negf %274 : vector<32x128xf32>
    %276 = math.exp %275 : vector<32x128xf32>
    %cst_67 = arith.constant 1.000000e+00 : f32
    %277 = vector.broadcast %cst_67 : f32 to vector<32x128xf32>
    %278 = arith.addf %277, %276 : vector<32x128xf32>
    %279 = arith.divf %277, %278 : vector<32x128xf32>
    %c0_68 = arith.constant 0 : index
    %c0_69 = arith.constant 0 : index
    %280 = vector.load %arg12[%c0_68, %c0_69] : memref<32x128xf32, #tpu.memory_space<vmem>>, vector<32x128xf32>
    tpu.vector_store %arg12[%c0_68, %c0_69], %279 {strides = array<i32>} : memref<32x128xf32, #tpu.memory_space<vmem>>, vector<32x128xf32>,
    return
  }
  func.func @transform_0(%arg0: i32) -> (i32, i32) {
    %c0_i32 = arith.constant 0 : i32
    %c0_i32_0 = arith.constant 0 : i32
    return %arg0, %c0_i32 : i32, i32
  }
  func.func @transform_1(%arg0: i32) -> (i32, i32) {
    %c0_i32 = arith.constant 0 : i32
    %c0_i32_0 = arith.constant 0 : i32
    %c0_i32_1 = arith.constant 0 : i32
    return %c0_i32, %c0_i32_0 : i32, i32
  }
  func.func @transform_2(%arg0: i32) -> (i32, i32) {
    %c0_i32 = arith.constant 0 : i32
    %c0_i32_0 = arith.constant 0 : i32
    %c0_i32_1 = arith.constant 0 : i32
    return %c0_i32, %c0_i32_0 : i32, i32
  }
  func.func @transform_3(%arg0: i32) -> (i32, i32) {
    %c0_i32 = arith.constant 0 : i32
    %c0_i32_0 = arith.constant 0 : i32
    %c0_i32_1 = arith.constant 0 : i32
    return %c0_i32, %c0_i32_0 : i32, i32
  }
  func.func @transform_4(%arg0: i32) -> (i32, i32) {
    %c0_i32 = arith.constant 0 : i32
    %c0_i32_0 = arith.constant 0 : i32
    %c0_i32_1 = arith.constant 0 : i32
    return %c0_i32, %c0_i32_0 : i32, i32
  }
  func.func @transform_5(%arg0: i32) -> (i32, i32) {
    %c0_i32 = arith.constant 0 : i32
    %c0_i32_0 = arith.constant 0 : i32
    %c0_i32_1 = arith.constant 0 : i32
    return %c0_i32, %c0_i32_0 : i32, i32
  }
  func.func @transform_6(%arg0: i32) -> (i32, i32) {
    %c0_i32 = arith.constant 0 : i32
    %c0_i32_0 = arith.constant 0 : i32
    %c0_i32_1 = arith.constant 0 : i32
    return %c0_i32, %c0_i32_0 : i32, i32
  }
  func.func @transform_7(%arg0: i32) -> (i32, i32) {
    %c0_i32 = arith.constant 0 : i32
    %c0_i32_0 = arith.constant 0 : i32
    %c0_i32_1 = arith.constant 0 : i32
    return %c0_i32, %c0_i32_0 : i32, i32
  }
  func.func @transform_8(%arg0: i32) -> (i32, i32) {
    %c0_i32 = arith.constant 0 : i32
    %c0_i32_0 = arith.constant 0 : i32
    %c0_i32_1 = arith.constant 0 : i32
    return %c0_i32, %c0_i32_0 : i32, i32
  }
  func.func @transform_9(%arg0: i32) -> (i32, i32) {
    %c0_i32 = arith.constant 0 : i32
    %c0_i32_0 = arith.constant 0 : i32
    %c0_i32_1 = arith.constant 0 : i32
    return %c0_i32, %c0_i32_0 : i32, i32
  }
  func.func @transform_10(%arg0: i32) -> (i32, i32) {
    %c0_i32 = arith.constant 0 : i32
    %c0_i32_0 = arith.constant 0 : i32
    %c0_i32_1 = arith.constant 0 : i32
    return %c0_i32, %c0_i32_0 : i32, i32
  }
  func.func @transform_11(%arg0: i32) -> (i32, i32) {
    %c0_i32 = arith.constant 0 : i32
    %c0_i32_0 = arith.constant 0 : i32
    return %arg0, %c0_i32 : i32, i32
  }
}

</mosaic_0001>

<llo_original>
// kernel: gru_model_forward.1
$region0: #{gru_model_forward.1}
  #allocation0 [shape = 'u32[]', space=smem, size = 0x4, offset = 0x4, fixed_abs, tag = 'smem constant byte address 0x4 - core index']
  #allocation1 [shape = 'u32[144,128]{1,0:T(1,128)}', space=vmem, size = 0x12000, scoped, tag = 'internal scratch']
  #allocation2 [shape = 'f32[2,8,128]{2,1,0:T(8,128)}', space=vmem, size = 0x2000, scoped, tag = 'scratch operand']
  %s0 = inlined_call_operand.vmem [shape: f32[64,16], index: 0, kind: input, shape index: {}]
  %s1 = inlined_call_operand.vmem [shape: f32[16,384], index: 1, kind: input, shape index: {}]
  %s2 = inlined_call_operand.hbm [shape: f32[128,384], index: 2, kind: input, shape index: {}]
  %s3 = inlined_call_operand.vmem [shape: f32[1,384], index: 3, kind: input, shape index: {}]
  %s4 = inlined_call_operand.vmem [shape: f32[1,128], index: 4, kind: input, shape index: {}]
  %s5 = inlined_call_operand.hbm [shape: f32[128,384], index: 5, kind: input, shape index: {}]
  %s6 = inlined_call_operand.hbm [shape: f32[128,384], index: 6, kind: input, shape index: {}]
  %s7 = inlined_call_operand.vmem [shape: f32[1,384], index: 7, kind: input, shape index: {}]
  %s8 = inlined_call_operand.vmem [shape: f32[1,128], index: 8, kind: input, shape index: {}]
  %s9 = inlined_call_operand.vmem [shape: f32[128,128], index: 9, kind: input, shape index: {}]
  %s10 = inlined_call_operand.vmem [shape: f32[1,128], index: 10, kind: input, shape index: {}]
  %s11 = inlined_call_operand.vmem [shape: f32[64,128], index: 11, kind: output, shape index: {}]
  %s12 = sld [smem:[#allocation0]]
  $region93: #{gru_model_forward.1} parent=0
    _
  %s14 = ssub.s32 1, %s12
  %s15 = scalar_select 0, %s14, %s12
  $region1: #{gru_model_forward.1} parent=0
    #allocation3 [shape = 'u8[196608]{0}', space=vmem, size = 0x30000, scoped, tag = 'input window, operand 2, single buffered']
    #allocation4 [shape = 's32[2]{0}', space=sflag, size = 0x8, scoped, tag = 'scoped memory for gru_model_forward.1']
    #allocation5 [shape = 'u8[196608]{0}', space=vmem, size = 0x30000, scoped, tag = 'input window, operand 5, single buffered']
    #allocation6 [shape = 's32[1]{0}', space=sflag, size = 0x4, scoped, tag = 'scoped memory for gru_model_forward.1']
    #allocation7 [shape = 'u8[196608]{0}', space=vmem, size = 0x30000, scoped, tag = 'input window, operand 6, single buffered']
    %16 = vsyncpa [#allocation4], 0
    %17 = vsyncpa [#allocation6], 0
    loop: start=0, step=1, limit=4
    $region2: #{gru_model_forward.1} parent=1 // loop_pre_header
      _
    $region3: #{gru_model_forward.1} parent=1 // loop_header
      %s19 = sphi 0, %s23
      %p20 = scmp.ge.s32.totalorder %s19, 4
      %s29 = sphi 0, %s31
      %s32 = sphi 0, %s29
      %s33 = sphi 0, %s32
      %s49 = sphi 0, %s33
      %s53 = sphi 0, %s53
      %s55 = sphi 0, %s53
      %s56 = sphi 0, %s55
      %s70 = sphi 0, %s56
      %s74 = sphi 0, %s74
      %s76 = sphi 0, %s74
      %s77 = sphi 0, %s76
      %s91 = sphi 0, %s77
      %s95 = sphi 0, %s95
      %s97 = sphi 0, %s95
      %s98 = sphi 0, %s97
      %s112 = sphi 0, %s98
      %s116 = sphi 0, %s116
      %s118 = sphi 0, %s116
      %s119 = sphi 0, %s118
      %s133 = sphi 0, %s119
      %s137 = sphi 0, %s137
      %s139 = sphi 0, %s137
      %s140 = sphi 0, %s139
      %s154 = sphi 0, %s140
      %s158 = sphi 0, %s158
      %s160 = sphi 0, %s158
      %s161 = sphi 0, %s160
      %s175 = sphi 0, %s161
      %s179 = sphi 0, %s179
      %s181 = sphi 0, %s179
      %s182 = sphi 0, %s181
      %s196 = sphi 0, %s182
      %s200 = sphi 0, %s200
      %s202 = sphi 0, %s200
      %s203 = sphi 0, %s202
      %s217 = sphi 0, %s203
      %s221 = sphi 0, %s221
      %s223 = sphi 0, %s221
      %s224 = sphi 0, %s223
      %s238 = sphi 0, %s224
      %s242 = sphi 0, %s242
      %s244 = sphi 0, %s242
      %s245 = sphi 0, %s244
      %s259 = sphi 0, %s245
      %s265 = sphi 0, %s267
      %s268 = sphi 0, %s265
      %s269 = sphi 0, %s268
      %s285 = sphi 0, %s269
    $region4: #{gru_model_forward.1} parent=1 // loop_header_branch
      %22 = sbr.rel (%p20) target = $region8
    $region5: #{gru_model_forward.1} parent=1 // loop_body
      %s24 = ssub.s32 %s19, 1
      %s25 = ssub.s32 %s19, 2
      %s26 = sadd.s32 %s19, 1
      %s27 = ssub.s32 %s19, %s26
      %p28 = scmp.eq.s32.totalorder %s27, 0
      %s30 = sadd.s32 %s29, 1
      %s31 = scalar_select %p28, %s29, %s30
      %p34 = pneg %p28
      %p35 = scmp.eq.s32.totalorder %s19, 1
      %p36 = por %p34, %p35
      %p37 = scmp.ne.s32.totalorder %s29, %s32
      %p38 = scmp.eq.s32.totalorder %s19, 0
      %p39 = por %p37, %p38
      %p40 = scmp.ne.s32.totalorder %s29, %s32
      %p41 = scmp.eq.s32.totalorder %s24, 1
      %p42 = por %p40, %p41
      %p43 = scmp.ne.s32.totalorder %s32, %s33
      %p44 = scmp.eq.s32.totalorder %s24, 0
      %p45 = por %p43, %p44
      %p46 = scmp.ne.s32.totalorder %s32, %s33
      %p47 = scmp.eq.s32.totalorder %s25, 1
      %p48 = por %p46, %p47
      %p50 = scmp.ne.s32.totalorder %s33, %s49
      %p51 = scmp.eq.s32.totalorder %s25, 0
      %p52 = por %p50, %p51
      %s54 = sadd.s32 %s53, 1
      %p57 = scmp.eq.s32.totalorder %s19, 1
      %p58 = scmp.ne.s32.totalorder %s53, %s55
      %p59 = scmp.eq.s32.totalorder %s19, 0
      %p60 = por %p58, %p59
      %p61 = scmp.ne.s32.totalorder %s53, %s55
      %p62 = scmp.eq.s32.totalorder %s24, 1
      %p63 = por %p61, %p62
      %p64 = scmp.ne.s32.totalorder %s55, %s56
      %p65 = scmp.eq.s32.totalorder %s24, 0
      %p66 = por %p64, %p65
      %p67 = scmp.ne.s32.totalorder %s55, %s56
      %p68 = scmp.eq.s32.totalorder %s25, 1
      %p69 = por %p67, %p68
      %p71 = scmp.ne.s32.totalorder %s56, %s70
      %p72 = scmp.eq.s32.totalorder %s25, 0
      %p73 = por %p71, %p72
      %s75 = sadd.s32 %s74, 1
      %p78 = scmp.eq.s32.totalorder %s19, 1
      %p79 = scmp.ne.s32.totalorder %s74, %s76
      %p80 = scmp.eq.s32.totalorder %s19, 0
      %p81 = por %p79, %p80
      %p82 = scmp.ne.s32.totalorder %s74, %s76
      %p83 = scmp.eq.s32.totalorder %s24, 1
      %p84 = por %p82, %p83
      %p85 = scmp.ne.s32.totalorder %s76, %s77
      %p86 = scmp.eq.s32.totalorder %s24, 0
      %p87 = por %p85, %p86
      %p88 = scmp.ne.s32.totalorder %s76, %s77
      %p89 = scmp.eq.s32.totalorder %s25, 1
      %p90 = por %p88, %p89
      %p92 = scmp.ne.s32.totalorder %s77, %s91
      %p93 = scmp.eq.s32.totalorder %s25, 0
      %p94 = por %p92, %p93
      %s96 = sadd.s32 %s95, 1
      %p99 = scmp.eq.s32.totalorder %s19, 1
      %p100 = scmp.ne.s32.totalorder %s95, %s97
      %p101 = scmp.eq.s32.totalorder %s19, 0
      %p102 = por %p100, %p101
      %p103 = scmp.ne.s32.totalorder %s95, %s97
      %p104 = scmp.eq.s32.totalorder %s24, 1
      %p105 = por %p103, %p104
      %p106 = scmp.ne.s32.totalorder %s97, %s98
      %p107 = scmp.eq.s32.totalorder %s24, 0
      %p108 = por %p106, %p107
      %p109 = scmp.ne.s32.totalorder %s97, %s98
      %p110 = scmp.eq.s32.totalorder %s25, 1
      %p111 = por %p109, %p110
      %p113 = scmp.ne.s32.totalorder %s98, %s112
      %p114 = scmp.eq.s32.totalorder %s25, 0
      %p115 = por %p113, %p114
      %s117 = sadd.s32 %s116, 1
      %p120 = scmp.eq.s32.totalorder %s19, 1
      %p121 = scmp.ne.s32.totalorder %s116, %s118
      %p122 = scmp.eq.s32.totalorder %s19, 0
      %p123 = por %p121, %p122
      %p124 = scmp.ne.s32.totalorder %s116, %s118
      %p125 = scmp.eq.s32.totalorder %s24, 1
      %p126 = por %p124, %p125
      %p127 = scmp.ne.s32.totalorder %s118, %s119
      %p128 = scmp.eq.s32.totalorder %s24, 0
      %p129 = por %p127, %p128
      %p130 = scmp.ne.s32.totalorder %s118, %s119
      %p131 = scmp.eq.s32.totalorder %s25, 1
      %p132 = por %p130, %p131
      %p134 = scmp.ne.s32.totalorder %s119, %s133
      %p135 = scmp.eq.s32.totalorder %s25, 0
      %p136 = por %p134, %p135
      %s138 = sadd.s32 %s137, 1
      %p141 = scmp.eq.s32.totalorder %s19, 1
      %p142 = scmp.ne.s32.totalorder %s137, %s139
      %p143 = scmp.eq.s32.totalorder %s19, 0
      %p144 = por %p142, %p143
      %p145 = scmp.ne.s32.totalorder %s137, %s139
      %p146 = scmp.eq.s32.totalorder %s24, 1
      %p147 = por %p145, %p146
      %p148 = scmp.ne.s32.totalorder %s139, %s140
      %p149 = scmp.eq.s32.totalorder %s24, 0
      %p150 = por %p148, %p149
      %p151 = scmp.ne.s32.totalorder %s139, %s140
      %p152 = scmp.eq.s32.totalorder %s25, 1
      %p153 = por %p151, %p152
      %p155 = scmp.ne.s32.totalorder %s140, %s154
      %p156 = scmp.eq.s32.totalorder %s25, 0
      %p157 = por %p155, %p156
      %s159 = sadd.s32 %s158, 1
      %p162 = scmp.eq.s32.totalorder %s19, 1
      %p163 = scmp.ne.s32.totalorder %s158, %s160
      %p164 = scmp.eq.s32.totalorder %s19, 0
      %p165 = por %p163, %p164
      %p166 = scmp.ne.s32.totalorder %s158, %s160
      %p167 = scmp.eq.s32.totalorder %s24, 1
      %p168 = por %p166, %p167
      %p169 = scmp.ne.s32.totalorder %s160, %s161
      %p170 = scmp.eq.s32.totalorder %s24, 0
      %p171 = por %p169, %p170
      %p172 = scmp.ne.s32.totalorder %s160, %s161
      %p173 = scmp.eq.s32.totalorder %s25, 1
      %p174 = por %p172, %p173
      %p176 = scmp.ne.s32.totalorder %s161, %s175
      %p177 = scmp.eq.s32.totalorder %s25, 0
      %p178 = por %p176, %p177
      %s180 = sadd.s32 %s179, 1
      %p183 = scmp.eq.s32.totalorder %s19, 1
      %p184 = scmp.ne.s32.totalorder %s179, %s181
      %p185 = scmp.eq.s32.totalorder %s19, 0
      %p186 = por %p184, %p185
      %p187 = scmp.ne.s32.totalorder %s179, %s181
      %p188 = scmp.eq.s32.totalorder %s24, 1
      %p189 = por %p187, %p188
      %p190 = scmp.ne.s32.totalorder %s181, %s182
      %p191 = scmp.eq.s32.totalorder %s24, 0
      %p192 = por %p190, %p191
      %p193 = scmp.ne.s32.totalorder %s181, %s182
      %p194 = scmp.eq.s32.totalorder %s25, 1
      %p195 = por %p193, %p194
      %p197 = scmp.ne.s32.totalorder %s182, %s196
      %p198 = scmp.eq.s32.totalorder %s25, 0
      %p199 = por %p197, %p198
      %s201 = sadd.s32 %s200, 1
      %p204 = scmp.eq.s32.totalorder %s19, 1
      %p205 = scmp.ne.s32.totalorder %s200, %s202
      %p206 = scmp.eq.s32.totalorder %s19, 0
      %p207 = por %p205, %p206
      %p208 = scmp.ne.s32.totalorder %s200, %s202
      %p209 = scmp.eq.s32.totalorder %s24, 1
      %p210 = por %p208, %p209
      %p211 = scmp.ne.s32.totalorder %s202, %s203
      %p212 = scmp.eq.s32.totalorder %s24, 0
      %p213 = por %p211, %p212
      %p214 = scmp.ne.s32.totalorder %s202, %s203
      %p215 = scmp.eq.s32.totalorder %s25, 1
      %p216 = por %p214, %p215
      %p218 = scmp.ne.s32.totalorder %s203, %s217
      %p219 = scmp.eq.s32.totalorder %s25, 0
      %p220 = por %p218, %p219
      %s222 = sadd.s32 %s221, 1
      %p225 = scmp.eq.s32.totalorder %s19, 1
      %p226 = scmp.ne.s32.totalorder %s221, %s223
      %p227 = scmp.eq.s32.totalorder %s19, 0
      %p228 = por %p226, %p227
      %p229 = scmp.ne.s32.totalorder %s221, %s223
      %p230 = scmp.eq.s32.totalorder %s24, 1
      %p231 = por %p229, %p230
      %p232 = scmp.ne.s32.totalorder %s223, %s224
      %p233 = scmp.eq.s32.totalorder %s24, 0
      %p234 = por %p232, %p233
      %p235 = scmp.ne.s32.totalorder %s223, %s224
      %p236 = scmp.eq.s32.totalorder %s25, 1
      %p237 = por %p235, %p236
      %p239 = scmp.ne.s32.totalorder %s224, %s238
      %p240 = scmp.eq.s32.totalorder %s25, 0
      %p241 = por %p239, %p240
      %s243 = sadd.s32 %s242, 1
      %p246 = scmp.eq.s32.totalorder %s19, 1
      %p247 = scmp.ne.s32.totalorder %s242, %s244
      %p248 = scmp.eq.s32.totalorder %s19, 0
      %p249 = por %p247, %p248
      %p250 = scmp.ne.s32.totalorder %s242, %s244
      %p251 = scmp.eq.s32.totalorder %s24, 1
      %p252 = por %p250, %p251
      %p253 = scmp.ne.s32.totalorder %s244, %s245
      %p254 = scmp.eq.s32.totalorder %s24, 0
      %p255 = por %p253, %p254
      %p256 = scmp.ne.s32.totalorder %s244, %s245
      %p257 = scmp.eq.s32.totalorder %s25, 1
      %p258 = por %p256, %p257
      %p260 = scmp.ne.s32.totalorder %s245, %s259
      %p261 = scmp.eq.s32.totalorder %s25, 0
      %p262 = por %p260, %p261
      %s263 = ssub.s32 %s19, %s26
      %p264 = scmp.eq.s32.totalorder %s263, 0
      %s266 = sadd.s32 %s265, 1
      %s267 = scalar_select %p264, %s265, %s266
      %p270 = pneg %p264
      %p271 = scmp.eq.s32.totalorder %s19, 1
      %p272 = por %p270, %p271
      %p273 = scmp.ne.s32.totalorder %s265, %s268
      %p274 = scmp.eq.s32.totalorder %s19, 0
      %p275 = por %p273, %p274
      %p276 = scmp.ne.s32.totalorder %s265, %s268
      %p277 = scmp.eq.s32.totalorder %s24, 1
      %p278 = por %p276, %p277
      %p279 = scmp.ne.s32.totalorder %s268, %s269
      %p280 = scmp.eq.s32.totalorder %s24, 0
      %p281 = por %p279, %p280
      %p282 = scmp.ne.s32.totalorder %s268, %s269
      %p283 = scmp.eq.s32.totalorder %s25, 1
      %p284 = por %p282, %p283
      %p286 = scmp.ne.s32.totalorder %s269, %s285
      %p287 = scmp.eq.s32.totalorder %s25, 0
      %p288 = por %p286, %p287
      %p289 = scmp.le.s32.totalorder 1, %s19
      %p290 = scmp.lt.s32.totalorder %s19, 3
      %p291 = pnand %p289, %p290
      %p292 = pneg %p291
      // Predicated region
      $region9: #{gru_model_forward.1} parent=5 // pred_check
        _
      $region10: #{gru_model_forward.1} parent=5 // pred_check_branch
        %294 = sbr.rel (%p291) target = $region12
      $region11: #{gru_model_forward.1} parent=5 // pred_region
        %s295 = ssub.s32 %s19, 1
        // Predicated region
        $region13: #{gru_model_forward.1} parent=11 // pred_check
          %p296 = pneg %p66
        $region14: #{gru_model_forward.1} parent=11 // pred_check_branch
          %298 = sbr.rel (%p296) target = $region16
        $region15: #{gru_model_forward.1} parent=11 // pred_region
          _
        $region16: #{gru_model_forward.1} parent=11 // pred_fallthru
          _
        // Predicated region
        $region17: #{gru_model_forward.1} parent=11 // pred_check
          %p299 = pneg %p87
        $region18: #{gru_model_forward.1} parent=11 // pred_check_branch
          %301 = sbr.rel (%p299) target = $region20
        $region19: #{gru_model_forward.1} parent=11 // pred_region
          %s303 = ssub.s32 6144, 6144
          %304 = vsyncadd [#allocation4], %s303
          %s305 = sshll.u32 [#allocation3], 4
          %s306 = int_to_ptr.vmem [resolvable:$true] %s305
          %311 = dma.hbm_to_vmem [thread:$0]  %s2, 6144, %s306, [#allocation4], 384, 384, 24
        $region20: #{gru_model_forward.1} parent=11 // pred_fallthru
          _
        // Predicated region
        $region21: #{gru_model_forward.1} parent=11 // pred_check
          %p312 = pneg %p108
        $region22: #{gru_model_forward.1} parent=11 // pred_check_branch
          %314 = sbr.rel (%p312) target = $region24
        $region23: #{gru_model_forward.1} parent=11 // pred_region
          _
        $region24: #{gru_model_forward.1} parent=11 // pred_fallthru
          _
        // Predicated region
        $region25: #{gru_model_forward.1} parent=11 // pred_check
          %p315 = pneg %p129
        $region26: #{gru_model_forward.1} parent=11 // pred_check_branch
          %317 = sbr.rel (%p315) target = $region28
        $region27: #{gru_model_forward.1} parent=11 // pred_region
          _
        $region28: #{gru_model_forward.1} parent=11 // pred_fallthru
          _
        // Predicated region
        $region29: #{gru_model_forward.1} parent=11 // pred_check
          %p318 = pneg %p150
        $region30: #{gru_model_forward.1} parent=11 // pred_check_branch
          %320 = sbr.rel (%p318) target = $region32
        $region31: #{gru_model_forward.1} parent=11 // pred_region
          %s322 = ssub.s32 6144, 6144
          %323 = vsyncadd [#allocation6], %s322
          %s324 = sshll.u32 [#allocation5], 4
          %s325 = int_to_ptr.vmem [resolvable:$true] %s324
          %330 = dma.hbm_to_vmem [thread:$0]  %s5, 6144, %s325, [#allocation6], 384, 384, 24
        $region32: #{gru_model_forward.1} parent=11 // pred_fallthru
          _
        // Predicated region
        $region33: #{gru_model_forward.1} parent=11 // pred_check
          %p331 = pneg %p171
        $region34: #{gru_model_forward.1} parent=11 // pred_check_branch
          %333 = sbr.rel (%p331) target = $region36
        $region35: #{gru_model_forward.1} parent=11 // pred_region
          %s335 = ssub.s32 6144, 6144
          %336 = vsyncadd [#allocation6], %s335
          %s337 = sshll.u32 [#allocation7], 4
          %s338 = int_to_ptr.vmem [resolvable:$true] %s337
          %343 = dma.hbm_to_vmem [thread:$0]  %s6, 6144, %s338, [#allocation6], 384, 384, 24
        $region36: #{gru_model_forward.1} parent=11 // pred_fallthru
          _
        // Predicated region
        $region37: #{gru_model_forward.1} parent=11 // pred_check
          %p344 = pneg %p192
        $region38: #{gru_model_forward.1} parent=11 // pred_check_branch
          %346 = sbr.rel (%p344) target = $region40
        $region39: #{gru_model_forward.1} parent=11 // pred_region
          _
        $region40: #{gru_model_forward.1} parent=11 // pred_fallthru
          _
        // Predicated region
        $region41: #{gru_model_forward.1} parent=11 // pred_check
          %p347 = pneg %p213
        $region42: #{gru_model_forward.1} parent=11 // pred_check_branch
          %349 = sbr.rel (%p347) target = $region44
        $region43: #{gru_model_forward.1} parent=11 // pred_region
          _
        $region44: #{gru_model_forward.1} parent=11 // pred_fallthru
          _
        // Predicated region
        $region45: #{gru_model_forward.1} parent=11 // pred_check
          %p350 = pneg %p234
        $region46: #{gru_model_forward.1} parent=11 // pred_check_branch
          %352 = sbr.rel (%p350) target = $region48
        $region47: #{gru_model_forward.1} parent=11 // pred_region
          _
        $region48: #{gru_model_forward.1} parent=11 // pred_fallthru
          _
        // Predicated region
        $region49: #{gru_model_forward.1} parent=11 // pred_check
          %p353 = pneg %p255
        $region50: #{gru_model_forward.1} parent=11 // pred_check_branch
          %355 = sbr.rel (%p353) target = $region52
        $region51: #{gru_model_forward.1} parent=11 // pred_region
          _
        $region52: #{gru_model_forward.1} parent=11 // pred_fallthru
          _
      $region12: #{gru_model_forward.1} parent=5 // pred_fallthru
        _
      %p356 = scmp.lt.s32.totalorder %s19, 2
      // Predicated region
      $region53: #{gru_model_forward.1} parent=5 // pred_check
        %p357 = pneg %p356
      $region54: #{gru_model_forward.1} parent=5 // pred_check_branch
        %359 = sbr.rel (%p357) target = $region56
      $region55: #{gru_model_forward.1} parent=5 // pred_region
        // Predicated region
        $region57: #{gru_model_forward.1} parent=55 // pred_check
          %p360 = pneg %p39
        $region58: #{gru_model_forward.1} parent=55 // pred_check_branch
          %362 = sbr.rel (%p360) target = $region60
        $region59: #{gru_model_forward.1} parent=55 // pred_region
          %s363 = smul.u32 4, %s19
          %p364 = scmp.lt.s32.totalorder %s363, 7
          %s365 = scalar_select %p364, %s363, 7
          %s366 = smul.addr %s365, 8
          %s367 = scalar_lea.vmem %s0, %s366
          %s368 = smul.u32 4, %s19
        $region60: #{gru_model_forward.1} parent=55 // pred_fallthru
          _
      $region56: #{gru_model_forward.1} parent=5 // pred_fallthru
        _
      %p369 = scmp.le.s32.totalorder 1, %s19
      %p370 = scmp.lt.s32.totalorder %s19, 3
      %p371 = pnand %p369, %p370
      %p372 = pneg %p371
      // Predicated region
      $region61: #{gru_model_forward.1} parent=5 // pred_check
        _
      $region62: #{gru_model_forward.1} parent=5 // pred_check_branch
        %374 = sbr.rel (%p371) target = $region64
      $region63: #{gru_model_forward.1} parent=5 // pred_region
        %s375 = ssub.s32 %s19, 1
        // Predicated region
        $region65: #{gru_model_forward.1} parent=63 // pred_check
          %p376 = pneg %p87
        $region66: #{gru_model_forward.1} parent=63 // pred_check_branch
          %378 = sbr.rel (%p376) target = $region68
        $region67: #{gru_model_forward.1} parent=63 // pred_region
          %379 = dma.done [#allocation4], 6144
        $region68: #{gru_model_forward.1} parent=63 // pred_fallthru
          _
        // Predicated region
        $region69: #{gru_model_forward.1} parent=63 // pred_check
          %p380 = pneg %p150
        $region70: #{gru_model_forward.1} parent=63 // pred_check_branch
          %382 = sbr.rel (%p380) target = $region72
        $region71: #{gru_model_forward.1} parent=63 // pred_region
          %383 = dma.done [#allocation6], 6144
        $region72: #{gru_model_forward.1} parent=63 // pred_fallthru
          _
        // Predicated region
        $region73: #{gru_model_forward.1} parent=63 // pred_check
          %p384 = pneg %p171
        $region74: #{gru_model_forward.1} parent=63 // pred_check_branch
          %386 = sbr.rel (%p384) target = $region76
        $region75: #{gru_model_forward.1} parent=63 // pred_region
          %387 = dma.done [#allocation6], 6144
        $region76: #{gru_model_forward.1} parent=63 // pred_fallthru
          _
        %s388 = smul.u32 4, %s24
        %p389 = scmp.lt.s32.totalorder %s388, 7
        %s390 = scalar_select %p389, %s388, 7
        %s391 = smul.addr %s390, 8
        %s392 = scalar_lea.vmem %s0, %s391
        %p393 = pneg %p45
        %p394 = pneg %p42
        %p395 = pneg %p66
        %p396 = pneg %p63
        %p397 = pneg %p87
        %p398 = pneg %p84
        %p399 = pneg %p108
        %p400 = pneg %p105
        %p401 = pneg %p129
        %p402 = pneg %p126
        %p403 = pneg %p150
        %p404 = pneg %p147
        %p405 = pneg %p171
        %p406 = pneg %p168
        %p407 = pneg %p192
        %p408 = pneg %p189
        %p409 = pneg %p213
        %p410 = pneg %p210
        %p411 = pneg %p234
        %p412 = pneg %p231
        %p413 = pneg %p255
        %p414 = pneg %p252
        %p415 = pneg %p281
        %p416 = pneg %p278
        %s417 = smul.u32 4, %s24
        %p418 = scmp.lt.s32.totalorder %s417, 7
        %s419 = scalar_select %p418, %s417, 7
        %s420 = smul.addr %s419, 8
        %s421 = scalar_lea.vmem %s11, %s420
        %s422 = smul.u32 4, %s24
        %p423 = scmp.lt.s32.totalorder %s422, 7
        %s424 = scalar_select %p423, %s422, 7
        %s425 = smul.addr %s424, 8
        %s426 = scalar_lea.vmem %s0, %s425
        %s427 = smul.u32 4, %s24
        %s428 = smul.u32 4, %s24
        %p429 = scmp.lt.s32.totalorder %s428, 7
        %s430 = scalar_select %p429, %s428, 7
        %s431 = smul.addr %s430, 8
        %s432 = scalar_lea.vmem %s11, %s431
        %s433 = smul.u32 4, %s24
        %p434 = scmp.eq.s32.totalorder %s24, 0
        // Predicated region
        $region77: #{gru_model_forward.1} parent=63 // pred_check
          %p435 = pneg %p434
        $region78: #{gru_model_forward.1} parent=63 // pred_check_branch
          %437 = sbr.rel (%p435) target = $region80
        $region79: #{gru_model_forward.1} parent=63 // pred_region
          %438 = vst [vmem:[#allocation2] sm:$0xff] 0.0
          %439 = vst [vmem:[#allocation2 + $0x8] sm:$0xff] 0.0
        $region80: #{gru_model_forward.1} parent=63 // pred_fallthru
          _
        %v440 = vld [vmem:[%s426] sm:$0xff]
        %v441 = vld [vmem:[%s426 + $0x8] sm:$0xff]
        %v442 = vld [vmem:[%s426 + $0x10] sm:$0xff]
        %v443 = vld [vmem:[%s426 + $0x18] sm:$0xff]
        %v444 = vld [vmem:[%s1] sm:$0xff]
        %v445 = vld [vmem:[%s1 + $0x8] sm:$0xff]
        %v446 = vld [vmem:[%s1 + $0x10] sm:$0xff]
        %v447 = vld [vmem:[%s1 + $0x18] sm:$0xff]
        %v448 = vld [vmem:[%s1 + $0x20] sm:$0xff]
        %v449 = vld [vmem:[%s1 + $0x28] sm:$0xff]
        %v450 = vld [vmem:[%s3] sm:$0x7]
        %v452 = vlaneseq
        %v453 = vshrl.u32 %v452, 7
        %v454 = vsub.s32 0, %v453
        %v455 = vrot.slane %v450, %v454
        %v456 = vlaneseq
        %v457 = vshrl.u32 %v456, 7
        %v458 = vsub.s32 1, %v457
        %v459 = vrot.slane %v450, %v458
        %v460 = vlaneseq
        %v461 = vshrl.u32 %v460, 7
        %v462 = vsub.s32 2, %v461
        %v463 = vrot.slane %v450, %v462
        %vm467 = vcmask 130048
        %v469 = vsel %vm467, %v440, 0
        %v472 = vsel %vm467, %v441, 0
        %v475 = vsel %vm467, %v442, 0
        %v478 = vsel %vm467, %v443, 0
        %480 = vmatprep.subr.mxu0 0.0
        %481 = vmatpush1.msra.mxu0 0.0
        %482 = vmatprep.subr.mxu0 0.0
        %483 = vmatpush1.msra.mxu0 0.0
        %484 = vmatprep.subr.mxu0 0.0
        %485 = vmatpush1.msra.mxu0 0.0
        %486 = vmatprep.subr.mxu0 0.0
        %487 = vmatpush1.msra.mxu0 0.0
        %488 = vmatprep.subr.mxu0 0.0
        %489 = vmatpush1.msra.mxu0 0.0
        %490 = vmatprep.subr.mxu0 0.0
        %491 = vmatpush1.msra.mxu0 0.0
        %492 = vmatprep.subr.mxu0 0.0
        %493 = vmatpush1.msra.mxu0 0.0
        %494 = vmatprep.subr.mxu0 0.0
        %495 = vmatpush1.msra.mxu0 0.0
        %496 = vmatprep.subr.mxu0 0.0
        %497 = vmatpush1.msra.mxu0 0.0
        %498 = vmatprep.subr.mxu0 0.0
        %499 = vmatpush1.msra.mxu0 0.0
        %500 = vmatprep.subr.mxu0 0.0
        %501 = vmatpush1.msra.mxu0 0.0
        %502 = vmatprep.subr.mxu0 0.0
        %503 = vmatpush1.msra.mxu0 0.0
        %504 = vmatprep.subr.mxu0 0.0
        %505 = vmatpush1.msra.mxu0 0.0
        %506 = vmatprep.subr.mxu0 0.0
        %507 = vmatpush1.msra.mxu0 0.0
        %508 = vmatprep.subr.mxu0 %v448
        %509 = vmatpush1.msra.mxu0 %v447
        %510 = vmatprep.subr.mxu0 %v445
        %511 = vmatpush1.msra.mxu0 %v444
        %512 = vmatprep.subr.mxu0 0.0
        %513 = vmatpush2.msra.mxu0 0.0
        %514 = vmatprep.subr.mxu0 0.0
        %515 = vmatpush2.msra.mxu0 0.0
        %516 = vmatprep.subr.mxu0 0.0
        %517 = vmatpush2.msra.mxu0 0.0
        %518 = vmatprep.subr.mxu0 0.0
        %519 = vmatpush2.msra.mxu0 0.0
        %520 = vmatprep.subr.mxu0 0.0
        %521 = vmatpush2.msra.mxu0 0.0
        %522 = vmatprep.subr.mxu0 0.0
        %523 = vmatpush2.msra.mxu0 0.0
        %524 = vmatprep.subr.mxu0 0.0
        %525 = vmatpush2.msra.mxu0 0.0
        %526 = vmatprep.subr.mxu0 0.0
        %527 = vmatpush2.msra.mxu0 0.0
        %528 = vmatprep.subr.mxu0 0.0
        %529 = vmatpush2.msra.mxu0 0.0
        %530 = vmatprep.subr.mxu0 0.0
        %531 = vmatpush2.msra.mxu0 0.0
        %532 = vmatprep.subr.mxu0 0.0
        %533 = vmatpush2.msra.mxu0 0.0
        %534 = vmatprep.subr.mxu0 0.0
        %535 = vmatpush2.msra.mxu0 0.0
        %536 = vmatprep.subr.mxu0 0.0
        %537 = vmatpush2.msra.mxu0 0.0
        %538 = vmatprep.subr.mxu0 0.0
        %539 = vmatpush2.msra.mxu0 0.0
        %540 = vmatprep.subr.mxu0 0.0
        %541 = vmatpush2.msra.mxu0 0.0
        %542 = vmatprep.subr.mxu0 0.0
        %543 = vmatpush2.msra.mxu0 0.0
        %544 = vmatprep.mubr.f32.mxu0 0.0
        %545 = vmatmul.mubr.f32.gmra.mxu0 %v469
        %v546 = vpop.f32.mrf.mxu0
        %v547 = vadd.f32 %v455, %v546
        %v548 = vpop.f32.mrf.mxu0
        %v549 = vadd.f32 %v459, %v548
        %550 = vmatprep.mubr.f32.mxu0 0.0
        %551 = vmatmul.mubr.f32.gmra.mxu0 %v472
        %v552 = vpop.f32.mrf.mxu0
        %v553 = vadd.f32 %v455, %v552
        %v554 = vpop.f32.mrf.mxu0
        %v555 = vadd.f32 %v459, %v554
        %556 = vmatprep.mubr.f32.mxu0 0.0
        %557 = vmatmul.mubr.f32.gmra.mxu0 %v475
        %v558 = vpop.f32.mrf.mxu0
        %v559 = vadd.f32 %v455, %v558
        %v560 = vpop.f32.mrf.mxu0
        %v561 = vadd.f32 %v459, %v560
        %562 = vmatprep.mubr.f32.mxu0 0.0
        %563 = vmatmul.mubr.f32.gmra.mxu0 %v478
        %v564 = vpop.f32.mrf.mxu0
        %v565 = vadd.f32 %v455, %v564
        %v566 = vpop.f32.mrf.mxu0
        %v567 = vadd.f32 %v459, %v566
        %568 = vdwg.mxu0
        %569 = vmatprep.subr.mxu0 0.0
        %570 = vmatpush1.msra.mxu0 0.0
        %571 = vmatprep.subr.mxu0 0.0
        %572 = vmatpush1.msra.mxu0 0.0
        %573 = vmatprep.subr.mxu0 0.0
        %574 = vmatpush1.msra.mxu0 0.0
        %575 = vmatprep.subr.mxu0 0.0
        %576 = vmatpush1.msra.mxu0 0.0
        %577 = vmatprep.subr.mxu0 0.0
        %578 = vmatpush1.msra.mxu0 0.0
        %579 = vmatprep.subr.mxu0 0.0
        %580 = vmatpush1.msra.mxu0 0.0
        %581 = vmatprep.subr.mxu0 0.0
        %582 = vmatpush1.msra.mxu0 0.0
        %583 = vmatprep.subr.mxu0 0.0
        %584 = vmatpush1.msra.mxu0 0.0
        %585 = vmatprep.subr.mxu0 0.0
        %586 = vmatpush1.msra.mxu0 0.0
        %587 = vmatprep.subr.mxu0 0.0
        %588 = vmatpush1.msra.mxu0 0.0
        %589 = vmatprep.subr.mxu0 0.0
        %590 = vmatpush1.msra.mxu0 0.0
        %591 = vmatprep.subr.mxu0 0.0
        %592 = vmatpush1.msra.mxu0 0.0
        %593 = vmatprep.subr.mxu0 0.0
        %594 = vmatpush1.msra.mxu0 0.0
        %595 = vmatprep.subr.mxu0 0.0
        %596 = vmatpush1.msra.mxu0 0.0
        %597 = vmatprep.subr.mxu0 0.0
        %598 = vmatpush1.msra.mxu0 %v449
        %599 = vmatprep.subr.mxu0 0.0
        %600 = vmatpush1.msra.mxu0 %v446
        %601 = vmatprep.subr.mxu0 0.0
        %602 = vmatpush2.msra.mxu0 0.0
        %603 = vmatprep.subr.mxu0 0.0
        %604 = vmatpush2.msra.mxu0 0.0
        %605 = vmatprep.subr.mxu0 0.0
        %606 = vmatpush2.msra.mxu0 0.0
        %607 = vmatprep.subr.mxu0 0.0
        %608 = vmatpush2.msra.mxu0 0.0
        %609 = vmatprep.subr.mxu0 0.0
        %610 = vmatpush2.msra.mxu0 0.0
        %611 = vmatprep.subr.mxu0 0.0
        %612 = vmatpush2.msra.mxu0 0.0
        %613 = vmatprep.subr.mxu0 0.0
        %614 = vmatpush2.msra.mxu0 0.0
        %615 = vmatprep.subr.mxu0 0.0
        %616 = vmatpush2.msra.mxu0 0.0
        %617 = vmatprep.subr.mxu0 0.0
        %618 = vmatpush2.msra.mxu0 0.0
        %619 = vmatprep.subr.mxu0 0.0
        %620 = vmatpush2.msra.mxu0 0.0
        %621 = vmatprep.subr.mxu0 0.0
        %622 = vmatpush2.msra.mxu0 0.0
        %623 = vmatprep.subr.mxu0 0.0
        %624 = vmatpush2.msra.mxu0 0.0
        %625 = vmatprep.subr.mxu0 0.0
        %626 = vmatpush2.msra.mxu0 0.0
        %627 = vmatprep.subr.mxu0 0.0
        %628 = vmatpush2.msra.mxu0 0.0
        %629 = vmatprep.subr.mxu0 0.0
        %630 = vmatpush2.msra.mxu0 0.0
        %631 = vmatprep.subr.mxu0 0.0
        %632 = vmatpush2.msra.mxu0 0.0
        %633 = vmatprep.mubr.f32.mxu0 0.0
        %634 = vmatmul.mubr.f32.gmra.mxu0 %v469
        %v635 = vpop.f32.mrf.mxu0
        %v636 = vadd.f32 %v463, %v635
        %v637 = vpop.f32.mrf.mxu0
        %638 = vmatprep.mubr.f32.mxu0 0.0
        %639 = vmatmul.mubr.f32.gmra.mxu0 %v472
        %v640 = vpop.f32.mrf.mxu0
        %v641 = vadd.f32 %v463, %v640
        %v642 = vpop.f32.mrf.mxu0
        %643 = vmatprep.mubr.f32.mxu0 0.0
        %644 = vmatmul.mubr.f32.gmra.mxu0 %v475
        %v645 = vpop.f32.mrf.mxu0
        %v646 = vadd.f32 %v463, %v645
        %v647 = vpop.f32.mrf.mxu0
        %648 = vmatprep.mubr.f32.mxu0 0.0
        %649 = vmatmul.mubr.f32.gmra.mxu0 %v478
        %v650 = vpop.f32.mrf.mxu0
        %v651 = vadd.f32 %v463, %v650
        %v652 = vpop.f32.mrf.mxu0
        %653 = vdwg.mxu0
        %v654 = vld [vmem:[#allocation3] sm:$0xff]
        %v655 = vld [vmem:[#allocation3 + $0x8] sm:$0xff]
        %v656 = vld [vmem:[#allocation3 + $0x10] sm:$0xff]
        %v657 = vld [vmem:[#allocation3 + $0x18] sm:$0xff]
        %v658 = vld [vmem:[#allocation3 + $0x20] sm:$0xff]
        %v659 = vld [vmem:[#allocation3 + $0x28] sm:$0xff]
        %v660 = vld [vmem:[#allocation3 + $0x30] sm:$0xff]
        %v661 = vld [vmem:[#allocation3 + $0x38] sm:$0xff]
        %v662 = vld [vmem:[#allocation3 + $0x40] sm:$0xff]
        %v663 = vld [vmem:[#allocation3 + $0x48] sm:$0xff]
        %v664 = vld [vmem:[#allocation3 + $0x50] sm:$0xff]
        %v665 = vld [vmem:[#allocation3 + $0x58] sm:$0xff]
        %v666 = vld [vmem:[#allocation3 + $0x60] sm:$0xff]
        %v667 = vld [vmem:[#allocation3 + $0x68] sm:$0xff]
        %v668 = vld [vmem:[#allocation3 + $0x70] sm:$0xff]
        %v669 = vld [vmem:[#allocation3 + $0x78] sm:$0xff]
        %v670 = vld [vmem:[#allocation3 + $0x80] sm:$0xff]
        %v671 = vld [vmem:[#allocation3 + $0x88] sm:$0xff]
        %v672 = vld [vmem:[#allocation3 + $0x90] sm:$0xff]
        %v673 = vld [vmem:[#allocation3 + $0x98] sm:$0xff]
        %v674 = vld [vmem:[#allocation3 + $0xa0] sm:$0xff]
        %v675 = vld [vmem:[#allocation3 + $0xa8] sm:$0xff]
        %v676 = vld [vmem:[#allocation3 + $0xb0] sm:$0xff]
        %v677 = vld [vmem:[#allocation3 + $0xb8] sm:$0xff]
        %v678 = vld [vmem:[#allocation3 + $0xc0] sm:$0xff]
        %v679 = vld [vmem:[#allocation3 + $0xc8] sm:$0xff]
        %v680 = vld [vmem:[#allocation3 + $0xd0] sm:$0xff]
        %v681 = vld [vmem:[#allocation3 + $0xd8] sm:$0xff]
        %v682 = vld [vmem:[#allocation3 + $0xe0] sm:$0xff]
        %v683 = vld [vmem:[#allocation3 + $0xe8] sm:$0xff]
        %v684 = vld [vmem:[#allocation3 + $0xf0] sm:$0xff]
        %v685 = vld [vmem:[#allocation3 + $0xf8] sm:$0xff]
        %v686 = vld [vmem:[#allocation3 + $0x100] sm:$0xff]
        %v687 = vld [vmem:[#allocation3 + $0x108] sm:$0xff]
        %v688 = vld [vmem:[#allocation3 + $0x110] sm:$0xff]
        %v689 = vld [vmem:[#allocation3 + $0x118] sm:$0xff]
        %v690 = vld [vmem:[#allocation3 + $0x120] sm:$0xff]
        %v691 = vld [vmem:[#allocation3 + $0x128] sm:$0xff]
        %v692 = vld [vmem:[#allocation3 + $0x130] sm:$0xff]
        %v693 = vld [vmem:[#allocation3 + $0x138] sm:$0xff]
        %v694 = vld [vmem:[#allocation3 + $0x140] sm:$0xff]
        %v695 = vld [vmem:[#allocation3 + $0x148] sm:$0xff]
        %v696 = vld [vmem:[#allocation3 + $0x150] sm:$0xff]
        %v697 = vld [vmem:[#allocation3 + $0x158] sm:$0xff]
        %v698 = vld [vmem:[#allocation3 + $0x160] sm:$0xff]
        %v699 = vld [vmem:[#allocation3 + $0x168] sm:$0xff]
        %v700 = vld [vmem:[#allocation3 + $0x170] sm:$0xff]
        %v701 = vld [vmem:[#allocation3 + $0x178] sm:$0xff]
        %v702 = vld [vmem:[%s4] sm:$0x1]
        %v703 = vld [vmem:[#allocation2] sm:$0xff]
        %704 = vmatprep.subr.mxu0 %v700
        %705 = vmatpush1.msra.mxu0 %v699
        %706 = vmatprep.subr.mxu0 %v697
        %707 = vmatpush1.msra.mxu0 %v696
        %708 = vmatprep.subr.mxu0 %v694
        %709 = vmatpush1.msra.mxu0 %v693
        %710 = vmatprep.subr.mxu0 %v691
        %711 = vmatpush1.msra.mxu0 %v690
        %712 = vmatprep.subr.mxu0 %v688
        %713 = vmatpush1.msra.mxu0 %v687
        %714 = vmatprep.subr.mxu0 %v685
        %715 = vmatpush1.msra.mxu0 %v684
        %716 = vmatprep.subr.mxu0 %v682
        %717 = vmatpush1.msra.mxu0 %v681
        %718 = vmatprep.subr.mxu0 %v679
        %719 = vmatpush1.msra.mxu0 %v678
        %720 = vmatprep.subr.mxu0 %v676
        %721 = vmatpush1.msra.mxu0 %v675
        %722 = vmatprep.subr.mxu0 %v673
        %723 = vmatpush1.msra.mxu0 %v672
        %724 = vmatprep.subr.mxu0 %v670
        %725 = vmatpush1.msra.mxu0 %v669
        %726 = vmatprep.subr.mxu0 %v667
        %727 = vmatpush1.msra.mxu0 %v666
        %728 = vmatprep.subr.mxu0 %v664
        %729 = vmatpush1.msra.mxu0 %v663
        %730 = vmatprep.subr.mxu0 %v661
        %731 = vmatpush1.msra.mxu0 %v660
        %732 = vmatprep.subr.mxu0 %v658
        %733 = vmatpush1.msra.mxu0 %v657
        %734 = vmatprep.subr.mxu0 %v655
        %735 = vmatpush1.msra.mxu0 %v654
        %736 = vmatprep.subr.mxu0 0.0
        %737 = vmatpush2.msra.mxu0 0.0
        %738 = vmatprep.subr.mxu0 0.0
        %739 = vmatpush2.msra.mxu0 0.0
        %740 = vmatprep.subr.mxu0 0.0
        %741 = vmatpush2.msra.mxu0 0.0
        %742 = vmatprep.subr.mxu0 0.0
        %743 = vmatpush2.msra.mxu0 0.0
        %744 = vmatprep.subr.mxu0 0.0
        %745 = vmatpush2.msra.mxu0 0.0
        %746 = vmatprep.subr.mxu0 0.0
        %747 = vmatpush2.msra.mxu0 0.0
        %748 = vmatprep.subr.mxu0 0.0
        %749 = vmatpush2.msra.mxu0 0.0
        %750 = vmatprep.subr.mxu0 0.0
        %751 = vmatpush2.msra.mxu0 0.0
        %752 = vmatprep.subr.mxu0 0.0
        %753 = vmatpush2.msra.mxu0 0.0
        %754 = vmatprep.subr.mxu0 0.0
        %755 = vmatpush2.msra.mxu0 0.0
        %756 = vmatprep.subr.mxu0 0.0
        %757 = vmatpush2.msra.mxu0 0.0
        %758 = vmatprep.subr.mxu0 0.0
        %759 = vmatpush2.msra.mxu0 0.0
        %760 = vmatprep.subr.mxu0 0.0
        %761 = vmatpush2.msra.mxu0 0.0
        %762 = vmatprep.subr.mxu0 0.0
        %763 = vmatpush2.msra.mxu0 0.0
        %764 = vmatprep.subr.mxu0 0.0
        %765 = vmatpush2.msra.mxu0 0.0
        %766 = vmatprep.subr.mxu0 0.0
        %767 = vmatpush2.msra.mxu0 0.0
        %768 = vmatprep.mubr.f32.mxu0 0.0
        %769 = vmatmul.mubr.f32.gmra.mxu0 %v703
        %v770 = vpop.f32.mrf.mxu0
        %v771 = vadd.f32 0.0, %v770
        %v772 = vpop.f32.mrf.mxu0
        %v773 = vadd.f32 0.0, %v772
        %774 = vdwg.mxu0
        %775 = vmatprep.subr.mxu0 0.0
        %776 = vmatpush1.msra.mxu0 %v701
        %777 = vmatprep.subr.mxu0 0.0
        %778 = vmatpush1.msra.mxu0 %v698
        %779 = vmatprep.subr.mxu0 0.0
        %780 = vmatpush1.msra.mxu0 %v695
        %781 = vmatprep.subr.mxu0 0.0
        %782 = vmatpush1.msra.mxu0 %v692
        %783 = vmatprep.subr.mxu0 0.0
        %784 = vmatpush1.msra.mxu0 %v689
        %785 = vmatprep.subr.mxu0 0.0
        %786 = vmatpush1.msra.mxu0 %v686
        %787 = vmatprep.subr.mxu0 0.0
        %788 = vmatpush1.msra.mxu0 %v683
        %789 = vmatprep.subr.mxu0 0.0
        %790 = vmatpush1.msra.mxu0 %v680
        %791 = vmatprep.subr.mxu0 0.0
        %792 = vmatpush1.msra.mxu0 %v677
        %793 = vmatprep.subr.mxu0 0.0
        %794 = vmatpush1.msra.mxu0 %v674
        %795 = vmatprep.subr.mxu0 0.0
        %796 = vmatpush1.msra.mxu0 %v671
        %797 = vmatprep.subr.mxu0 0.0
        %798 = vmatpush1.msra.mxu0 %v668
        %799 = vmatprep.subr.mxu0 0.0
        %800 = vmatpush1.msra.mxu0 %v665
        %801 = vmatprep.subr.mxu0 0.0
        %802 = vmatpush1.msra.mxu0 %v662
        %803 = vmatprep.subr.mxu0 0.0
        %804 = vmatpush1.msra.mxu0 %v659
        %805 = vmatprep.subr.mxu0 0.0
        %806 = vmatpush1.msra.mxu0 %v656
        %807 = vmatprep.subr.mxu0 0.0
        %808 = vmatpush2.msra.mxu0 0.0
        %809 = vmatprep.subr.mxu0 0.0
        %810 = vmatpush2.msra.mxu0 0.0
        %811 = vmatprep.subr.mxu0 0.0
        %812 = vmatpush2.msra.mxu0 0.0
        %813 = vmatprep.subr.mxu0 0.0
        %814 = vmatpush2.msra.mxu0 0.0
        %815 = vmatprep.subr.mxu0 0.0
        %816 = vmatpush2.msra.mxu0 0.0
        %817 = vmatprep.subr.mxu0 0.0
        %818 = vmatpush2.msra.mxu0 0.0
        %819 = vmatprep.subr.mxu0 0.0
        %820 = vmatpush2.msra.mxu0 0.0
        %821 = vmatprep.subr.mxu0 0.0
        %822 = vmatpush2.msra.mxu0 0.0
        %823 = vmatprep.subr.mxu0 0.0
        %824 = vmatpush2.msra.mxu0 0.0
        %825 = vmatprep.subr.mxu0 0.0
        %826 = vmatpush2.msra.mxu0 0.0
        %827 = vmatprep.subr.mxu0 0.0
        %828 = vmatpush2.msra.mxu0 0.0
        %829 = vmatprep.subr.mxu0 0.0
        %830 = vmatpush2.msra.mxu0 0.0
        %831 = vmatprep.subr.mxu0 0.0
        %832 = vmatpush2.msra.mxu0 0.0
        %833 = vmatprep.subr.mxu0 0.0
        %834 = vmatpush2.msra.mxu0 0.0
        %835 = vmatprep.subr.mxu0 0.0
        %836 = vmatpush2.msra.mxu0 0.0
        %837 = vmatprep.subr.mxu0 0.0
        %838 = vmatpush2.msra.mxu0 0.0
        %839 = vmatprep.mubr.f32.mxu0 0.0
        %840 = vmatmul.mubr.f32.gmra.mxu0 %v703
        %v841 = vpop.f32.mrf.mxu0
        %v842 = vadd.f32 0.0, %v841
        %v843 = vpop.f32.mrf.mxu0
        %844 = vdwg.mxu0
        %v845 = vadd.f32 %v547, %v771
        %v846 = vxor.u32 %v845, 2147483648
        %v847 = vmul.f32 %v846, 1.442695
        %v848 = vpow.pop %v847
        %v849 = vadd.f32 %v848, 1.0
        %v850 = vrcp.pop %v849
        %v851 = vmul.f32 1.0, %v850
        %v852 = vadd.f32 %v549, %v773
        %v853 = vxor.u32 %v852, 2147483648
        %v854 = vmul.f32 %v853, 1.442695
        %v855 = vpow.pop %v854
        %v856 = vadd.f32 %v855, 1.0
        %v857 = vrcp.pop %v856
        %v858 = vmul.f32 1.0, %v857
        %v860 = vlaneseq
        %v861 = vshrl.u32 %v860, 7
        %v862 = vsub.s32 0, %v861
        %v863 = vrot.slane %v702, %v862
        %v865 = vadd.f32 %v842, %v863
        %v866 = vmul.f32 %v851, %v865
        %v867 = vadd.f32 %v636, %v866
        %v868 = vtanh.pop %v867
        %v869 = vsub.f32 1.0, %v858
        %v870 = vmul.f32 %v869, %v868
        %v871 = vmul.f32 %v858, %v703
        %v872 = vadd.f32 %v870, %v871
        %873 = vmatprep.subr.mxu0 %v700
        %874 = vmatpush1.msra.mxu0 %v699
        %875 = vmatprep.subr.mxu0 %v697
        %876 = vmatpush1.msra.mxu0 %v696
        %877 = vmatprep.subr.mxu0 %v694
        %878 = vmatpush1.msra.mxu0 %v693
        %879 = vmatprep.subr.mxu0 %v691
        %880 = vmatpush1.msra.mxu0 %v690
        %881 = vmatprep.subr.mxu0 %v688
        %882 = vmatpush1.msra.mxu0 %v687
        %883 = vmatprep.subr.mxu0 %v685
        %884 = vmatpush1.msra.mxu0 %v684
        %885 = vmatprep.subr.mxu0 %v682
        %886 = vmatpush1.msra.mxu0 %v681
        %887 = vmatprep.subr.mxu0 %v679
        %888 = vmatpush1.msra.mxu0 %v678
        %889 = vmatprep.subr.mxu0 %v676
        %890 = vmatpush1.msra.mxu0 %v675
        %891 = vmatprep.subr.mxu0 %v673
        %892 = vmatpush1.msra.mxu0 %v672
        %893 = vmatprep.subr.mxu0 %v670
        %894 = vmatpush1.msra.mxu0 %v669
        %895 = vmatprep.subr.mxu0 %v667
        %896 = vmatpush1.msra.mxu0 %v666
        %897 = vmatprep.subr.mxu0 %v664
        %898 = vmatpush1.msra.mxu0 %v663
        %899 = vmatprep.subr.mxu0 %v661
        %900 = vmatpush1.msra.mxu0 %v660
        %901 = vmatprep.subr.mxu0 %v658
        %902 = vmatpush1.msra.mxu0 %v657
        %903 = vmatprep.subr.mxu0 %v655
        %904 = vmatpush1.msra.mxu0 %v654
        %905 = vmatprep.subr.mxu0 0.0
        %906 = vmatpush2.msra.mxu0 0.0
        %907 = vmatprep.subr.mxu0 0.0
        %908 = vmatpush2.msra.mxu0 0.0
        %909 = vmatprep.subr.mxu0 0.0
        %910 = vmatpush2.msra.mxu0 0.0
        %911 = vmatprep.subr.mxu0 0.0
        %912 = vmatpush2.msra.mxu0 0.0
        %913 = vmatprep.subr.mxu0 0.0
        %914 = vmatpush2.msra.mxu0 0.0
        %915 = vmatprep.subr.mxu0 0.0
        %916 = vmatpush2.msra.mxu0 0.0
        %917 = vmatprep.subr.mxu0 0.0
        %918 = vmatpush2.msra.mxu0 0.0
        %919 = vmatprep.subr.mxu0 0.0
        %920 = vmatpush2.msra.mxu0 0.0
        %921 = vmatprep.subr.mxu0 0.0
        %922 = vmatpush2.msra.mxu0 0.0
        %923 = vmatprep.subr.mxu0 0.0
        %924 = vmatpush2.msra.mxu0 0.0
        %925 = vmatprep.subr.mxu0 0.0
        %926 = vmatpush2.msra.mxu0 0.0
        %927 = vmatprep.subr.mxu0 0.0
        %928 = vmatpush2.msra.mxu0 0.0
        %929 = vmatprep.subr.mxu0 0.0
        %930 = vmatpush2.msra.mxu0 0.0
        %931 = vmatprep.subr.mxu0 0.0
        %932 = vmatpush2.msra.mxu0 0.0
        %933 = vmatprep.subr.mxu0 0.0
        %934 = vmatpush2.msra.mxu0 0.0
        %935 = vmatprep.subr.mxu0 0.0
        %936 = vmatpush2.msra.mxu0 0.0
        %937 = vmatprep.mubr.f32.mxu0 0.0
        %938 = vmatmul.mubr.f32.gmra.mxu0 %v872
        %v939 = vpop.f32.mrf.mxu0
        %v940 = vadd.f32 0.0, %v939
        %v941 = vpop.f32.mrf.mxu0
        %v942 = vadd.f32 0.0, %v941
        %943 = vdwg.mxu0
        %944 = vmatprep.subr.mxu0 0.0
        %945 = vmatpush1.msra.mxu0 %v701
        %946 = vmatprep.subr.mxu0 0.0
        %947 = vmatpush1.msra.mxu0 %v698
        %948 = vmatprep.subr.mxu0 0.0
        %949 = vmatpush1.msra.mxu0 %v695
        %950 = vmatprep.subr.mxu0 0.0
        %951 = vmatpush1.msra.mxu0 %v692
        %952 = vmatprep.subr.mxu0 0.0
        %953 = vmatpush1.msra.mxu0 %v689
        %954 = vmatprep.subr.mxu0 0.0
        %955 = vmatpush1.msra.mxu0 %v686
        %956 = vmatprep.subr.mxu0 0.0
        %957 = vmatpush1.msra.mxu0 %v683
        %958 = vmatprep.subr.mxu0 0.0
        %959 = vmatpush1.msra.mxu0 %v680
        %960 = vmatprep.subr.mxu0 0.0
        %961 = vmatpush1.msra.mxu0 %v677
        %962 = vmatprep.subr.mxu0 0.0
        %963 = vmatpush1.msra.mxu0 %v674
        %964 = vmatprep.subr.mxu0 0.0
        %965 = vmatpush1.msra.mxu0 %v671
        %966 = vmatprep.subr.mxu0 0.0
        %967 = vmatpush1.msra.mxu0 %v668
        %968 = vmatprep.subr.mxu0 0.0
        %969 = vmatpush1.msra.mxu0 %v665
        %970 = vmatprep.subr.mxu0 0.0
        %971 = vmatpush1.msra.mxu0 %v662
        %972 = vmatprep.subr.mxu0 0.0
        %973 = vmatpush1.msra.mxu0 %v659
        %974 = vmatprep.subr.mxu0 0.0
        %975 = vmatpush1.msra.mxu0 %v656
        %976 = vmatprep.subr.mxu0 0.0
        %977 = vmatpush2.msra.mxu0 0.0
        %978 = vmatprep.subr.mxu0 0.0
        %979 = vmatpush2.msra.mxu0 0.0
        %980 = vmatprep.subr.mxu0 0.0
        %981 = vmatpush2.msra.mxu0 0.0
        %982 = vmatprep.subr.mxu0 0.0
        %983 = vmatpush2.msra.mxu0 0.0
        %984 = vmatprep.subr.mxu0 0.0
        %985 = vmatpush2.msra.mxu0 0.0
        %986 = vmatprep.subr.mxu0 0.0
        %987 = vmatpush2.msra.mxu0 0.0
        %988 = vmatprep.subr.mxu0 0.0
        %989 = vmatpush2.msra.mxu0 0.0
        %990 = vmatprep.subr.mxu0 0.0
        %991 = vmatpush2.msra.mxu0 0.0
        %992 = vmatprep.subr.mxu0 0.0
        %993 = vmatpush2.msra.mxu0 0.0
        %994 = vmatprep.subr.mxu0 0.0
        %995 = vmatpush2.msra.mxu0 0.0
        %996 = vmatprep.subr.mxu0 0.0
        %997 = vmatpush2.msra.mxu0 0.0
        %998 = vmatprep.subr.mxu0 0.0
        %999 = vmatpush2.msra.mxu0 0.0
        %1000 = vmatprep.subr.mxu0 0.0
        %1001 = vmatpush2.msra.mxu0 0.0
        %1002 = vmatprep.subr.mxu0 0.0
        %1003 = vmatpush2.msra.mxu0 0.0
        %1004 = vmatprep.subr.mxu0 0.0
        %1005 = vmatpush2.msra.mxu0 0.0
        %1006 = vmatprep.subr.mxu0 0.0
        %1007 = vmatpush2.msra.mxu0 0.0
        %1008 = vmatprep.mubr.f32.mxu0 0.0
        %1009 = vmatmul.mubr.f32.gmra.mxu0 %v872
        %v1010 = vpop.f32.mrf.mxu0
        %v1011 = vadd.f32 0.0, %v1010
        %v1012 = vpop.f32.mrf.mxu0
        %1013 = vdwg.mxu0
        %v1014 = vadd.f32 %v553, %v940
        %v1015 = vxor.u32 %v1014, 2147483648
        %v1016 = vmul.f32 %v1015, 1.442695
        %v1017 = vpow.pop %v1016
        %v1018 = vadd.f32 %v1017, 1.0
        %v1019 = vrcp.pop %v1018
        %v1020 = vmul.f32 1.0, %v1019
        %v1021 = vadd.f32 %v555, %v942
        %v1022 = vxor.u32 %v1021, 2147483648
        %v1023 = vmul.f32 %v1022, 1.442695
        %v1024 = vpow.pop %v1023
        %v1025 = vadd.f32 %v1024, 1.0
        %v1026 = vrcp.pop %v1025
        %v1027 = vmul.f32 1.0, %v1026
        %v1028 = vadd.f32 %v1011, %v863
        %v1029 = vmul.f32 %v1020, %v1028
        %v1030 = vadd.f32 %v641, %v1029
        %v1031 = vtanh.pop %v1030
        %v1032 = vsub.f32 1.0, %v1027
        %v1033 = vmul.f32 %v1032, %v1031
        %v1034 = vmul.f32 %v1027, %v872
        %v1035 = vadd.f32 %v1033, %v1034
        %1036 = vmatprep.subr.mxu0 %v700
        %1037 = vmatpush1.msra.mxu0 %v699
        %1038 = vmatprep.subr.mxu0 %v697
        %1039 = vmatpush1.msra.mxu0 %v696
        %1040 = vmatprep.subr.mxu0 %v694
        %1041 = vmatpush1.msra.mxu0 %v693
        %1042 = vmatprep.subr.mxu0 %v691
        %1043 = vmatpush1.msra.mxu0 %v690
        %1044 = vmatprep.subr.mxu0 %v688
        %1045 = vmatpush1.msra.mxu0 %v687
        %1046 = vmatprep.subr.mxu0 %v685
        %1047 = vmatpush1.msra.mxu0 %v684
        %1048 = vmatprep.subr.mxu0 %v682
        %1049 = vmatpush1.msra.mxu0 %v681
        %1050 = vmatprep.subr.mxu0 %v679
        %1051 = vmatpush1.msra.mxu0 %v678
        %1052 = vmatprep.subr.mxu0 %v676
        %1053 = vmatpush1.msra.mxu0 %v675
        %1054 = vmatprep.subr.mxu0 %v673
        %1055 = vmatpush1.msra.mxu0 %v672
        %1056 = vmatprep.subr.mxu0 %v670
        %1057 = vmatpush1.msra.mxu0 %v669
        %1058 = vmatprep.subr.mxu0 %v667
        %1059 = vmatpush1.msra.mxu0 %v666
        %1060 = vmatprep.subr.mxu0 %v664
        %1061 = vmatpush1.msra.mxu0 %v663
        %1062 = vmatprep.subr.mxu0 %v661
        %1063 = vmatpush1.msra.mxu0 %v660
        %1064 = vmatprep.subr.mxu0 %v658
        %1065 = vmatpush1.msra.mxu0 %v657
        %1066 = vmatprep.subr.mxu0 %v655
        %1067 = vmatpush1.msra.mxu0 %v654
        %1068 = vmatprep.subr.mxu0 0.0
        %1069 = vmatpush2.msra.mxu0 0.0
        %1070 = vmatprep.subr.mxu0 0.0
        %1071 = vmatpush2.msra.mxu0 0.0
        %1072 = vmatprep.subr.mxu0 0.0
        %1073 = vmatpush2.msra.mxu0 0.0
        %1074 = vmatprep.subr.mxu0 0.0
        %1075 = vmatpush2.msra.mxu0 0.0
        %1076 = vmatprep.subr.mxu0 0.0
        %1077 = vmatpush2.msra.mxu0 0.0
        %1078 = vmatprep.subr.mxu0 0.0
        %1079 = vmatpush2.msra.mxu0 0.0
        %1080 = vmatprep.subr.mxu0 0.0
        %1081 = vmatpush2.msra.mxu0 0.0
        %1082 = vmatprep.subr.mxu0 0.0
        %1083 = vmatpush2.msra.mxu0 0.0
        %1084 = vmatprep.subr.mxu0 0.0
        %1085 = vmatpush2.msra.mxu0 0.0
        %1086 = vmatprep.subr.mxu0 0.0
        %1087 = vmatpush2.msra.mxu0 0.0
        %1088 = vmatprep.subr.mxu0 0.0
        %1089 = vmatpush2.msra.mxu0 0.0
        %1090 = vmatprep.subr.mxu0 0.0
        %1091 = vmatpush2.msra.mxu0 0.0
        %1092 = vmatprep.subr.mxu0 0.0
        %1093 = vmatpush2.msra.mxu0 0.0
        %1094 = vmatprep.subr.mxu0 0.0
        %1095 = vmatpush2.msra.mxu0 0.0
        %1096 = vmatprep.subr.mxu0 0.0
        %1097 = vmatpush2.msra.mxu0 0.0
        %1098 = vmatprep.subr.mxu0 0.0
        %1099 = vmatpush2.msra.mxu0 0.0
        %1100 = vmatprep.mubr.f32.mxu0 0.0
        %1101 = vmatmul.mubr.f32.gmra.mxu0 %v1035
        %v1102 = vpop.f32.mrf.mxu0
        %v1103 = vadd.f32 0.0, %v1102
        %v1104 = vpop.f32.mrf.mxu0
        %v1105 = vadd.f32 0.0, %v1104
        %1106 = vdwg.mxu0
        %1107 = vmatprep.subr.mxu0 0.0
        %1108 = vmatpush1.msra.mxu0 %v701
        %1109 = vmatprep.subr.mxu0 0.0
        %1110 = vmatpush1.msra.mxu0 %v698
        %1111 = vmatprep.subr.mxu0 0.0
        %1112 = vmatpush1.msra.mxu0 %v695
        %1113 = vmatprep.subr.mxu0 0.0
        %1114 = vmatpush1.msra.mxu0 %v692
        %1115 = vmatprep.subr.mxu0 0.0
        %1116 = vmatpush1.msra.mxu0 %v689
        %1117 = vmatprep.subr.mxu0 0.0
        %1118 = vmatpush1.msra.mxu0 %v686
        %1119 = vmatprep.subr.mxu0 0.0
        %1120 = vmatpush1.msra.mxu0 %v683
        %1121 = vmatprep.subr.mxu0 0.0
        %1122 = vmatpush1.msra.mxu0 %v680
        %1123 = vmatprep.subr.mxu0 0.0
        %1124 = vmatpush1.msra.mxu0 %v677
        %1125 = vmatprep.subr.mxu0 0.0
        %1126 = vmatpush1.msra.mxu0 %v674
        %1127 = vmatprep.subr.mxu0 0.0
        %1128 = vmatpush1.msra.mxu0 %v671
        %1129 = vmatprep.subr.mxu0 0.0
        %1130 = vmatpush1.msra.mxu0 %v668
        %1131 = vmatprep.subr.mxu0 0.0
        %1132 = vmatpush1.msra.mxu0 %v665
        %1133 = vmatprep.subr.mxu0 0.0
        %1134 = vmatpush1.msra.mxu0 %v662
        %1135 = vmatprep.subr.mxu0 0.0
        %1136 = vmatpush1.msra.mxu0 %v659
        %1137 = vmatprep.subr.mxu0 0.0
        %1138 = vmatpush1.msra.mxu0 %v656
        %1139 = vmatprep.subr.mxu0 0.0
        %1140 = vmatpush2.msra.mxu0 0.0
        %1141 = vmatprep.subr.mxu0 0.0
        %1142 = vmatpush2.msra.mxu0 0.0
        %1143 = vmatprep.subr.mxu0 0.0
        %1144 = vmatpush2.msra.mxu0 0.0
        %1145 = vmatprep.subr.mxu0 0.0
        %1146 = vmatpush2.msra.mxu0 0.0
        %1147 = vmatprep.subr.mxu0 0.0
        %1148 = vmatpush2.msra.mxu0 0.0
        %1149 = vmatprep.subr.mxu0 0.0
        %1150 = vmatpush2.msra.mxu0 0.0
        %1151 = vmatprep.subr.mxu0 0.0
        %1152 = vmatpush2.msra.mxu0 0.0
        %1153 = vmatprep.subr.mxu0 0.0
        %1154 = vmatpush2.msra.mxu0 0.0
        %1155 = vmatprep.subr.mxu0 0.0
        %1156 = vmatpush2.msra.mxu0 0.0
        %1157 = vmatprep.subr.mxu0 0.0
        %1158 = vmatpush2.msra.mxu0 0.0
        %1159 = vmatprep.subr.mxu0 0.0
        %1160 = vmatpush2.msra.mxu0 0.0
        %1161 = vmatprep.subr.mxu0 0.0
        %1162 = vmatpush2.msra.mxu0 0.0
        %1163 = vmatprep.subr.mxu0 0.0
        %1164 = vmatpush2.msra.mxu0 0.0
        %1165 = vmatprep.subr.mxu0 0.0
        %1166 = vmatpush2.msra.mxu0 0.0
        %1167 = vmatprep.subr.mxu0 0.0
        %1168 = vmatpush2.msra.mxu0 0.0
        %1169 = vmatprep.subr.mxu0 0.0
        %1170 = vmatpush2.msra.mxu0 0.0
        %1171 = vmatprep.mubr.f32.mxu0 0.0
        %1172 = vmatmul.mubr.f32.gmra.mxu0 %v1035
        %v1173 = vpop.f32.mrf.mxu0
        %v1174 = vadd.f32 0.0, %v1173
        %v1175 = vpop.f32.mrf.mxu0
        %1176 = vdwg.mxu0
        %v1177 = vadd.f32 %v559, %v1103
        %v1178 = vxor.u32 %v1177, 2147483648
        %v1179 = vmul.f32 %v1178, 1.442695
        %v1180 = vpow.pop %v1179
        %v1181 = vadd.f32 %v1180, 1.0
        %v1182 = vrcp.pop %v1181
        %v1183 = vmul.f32 1.0, %v1182
        %v1184 = vadd.f32 %v561, %v1105
        %v1185 = vxor.u32 %v1184, 2147483648
        %v1186 = vmul.f32 %v1185, 1.442695
        %v1187 = vpow.pop %v1186
        %v1188 = vadd.f32 %v1187, 1.0
        %v1189 = vrcp.pop %v1188
        %v1190 = vmul.f32 1.0, %v1189
        %v1191 = vadd.f32 %v1174, %v863
        %v1192 = vmul.f32 %v1183, %v1191
        %v1193 = vadd.f32 %v646, %v1192
        %v1194 = vtanh.pop %v1193
        %v1195 = vsub.f32 1.0, %v1190
        %v1196 = vmul.f32 %v1195, %v1194
        %v1197 = vmul.f32 %v1190, %v1035
        %v1198 = vadd.f32 %v1196, %v1197
        %1199 = vmatprep.subr.mxu0 %v700
        %1200 = vmatpush1.msra.mxu0 %v699
        %1201 = vmatprep.subr.mxu0 %v697
        %1202 = vmatpush1.msra.mxu0 %v696
        %1203 = vmatprep.subr.mxu0 %v694
        %1204 = vmatpush1.msra.mxu0 %v693
        %1205 = vmatprep.subr.mxu0 %v691
        %1206 = vmatpush1.msra.mxu0 %v690
        %1207 = vmatprep.subr.mxu0 %v688
        %1208 = vmatpush1.msra.mxu0 %v687
        %1209 = vmatprep.subr.mxu0 %v685
        %1210 = vmatpush1.msra.mxu0 %v684
        %1211 = vmatprep.subr.mxu0 %v682
        %1212 = vmatpush1.msra.mxu0 %v681
        %1213 = vmatprep.subr.mxu0 %v679
        %1214 = vmatpush1.msra.mxu0 %v678
        %1215 = vmatprep.subr.mxu0 %v676
        %1216 = vmatpush1.msra.mxu0 %v675
        %1217 = vmatprep.subr.mxu0 %v673
        %1218 = vmatpush1.msra.mxu0 %v672
        %1219 = vmatprep.subr.mxu0 %v670
        %1220 = vmatpush1.msra.mxu0 %v669
        %1221 = vmatprep.subr.mxu0 %v667
        %1222 = vmatpush1.msra.mxu0 %v666
        %1223 = vmatprep.subr.mxu0 %v664
        %1224 = vmatpush1.msra.mxu0 %v663
        %1225 = vmatprep.subr.mxu0 %v661
        %1226 = vmatpush1.msra.mxu0 %v660
        %1227 = vmatprep.subr.mxu0 %v658
        %1228 = vmatpush1.msra.mxu0 %v657
        %1229 = vmatprep.subr.mxu0 %v655
        %1230 = vmatpush1.msra.mxu0 %v654
        %1231 = vmatprep.subr.mxu0 0.0
        %1232 = vmatpush2.msra.mxu0 0.0
        %1233 = vmatprep.subr.mxu0 0.0
        %1234 = vmatpush2.msra.mxu0 0.0
        %1235 = vmatprep.subr.mxu0 0.0
        %1236 = vmatpush2.msra.mxu0 0.0
        %1237 = vmatprep.subr.mxu0 0.0
        %1238 = vmatpush2.msra.mxu0 0.0
        %1239 = vmatprep.subr.mxu0 0.0
        %1240 = vmatpush2.msra.mxu0 0.0
        %1241 = vmatprep.subr.mxu0 0.0
        %1242 = vmatpush2.msra.mxu0 0.0
        %1243 = vmatprep.subr.mxu0 0.0
        %1244 = vmatpush2.msra.mxu0 0.0
        %1245 = vmatprep.subr.mxu0 0.0
        %1246 = vmatpush2.msra.mxu0 0.0
        %1247 = vmatprep.subr.mxu0 0.0
        %1248 = vmatpush2.msra.mxu0 0.0
        %1249 = vmatprep.subr.mxu0 0.0
        %1250 = vmatpush2.msra.mxu0 0.0
        %1251 = vmatprep.subr.mxu0 0.0
        %1252 = vmatpush2.msra.mxu0 0.0
        %1253 = vmatprep.subr.mxu0 0.0
        %1254 = vmatpush2.msra.mxu0 0.0
        %1255 = vmatprep.subr.mxu0 0.0
        %1256 = vmatpush2.msra.mxu0 0.0
        %1257 = vmatprep.subr.mxu0 0.0
        %1258 = vmatpush2.msra.mxu0 0.0
        %1259 = vmatprep.subr.mxu0 0.0
        %1260 = vmatpush2.msra.mxu0 0.0
        %1261 = vmatprep.subr.mxu0 0.0
        %1262 = vmatpush2.msra.mxu0 0.0
        %1263 = vmatprep.mubr.f32.mxu0 0.0
        %1264 = vmatmul.mubr.f32.gmra.mxu0 %v1198
        %v1265 = vpop.f32.mrf.mxu0
        %v1266 = vadd.f32 0.0, %v1265
        %v1267 = vpop.f32.mrf.mxu0
        %v1268 = vadd.f32 0.0, %v1267
        %1269 = vdwg.mxu0
        %1270 = vmatprep.subr.mxu0 0.0
        %1271 = vmatpush1.msra.mxu0 %v701
        %1272 = vmatprep.subr.mxu0 0.0
        %1273 = vmatpush1.msra.mxu0 %v698
        %1274 = vmatprep.subr.mxu0 0.0
        %1275 = vmatpush1.msra.mxu0 %v695
        %1276 = vmatprep.subr.mxu0 0.0
        %1277 = vmatpush1.msra.mxu0 %v692
        %1278 = vmatprep.subr.mxu0 0.0
        %1279 = vmatpush1.msra.mxu0 %v689
        %1280 = vmatprep.subr.mxu0 0.0
        %1281 = vmatpush1.msra.mxu0 %v686
        %1282 = vmatprep.subr.mxu0 0.0
        %1283 = vmatpush1.msra.mxu0 %v683
        %1284 = vmatprep.subr.mxu0 0.0
        %1285 = vmatpush1.msra.mxu0 %v680
        %1286 = vmatprep.subr.mxu0 0.0
        %1287 = vmatpush1.msra.mxu0 %v677
        %1288 = vmatprep.subr.mxu0 0.0
        %1289 = vmatpush1.msra.mxu0 %v674
        %1290 = vmatprep.subr.mxu0 0.0
        %1291 = vmatpush1.msra.mxu0 %v671
        %1292 = vmatprep.subr.mxu0 0.0
        %1293 = vmatpush1.msra.mxu0 %v668
        %1294 = vmatprep.subr.mxu0 0.0
        %1295 = vmatpush1.msra.mxu0 %v665
        %1296 = vmatprep.subr.mxu0 0.0
        %1297 = vmatpush1.msra.mxu0 %v662
        %1298 = vmatprep.subr.mxu0 0.0
        %1299 = vmatpush1.msra.mxu0 %v659
        %1300 = vmatprep.subr.mxu0 0.0
        %1301 = vmatpush1.msra.mxu0 %v656
        %1302 = vmatprep.subr.mxu0 0.0
        %1303 = vmatpush2.msra.mxu0 0.0
        %1304 = vmatprep.subr.mxu0 0.0
        %1305 = vmatpush2.msra.mxu0 0.0
        %1306 = vmatprep.subr.mxu0 0.0
        %1307 = vmatpush2.msra.mxu0 0.0
        %1308 = vmatprep.subr.mxu0 0.0
        %1309 = vmatpush2.msra.mxu0 0.0
        %1310 = vmatprep.subr.mxu0 0.0
        %1311 = vmatpush2.msra.mxu0 0.0
        %1312 = vmatprep.subr.mxu0 0.0
        %1313 = vmatpush2.msra.mxu0 0.0
        %1314 = vmatprep.subr.mxu0 0.0
        %1315 = vmatpush2.msra.mxu0 0.0
        %1316 = vmatprep.subr.mxu0 0.0
        %1317 = vmatpush2.msra.mxu0 0.0
        %1318 = vmatprep.subr.mxu0 0.0
        %1319 = vmatpush2.msra.mxu0 0.0
        %1320 = vmatprep.subr.mxu0 0.0
        %1321 = vmatpush2.msra.mxu0 0.0
        %1322 = vmatprep.subr.mxu0 0.0
        %1323 = vmatpush2.msra.mxu0 0.0
        %1324 = vmatprep.subr.mxu0 0.0
        %1325 = vmatpush2.msra.mxu0 0.0
        %1326 = vmatprep.subr.mxu0 0.0
        %1327 = vmatpush2.msra.mxu0 0.0
        %1328 = vmatprep.subr.mxu0 0.0
        %1329 = vmatpush2.msra.mxu0 0.0
        %1330 = vmatprep.subr.mxu0 0.0
        %1331 = vmatpush2.msra.mxu0 0.0
        %1332 = vmatprep.subr.mxu0 0.0
        %1333 = vmatpush2.msra.mxu0 0.0
        %1334 = vmatprep.mubr.f32.mxu0 0.0
        %1335 = vmatmul.mubr.f32.gmra.mxu0 %v1198
        %v1336 = vpop.f32.mrf.mxu0
        %v1337 = vadd.f32 0.0, %v1336
        %v1338 = vpop.f32.mrf.mxu0
        %1339 = vdwg.mxu0
        %v1340 = vadd.f32 %v565, %v1266
        %v1341 = vxor.u32 %v1340, 2147483648
        %v1342 = vmul.f32 %v1341, 1.442695
        %v1343 = vpow.pop %v1342
        %v1344 = vadd.f32 %v1343, 1.0
        %v1345 = vrcp.pop %v1344
        %v1346 = vmul.f32 1.0, %v1345
        %v1347 = vadd.f32 %v567, %v1268
        %v1348 = vxor.u32 %v1347, 2147483648
        %v1349 = vmul.f32 %v1348, 1.442695
        %v1350 = vpow.pop %v1349
        %v1351 = vadd.f32 %v1350, 1.0
        %v1352 = vrcp.pop %v1351
        %v1353 = vmul.f32 1.0, %v1352
        %v1354 = vadd.f32 %v1337, %v863
        %v1355 = vmul.f32 %v1346, %v1354
        %v1356 = vadd.f32 %v651, %v1355
        %v1357 = vtanh.pop %v1356
        %v1358 = vsub.f32 1.0, %v1353
        %v1359 = vmul.f32 %v1358, %v1357
        %v1360 = vmul.f32 %v1353, %v1198
        %v1361 = vadd.f32 %v1359, %v1360
        %1362 = vst [vmem:[#allocation2] sm:$0xff] %v1361
        %v1363 = vld [vmem:[#allocation5] sm:$0xff]
        %v1364 = vld [vmem:[#allocation5 + $0x8] sm:$0xff]
        %v1365 = vld [vmem:[#allocation5 + $0x10] sm:$0xff]
        %v1366 = vld [vmem:[#allocation5 + $0x18] sm:$0xff]
        %v1367 = vld [vmem:[#allocation5 + $0x20] sm:$0xff]
        %v1368 = vld [vmem:[#allocation5 + $0x28] sm:$0xff]
        %v1369 = vld [vmem:[#allocation5 + $0x30] sm:$0xff]
        %v1370 = vld [vmem:[#allocation5 + $0x38] sm:$0xff]
        %v1371 = vld [vmem:[#allocation5 + $0x40] sm:$0xff]
        %v1372 = vld [vmem:[#allocation5 + $0x48] sm:$0xff]
        %v1373 = vld [vmem:[#allocation5 + $0x50] sm:$0xff]
        %v1374 = vld [vmem:[#allocation5 + $0x58] sm:$0xff]
        %v1375 = vld [vmem:[#allocation5 + $0x60] sm:$0xff]
        %v1376 = vld [vmem:[#allocation5 + $0x68] sm:$0xff]
        %v1377 = vld [vmem:[#allocation5 + $0x70] sm:$0xff]
        %v1378 = vld [vmem:[#allocation5 + $0x78] sm:$0xff]
        %v1379 = vld [vmem:[#allocation5 + $0x80] sm:$0xff]
        %v1380 = vld [vmem:[#allocation5 + $0x88] sm:$0xff]
        %v1381 = vld [vmem:[#allocation5 + $0x90] sm:$0xff]
        %v1382 = vld [vmem:[#allocation5 + $0x98] sm:$0xff]
        %v1383 = vld [vmem:[#allocation5 + $0xa0] sm:$0xff]
        %v1384 = vld [vmem:[#allocation5 + $0xa8] sm:$0xff]
        %v1385 = vld [vmem:[#allocation5 + $0xb0] sm:$0xff]
        %v1386 = vld [vmem:[#allocation5 + $0xb8] sm:$0xff]
        %v1387 = vld [vmem:[#allocation5 + $0xc0] sm:$0xff]
        %v1388 = vld [vmem:[#allocation5 + $0xc8] sm:$0xff]
        %v1389 = vld [vmem:[#allocation5 + $0xd0] sm:$0xff]
        %v1390 = vld [vmem:[#allocation5 + $0xd8] sm:$0xff]
        %v1391 = vld [vmem:[#allocation5 + $0xe0] sm:$0xff]
        %v1392 = vld [vmem:[#allocation5 + $0xe8] sm:$0xff]
        %v1393 = vld [vmem:[#allocation5 + $0xf0] sm:$0xff]
        %v1394 = vld [vmem:[#allocation5 + $0xf8] sm:$0xff]
        %v1395 = vld [vmem:[#allocation5 + $0x100] sm:$0xff]
        %v1396 = vld [vmem:[#allocation5 + $0x108] sm:$0xff]
        %v1397 = vld [vmem:[#allocation5 + $0x110] sm:$0xff]
        %v1398 = vld [vmem:[#allocation5 + $0x118] sm:$0xff]
        %v1399 = vld [vmem:[#allocation5 + $0x120] sm:$0xff]
        %v1400 = vld [vmem:[#allocation5 + $0x128] sm:$0xff]
        %v1401 = vld [vmem:[#allocation5 + $0x130] sm:$0xff]
        %v1402 = vld [vmem:[#allocation5 + $0x138] sm:$0xff]
        %v1403 = vld [vmem:[#allocation5 + $0x140] sm:$0xff]
        %v1404 = vld [vmem:[#allocation5 + $0x148] sm:$0xff]
        %v1405 = vld [vmem:[#allocation5 + $0x150] sm:$0xff]
        %v1406 = vld [vmem:[#allocation5 + $0x158] sm:$0xff]
        %v1407 = vld [vmem:[#allocation5 + $0x160] sm:$0xff]
        %v1408 = vld [vmem:[#allocation5 + $0x168] sm:$0xff]
        %v1409 = vld [vmem:[#allocation5 + $0x170] sm:$0xff]
        %v1410 = vld [vmem:[#allocation5 + $0x178] sm:$0xff]
        %v1411 = vld [vmem:[%s7] sm:$0x7]
        %v1413 = vlaneseq
        %v1414 = vshrl.u32 %v1413, 7
        %v1415 = vsub.s32 0, %v1414
        %v1416 = vrot.slane %v1411, %v1415
        %v1417 = vlaneseq
        %v1418 = vshrl.u32 %v1417, 7
        %v1419 = vsub.s32 1, %v1418
        %v1420 = vrot.slane %v1411, %v1419
        %v1421 = vlaneseq
        %v1422 = vshrl.u32 %v1421, 7
        %v1423 = vsub.s32 2, %v1422
        %v1424 = vrot.slane %v1411, %v1423
        %1428 = vmatprep.subr.mxu0 %v1409
        %1429 = vmatpush1.msra.mxu0 %v1408
        %1430 = vmatprep.subr.mxu0 %v1406
        %1431 = vmatpush1.msra.mxu0 %v1405
        %1432 = vmatprep.subr.mxu0 %v1403
        %1433 = vmatpush1.msra.mxu0 %v1402
        %1434 = vmatprep.subr.mxu0 %v1400
        %1435 = vmatpush1.msra.mxu0 %v1399
        %1436 = vmatprep.subr.mxu0 %v1397
        %1437 = vmatpush1.msra.mxu0 %v1396
        %1438 = vmatprep.subr.mxu0 %v1394
        %1439 = vmatpush1.msra.mxu0 %v1393
        %1440 = vmatprep.subr.mxu0 %v1391
        %1441 = vmatpush1.msra.mxu0 %v1390
        %1442 = vmatprep.subr.mxu0 %v1388
        %1443 = vmatpush1.msra.mxu0 %v1387
        %1444 = vmatprep.subr.mxu0 %v1385
        %1445 = vmatpush1.msra.mxu0 %v1384
        %1446 = vmatprep.subr.mxu0 %v1382
        %1447 = vmatpush1.msra.mxu0 %v1381
        %1448 = vmatprep.subr.mxu0 %v1379
        %1449 = vmatpush1.msra.mxu0 %v1378
        %1450 = vmatprep.subr.mxu0 %v1376
        %1451 = vmatpush1.msra.mxu0 %v1375
        %1452 = vmatprep.subr.mxu0 %v1373
        %1453 = vmatpush1.msra.mxu0 %v1372
        %1454 = vmatprep.subr.mxu0 %v1370
        %1455 = vmatpush1.msra.mxu0 %v1369
        %1456 = vmatprep.subr.mxu0 %v1367
        %1457 = vmatpush1.msra.mxu0 %v1366
        %1458 = vmatprep.subr.mxu0 %v1364
        %1459 = vmatpush1.msra.mxu0 %v1363
        %1460 = vmatprep.subr.mxu0 0.0
        %1461 = vmatpush2.msra.mxu0 0.0
        %1462 = vmatprep.subr.mxu0 0.0
        %1463 = vmatpush2.msra.mxu0 0.0
        %1464 = vmatprep.subr.mxu0 0.0
        %1465 = vmatpush2.msra.mxu0 0.0
        %1466 = vmatprep.subr.mxu0 0.0
        %1467 = vmatpush2.msra.mxu0 0.0
        %1468 = vmatprep.subr.mxu0 0.0
        %1469 = vmatpush2.msra.mxu0 0.0
        %1470 = vmatprep.subr.mxu0 0.0
        %1471 = vmatpush2.msra.mxu0 0.0
        %1472 = vmatprep.subr.mxu0 0.0
        %1473 = vmatpush2.msra.mxu0 0.0
        %1474 = vmatprep.subr.mxu0 0.0
        %1475 = vmatpush2.msra.mxu0 0.0
        %1476 = vmatprep.subr.mxu0 0.0
        %1477 = vmatpush2.msra.mxu0 0.0
        %1478 = vmatprep.subr.mxu0 0.0
        %1479 = vmatpush2.msra.mxu0 0.0
        %1480 = vmatprep.subr.mxu0 0.0
        %1481 = vmatpush2.msra.mxu0 0.0
        %1482 = vmatprep.subr.mxu0 0.0
        %1483 = vmatpush2.msra.mxu0 0.0
        %1484 = vmatprep.subr.mxu0 0.0
        %1485 = vmatpush2.msra.mxu0 0.0
        %1486 = vmatprep.subr.mxu0 0.0
        %1487 = vmatpush2.msra.mxu0 0.0
        %1488 = vmatprep.subr.mxu0 0.0
        %1489 = vmatpush2.msra.mxu0 0.0
        %1490 = vmatprep.subr.mxu0 0.0
        %1491 = vmatpush2.msra.mxu0 0.0
        %1492 = vmatprep.mubr.f32.mxu0 0.0
        %1493 = vmatmul.mubr.f32.gmra.mxu0 %v872
        %v1494 = vpop.f32.mrf.mxu0
        %v1495 = vadd.f32 %v1416, %v1494
        %v1496 = vpop.f32.mrf.mxu0
        %v1497 = vadd.f32 %v1420, %v1496
        %1498 = vmatprep.mubr.f32.mxu0 0.0
        %1499 = vmatmul.mubr.f32.gmra.mxu0 %v1035
        %v1500 = vpop.f32.mrf.mxu0
        %v1501 = vadd.f32 %v1416, %v1500
        %v1502 = vpop.f32.mrf.mxu0
        %v1503 = vadd.f32 %v1420, %v1502
        %1504 = vmatprep.mubr.f32.mxu0 0.0
        %1505 = vmatmul.mubr.f32.gmra.mxu0 %v1198
        %v1506 = vpop.f32.mrf.mxu0
        %v1507 = vadd.f32 %v1416, %v1506
        %v1508 = vpop.f32.mrf.mxu0
        %v1509 = vadd.f32 %v1420, %v1508
        %1510 = vmatprep.mubr.f32.mxu0 0.0
        %1511 = vmatmul.mubr.f32.gmra.mxu0 %v1361
        %v1512 = vpop.f32.mrf.mxu0
        %v1513 = vadd.f32 %v1416, %v1512
        %v1514 = vpop.f32.mrf.mxu0
        %v1515 = vadd.f32 %v1420, %v1514
        %1516 = vdwg.mxu0
        %1517 = vmatprep.subr.mxu0 0.0
        %1518 = vmatpush1.msra.mxu0 %v1410
        %1519 = vmatprep.subr.mxu0 0.0
        %1520 = vmatpush1.msra.mxu0 %v1407
        %1521 = vmatprep.subr.mxu0 0.0
        %1522 = vmatpush1.msra.mxu0 %v1404
        %1523 = vmatprep.subr.mxu0 0.0
        %1524 = vmatpush1.msra.mxu0 %v1401
        %1525 = vmatprep.subr.mxu0 0.0
        %1526 = vmatpush1.msra.mxu0 %v1398
        %1527 = vmatprep.subr.mxu0 0.0
        %1528 = vmatpush1.msra.mxu0 %v1395
        %1529 = vmatprep.subr.mxu0 0.0
        %1530 = vmatpush1.msra.mxu0 %v1392
        %1531 = vmatprep.subr.mxu0 0.0
        %1532 = vmatpush1.msra.mxu0 %v1389
        %1533 = vmatprep.subr.mxu0 0.0
        %1534 = vmatpush1.msra.mxu0 %v1386
        %1535 = vmatprep.subr.mxu0 0.0
        %1536 = vmatpush1.msra.mxu0 %v1383
        %1537 = vmatprep.subr.mxu0 0.0
        %1538 = vmatpush1.msra.mxu0 %v1380
        %1539 = vmatprep.subr.mxu0 0.0
        %1540 = vmatpush1.msra.mxu0 %v1377
        %1541 = vmatprep.subr.mxu0 0.0
        %1542 = vmatpush1.msra.mxu0 %v1374
        %1543 = vmatprep.subr.mxu0 0.0
        %1544 = vmatpush1.msra.mxu0 %v1371
        %1545 = vmatprep.subr.mxu0 0.0
        %1546 = vmatpush1.msra.mxu0 %v1368
        %1547 = vmatprep.subr.mxu0 0.0
        %1548 = vmatpush1.msra.mxu0 %v1365
        %1549 = vmatprep.subr.mxu0 0.0
        %1550 = vmatpush2.msra.mxu0 0.0
        %1551 = vmatprep.subr.mxu0 0.0
        %1552 = vmatpush2.msra.mxu0 0.0
        %1553 = vmatprep.subr.mxu0 0.0
        %1554 = vmatpush2.msra.mxu0 0.0
        %1555 = vmatprep.subr.mxu0 0.0
        %1556 = vmatpush2.msra.mxu0 0.0
        %1557 = vmatprep.subr.mxu0 0.0
        %1558 = vmatpush2.msra.mxu0 0.0
        %1559 = vmatprep.subr.mxu0 0.0
        %1560 = vmatpush2.msra.mxu0 0.0
        %1561 = vmatprep.subr.mxu0 0.0
        %1562 = vmatpush2.msra.mxu0 0.0
        %1563 = vmatprep.subr.mxu0 0.0
        %1564 = vmatpush2.msra.mxu0 0.0
        %1565 = vmatprep.subr.mxu0 0.0
        %1566 = vmatpush2.msra.mxu0 0.0
        %1567 = vmatprep.subr.mxu0 0.0
        %1568 = vmatpush2.msra.mxu0 0.0
        %1569 = vmatprep.subr.mxu0 0.0
        %1570 = vmatpush2.msra.mxu0 0.0
        %1571 = vmatprep.subr.mxu0 0.0
        %1572 = vmatpush2.msra.mxu0 0.0
        %1573 = vmatprep.subr.mxu0 0.0
        %1574 = vmatpush2.msra.mxu0 0.0
        %1575 = vmatprep.subr.mxu0 0.0
        %1576 = vmatpush2.msra.mxu0 0.0
        %1577 = vmatprep.subr.mxu0 0.0
        %1578 = vmatpush2.msra.mxu0 0.0
        %1579 = vmatprep.subr.mxu0 0.0
        %1580 = vmatpush2.msra.mxu0 0.0
        %1581 = vmatprep.mubr.f32.mxu0 0.0
        %1582 = vmatmul.mubr.f32.gmra.mxu0 %v872
        %v1583 = vpop.f32.mrf.mxu0
        %v1584 = vadd.f32 %v1424, %v1583
        %v1585 = vpop.f32.mrf.mxu0
        %1586 = vmatprep.mubr.f32.mxu0 0.0
        %1587 = vmatmul.mubr.f32.gmra.mxu0 %v1035
        %v1588 = vpop.f32.mrf.mxu0
        %v1589 = vadd.f32 %v1424, %v1588
        %v1590 = vpop.f32.mrf.mxu0
        %1591 = vmatprep.mubr.f32.mxu0 0.0
        %1592 = vmatmul.mubr.f32.gmra.mxu0 %v1198
        %v1593 = vpop.f32.mrf.mxu0
        %v1594 = vadd.f32 %v1424, %v1593
        %v1595 = vpop.f32.mrf.mxu0
        %1596 = vmatprep.mubr.f32.mxu0 0.0
        %1597 = vmatmul.mubr.f32.gmra.mxu0 %v1361
        %v1598 = vpop.f32.mrf.mxu0
        %v1599 = vadd.f32 %v1424, %v1598
        %v1600 = vpop.f32.mrf.mxu0
        %1601 = vdwg.mxu0
        %v1602 = vld [vmem:[#allocation7] sm:$0xff]
        %v1603 = vld [vmem:[#allocation7 + $0x8] sm:$0xff]
        %v1604 = vld [vmem:[#allocation7 + $0x10] sm:$0xff]
        %v1605 = vld [vmem:[#allocation7 + $0x18] sm:$0xff]
        %v1606 = vld [vmem:[#allocation7 + $0x20] sm:$0xff]
        %v1607 = vld [vmem:[#allocation7 + $0x28] sm:$0xff]
        %v1608 = vld [vmem:[#allocation7 + $0x30] sm:$0xff]
        %v1609 = vld [vmem:[#allocation7 + $0x38] sm:$0xff]
        %v1610 = vld [vmem:[#allocation7 + $0x40] sm:$0xff]
        %v1611 = vld [vmem:[#allocation7 + $0x48] sm:$0xff]
        %v1612 = vld [vmem:[#allocation7 + $0x50] sm:$0xff]
        %v1613 = vld [vmem:[#allocation7 + $0x58] sm:$0xff]
        %v1614 = vld [vmem:[#allocation7 + $0x60] sm:$0xff]
        %v1615 = vld [vmem:[#allocation7 + $0x68] sm:$0xff]
        %v1616 = vld [vmem:[#allocation7 + $0x70] sm:$0xff]
        %v1617 = vld [vmem:[#allocation7 + $0x78] sm:$0xff]
        %v1618 = vld [vmem:[#allocation7 + $0x80] sm:$0xff]
        %v1619 = vld [vmem:[#allocation7 + $0x88] sm:$0xff]
        %v1620 = vld [vmem:[#allocation7 + $0x90] sm:$0xff]
        %v1621 = vld [vmem:[#allocation7 + $0x98] sm:$0xff]
        %v1622 = vld [vmem:[#allocation7 + $0xa0] sm:$0xff]
        %v1623 = vld [vmem:[#allocation7 + $0xa8] sm:$0xff]
        %v1624 = vld [vmem:[#allocation7 + $0xb0] sm:$0xff]
        %v1625 = vld [vmem:[#allocation7 + $0xb8] sm:$0xff]
        %v1626 = vld [vmem:[#allocation7 + $0xc0] sm:$0xff]
        %v1627 = vld [vmem:[#allocation7 + $0xc8] sm:$0xff]
        %v1628 = vld [vmem:[#allocation7 + $0xd0] sm:$0xff]
        %v1629 = vld [vmem:[#allocation7 + $0xd8] sm:$0xff]
        %v1630 = vld [vmem:[#allocation7 + $0xe0] sm:$0xff]
        %v1631 = vld [vmem:[#allocation7 + $0xe8] sm:$0xff]
        %v1632 = vld [vmem:[#allocation7 + $0xf0] sm:$0xff]
        %v1633 = vld [vmem:[#allocation7 + $0xf8] sm:$0xff]
        %v1634 = vld [vmem:[#allocation7 + $0x100] sm:$0xff]
        %v1635 = vld [vmem:[#allocation7 + $0x108] sm:$0xff]
        %v1636 = vld [vmem:[#allocation7 + $0x110] sm:$0xff]
        %v1637 = vld [vmem:[#allocation7 + $0x118] sm:$0xff]
        %v1638 = vld [vmem:[#allocation7 + $0x120] sm:$0xff]
        %v1639 = vld [vmem:[#allocation7 + $0x128] sm:$0xff]
        %v1640 = vld [vmem:[#allocation7 + $0x130] sm:$0xff]
        %v1641 = vld [vmem:[#allocation7 + $0x138] sm:$0xff]
        %v1642 = vld [vmem:[#allocation7 + $0x140] sm:$0xff]
        %v1643 = vld [vmem:[#allocation7 + $0x148] sm:$0xff]
        %v1644 = vld [vmem:[#allocation7 + $0x150] sm:$0xff]
        %v1645 = vld [vmem:[#allocation7 + $0x158] sm:$0xff]
        %v1646 = vld [vmem:[#allocation7 + $0x160] sm:$0xff]
        %v1647 = vld [vmem:[#allocation7 + $0x168] sm:$0xff]
        %v1648 = vld [vmem:[#allocation7 + $0x170] sm:$0xff]
        %v1649 = vld [vmem:[#allocation7 + $0x178] sm:$0xff]
        %v1650 = vld [vmem:[%s8] sm:$0x1]
        %s1651 = scalar_lea.vmem [#allocation2], 8
        %v1652 = vld [vmem:[%s1651] sm:$0xff]
        %1653 = vmatprep.subr.mxu0 %v1648
        %1654 = vmatpush1.msra.mxu0 %v1647
        %1655 = vmatprep.subr.mxu0 %v1645
        %1656 = vmatpush1.msra.mxu0 %v1644
        %1657 = vmatprep.subr.mxu0 %v1642
        %1658 = vmatpush1.msra.mxu0 %v1641
        %1659 = vmatprep.subr.mxu0 %v1639
        %1660 = vmatpush1.msra.mxu0 %v1638
        %1661 = vmatprep.subr.mxu0 %v1636
        %1662 = vmatpush1.msra.mxu0 %v1635
        %1663 = vmatprep.subr.mxu0 %v1633
        %1664 = vmatpush1.msra.mxu0 %v1632
        %1665 = vmatprep.subr.mxu0 %v1630
        %1666 = vmatpush1.msra.mxu0 %v1629
        %1667 = vmatprep.subr.mxu0 %v1627
        %1668 = vmatpush1.msra.mxu0 %v1626
        %1669 = vmatprep.subr.mxu0 %v1624
        %1670 = vmatpush1.msra.mxu0 %v1623
        %1671 = vmatprep.subr.mxu0 %v1621
        %1672 = vmatpush1.msra.mxu0 %v1620
        %1673 = vmatprep.subr.mxu0 %v1618
        %1674 = vmatpush1.msra.mxu0 %v1617
        %1675 = vmatprep.subr.mxu0 %v1615
        %1676 = vmatpush1.msra.mxu0 %v1614
        %1677 = vmatprep.subr.mxu0 %v1612
        %1678 = vmatpush1.msra.mxu0 %v1611
        %1679 = vmatprep.subr.mxu0 %v1609
        %1680 = vmatpush1.msra.mxu0 %v1608
        %1681 = vmatprep.subr.mxu0 %v1606
        %1682 = vmatpush1.msra.mxu0 %v1605
        %1683 = vmatprep.subr.mxu0 %v1603
        %1684 = vmatpush1.msra.mxu0 %v1602
        %1685 = vmatprep.subr.mxu0 0.0
        %1686 = vmatpush2.msra.mxu0 0.0
        %1687 = vmatprep.subr.mxu0 0.0
        %1688 = vmatpush2.msra.mxu0 0.0
        %1689 = vmatprep.subr.mxu0 0.0
        %1690 = vmatpush2.msra.mxu0 0.0
        %1691 = vmatprep.subr.mxu0 0.0
        %1692 = vmatpush2.msra.mxu0 0.0
        %1693 = vmatprep.subr.mxu0 0.0
        %1694 = vmatpush2.msra.mxu0 0.0
        %1695 = vmatprep.subr.mxu0 0.0
        %1696 = vmatpush2.msra.mxu0 0.0
        %1697 = vmatprep.subr.mxu0 0.0
        %1698 = vmatpush2.msra.mxu0 0.0
        %1699 = vmatprep.subr.mxu0 0.0
        %1700 = vmatpush2.msra.mxu0 0.0
        %1701 = vmatprep.subr.mxu0 0.0
        %1702 = vmatpush2.msra.mxu0 0.0
        %1703 = vmatprep.subr.mxu0 0.0
        %1704 = vmatpush2.msra.mxu0 0.0
        %1705 = vmatprep.subr.mxu0 0.0
        %1706 = vmatpush2.msra.mxu0 0.0
        %1707 = vmatprep.subr.mxu0 0.0
        %1708 = vmatpush2.msra.mxu0 0.0
        %1709 = vmatprep.subr.mxu0 0.0
        %1710 = vmatpush2.msra.mxu0 0.0
        %1711 = vmatprep.subr.mxu0 0.0
        %1712 = vmatpush2.msra.mxu0 0.0
        %1713 = vmatprep.subr.mxu0 0.0
        %1714 = vmatpush2.msra.mxu0 0.0
        %1715 = vmatprep.subr.mxu0 0.0
        %1716 = vmatpush2.msra.mxu0 0.0
        %1717 = vmatprep.mubr.f32.mxu0 0.0
        %1718 = vmatmul.mubr.f32.gmra.mxu0 %v1652
        %v1719 = vpop.f32.mrf.mxu0
        %v1720 = vadd.f32 0.0, %v1719
        %v1721 = vpop.f32.mrf.mxu0
        %v1722 = vadd.f32 0.0, %v1721
        %1723 = vdwg.mxu0
        %1724 = vmatprep.subr.mxu0 0.0
        %1725 = vmatpush1.msra.mxu0 %v1649
        %1726 = vmatprep.subr.mxu0 0.0
        %1727 = vmatpush1.msra.mxu0 %v1646
        %1728 = vmatprep.subr.mxu0 0.0
        %1729 = vmatpush1.msra.mxu0 %v1643
        %1730 = vmatprep.subr.mxu0 0.0
        %1731 = vmatpush1.msra.mxu0 %v1640
        %1732 = vmatprep.subr.mxu0 0.0
        %1733 = vmatpush1.msra.mxu0 %v1637
        %1734 = vmatprep.subr.mxu0 0.0
        %1735 = vmatpush1.msra.mxu0 %v1634
        %1736 = vmatprep.subr.mxu0 0.0
        %1737 = vmatpush1.msra.mxu0 %v1631
        %1738 = vmatprep.subr.mxu0 0.0
        %1739 = vmatpush1.msra.mxu0 %v1628
        %1740 = vmatprep.subr.mxu0 0.0
        %1741 = vmatpush1.msra.mxu0 %v1625
        %1742 = vmatprep.subr.mxu0 0.0
        %1743 = vmatpush1.msra.mxu0 %v1622
        %1744 = vmatprep.subr.mxu0 0.0
        %1745 = vmatpush1.msra.mxu0 %v1619
        %1746 = vmatprep.subr.mxu0 0.0
        %1747 = vmatpush1.msra.mxu0 %v1616
        %1748 = vmatprep.subr.mxu0 0.0
        %1749 = vmatpush1.msra.mxu0 %v1613
        %1750 = vmatprep.subr.mxu0 0.0
        %1751 = vmatpush1.msra.mxu0 %v1610
        %1752 = vmatprep.subr.mxu0 0.0
        %1753 = vmatpush1.msra.mxu0 %v1607
        %1754 = vmatprep.subr.mxu0 0.0
        %1755 = vmatpush1.msra.mxu0 %v1604
        %1756 = vmatprep.subr.mxu0 0.0
        %1757 = vmatpush2.msra.mxu0 0.0
        %1758 = vmatprep.subr.mxu0 0.0
        %1759 = vmatpush2.msra.mxu0 0.0
        %1760 = vmatprep.subr.mxu0 0.0
        %1761 = vmatpush2.msra.mxu0 0.0
        %1762 = vmatprep.subr.mxu0 0.0
        %1763 = vmatpush2.msra.mxu0 0.0
        %1764 = vmatprep.subr.mxu0 0.0
        %1765 = vmatpush2.msra.mxu0 0.0
        %1766 = vmatprep.subr.mxu0 0.0
        %1767 = vmatpush2.msra.mxu0 0.0
        %1768 = vmatprep.subr.mxu0 0.0
        %1769 = vmatpush2.msra.mxu0 0.0
        %1770 = vmatprep.subr.mxu0 0.0
        %1771 = vmatpush2.msra.mxu0 0.0
        %1772 = vmatprep.subr.mxu0 0.0
        %1773 = vmatpush2.msra.mxu0 0.0
        %1774 = vmatprep.subr.mxu0 0.0
        %1775 = vmatpush2.msra.mxu0 0.0
        %1776 = vmatprep.subr.mxu0 0.0
        %1777 = vmatpush2.msra.mxu0 0.0
        %1778 = vmatprep.subr.mxu0 0.0
        %1779 = vmatpush2.msra.mxu0 0.0
        %1780 = vmatprep.subr.mxu0 0.0
        %1781 = vmatpush2.msra.mxu0 0.0
        %1782 = vmatprep.subr.mxu0 0.0
        %1783 = vmatpush2.msra.mxu0 0.0
        %1784 = vmatprep.subr.mxu0 0.0
        %1785 = vmatpush2.msra.mxu0 0.0
        %1786 = vmatprep.subr.mxu0 0.0
        %1787 = vmatpush2.msra.mxu0 0.0
        %1788 = vmatprep.mubr.f32.mxu0 0.0
        %1789 = vmatmul.mubr.f32.gmra.mxu0 %v1652
        %v1790 = vpop.f32.mrf.mxu0
        %v1791 = vadd.f32 0.0, %v1790
        %v1792 = vpop.f32.mrf.mxu0
        %1793 = vdwg.mxu0
        %v1794 = vadd.f32 %v1495, %v1720
        %v1795 = vxor.u32 %v1794, 2147483648
        %v1796 = vmul.f32 %v1795, 1.442695
        %v1797 = vpow.pop %v1796
        %v1798 = vadd.f32 %v1797, 1.0
        %v1799 = vrcp.pop %v1798
        %v1800 = vmul.f32 1.0, %v1799
        %v1801 = vadd.f32 %v1497, %v1722
        %v1802 = vxor.u32 %v1801, 2147483648
        %v1803 = vmul.f32 %v1802, 1.442695
        %v1804 = vpow.pop %v1803
        %v1805 = vadd.f32 %v1804, 1.0
        %v1806 = vrcp.pop %v1805
        %v1807 = vmul.f32 1.0, %v1806
        %v1809 = vlaneseq
        %v1810 = vshrl.u32 %v1809, 7
        %v1811 = vsub.s32 0, %v1810
        %v1812 = vrot.slane %v1650, %v1811
        %v1814 = vadd.f32 %v1791, %v1812
        %v1815 = vmul.f32 %v1800, %v1814
        %v1816 = vadd.f32 %v1584, %v1815
        %v1817 = vtanh.pop %v1816
        %v1818 = vsub.f32 1.0, %v1807
        %v1819 = vmul.f32 %v1818, %v1817
        %v1820 = vmul.f32 %v1807, %v1652
        %v1821 = vadd.f32 %v1819, %v1820
        %1822 = vmatprep.subr.mxu0 %v1648
        %1823 = vmatpush1.msra.mxu0 %v1647
        %1824 = vmatprep.subr.mxu0 %v1645
        %1825 = vmatpush1.msra.mxu0 %v1644
        %1826 = vmatprep.subr.mxu0 %v1642
        %1827 = vmatpush1.msra.mxu0 %v1641
        %1828 = vmatprep.subr.mxu0 %v1639
        %1829 = vmatpush1.msra.mxu0 %v1638
        %1830 = vmatprep.subr.mxu0 %v1636
        %1831 = vmatpush1.msra.mxu0 %v1635
        %1832 = vmatprep.subr.mxu0 %v1633
        %1833 = vmatpush1.msra.mxu0 %v1632
        %1834 = vmatprep.subr.mxu0 %v1630
        %1835 = vmatpush1.msra.mxu0 %v1629
        %1836 = vmatprep.subr.mxu0 %v1627
        %1837 = vmatpush1.msra.mxu0 %v1626
        %1838 = vmatprep.subr.mxu0 %v1624
        %1839 = vmatpush1.msra.mxu0 %v1623
        %1840 = vmatprep.subr.mxu0 %v1621
        %1841 = vmatpush1.msra.mxu0 %v1620
        %1842 = vmatprep.subr.mxu0 %v1618
        %1843 = vmatpush1.msra.mxu0 %v1617
        %1844 = vmatprep.subr.mxu0 %v1615
        %1845 = vmatpush1.msra.mxu0 %v1614
        %1846 = vmatprep.subr.mxu0 %v1612
        %1847 = vmatpush1.msra.mxu0 %v1611
        %1848 = vmatprep.subr.mxu0 %v1609
        %1849 = vmatpush1.msra.mxu0 %v1608
        %1850 = vmatprep.subr.mxu0 %v1606
        %1851 = vmatpush1.msra.mxu0 %v1605
        %1852 = vmatprep.subr.mxu0 %v1603
        %1853 = vmatpush1.msra.mxu0 %v1602
        %1854 = vmatprep.subr.mxu0 0.0
        %1855 = vmatpush2.msra.mxu0 0.0
        %1856 = vmatprep.subr.mxu0 0.0
        %1857 = vmatpush2.msra.mxu0 0.0
        %1858 = vmatprep.subr.mxu0 0.0
        %1859 = vmatpush2.msra.mxu0 0.0
        %1860 = vmatprep.subr.mxu0 0.0
        %1861 = vmatpush2.msra.mxu0 0.0
        %1862 = vmatprep.subr.mxu0 0.0
        %1863 = vmatpush2.msra.mxu0 0.0
        %1864 = vmatprep.subr.mxu0 0.0
        %1865 = vmatpush2.msra.mxu0 0.0
        %1866 = vmatprep.subr.mxu0 0.0
        %1867 = vmatpush2.msra.mxu0 0.0
        %1868 = vmatprep.subr.mxu0 0.0
        %1869 = vmatpush2.msra.mxu0 0.0
        %1870 = vmatprep.subr.mxu0 0.0
        %1871 = vmatpush2.msra.mxu0 0.0
        %1872 = vmatprep.subr.mxu0 0.0
        %1873 = vmatpush2.msra.mxu0 0.0
        %1874 = vmatprep.subr.mxu0 0.0
        %1875 = vmatpush2.msra.mxu0 0.0
        %1876 = vmatprep.subr.mxu0 0.0
        %1877 = vmatpush2.msra.mxu0 0.0
        %1878 = vmatprep.subr.mxu0 0.0
        %1879 = vmatpush2.msra.mxu0 0.0
        %1880 = vmatprep.subr.mxu0 0.0
        %1881 = vmatpush2.msra.mxu0 0.0
        %1882 = vmatprep.subr.mxu0 0.0
        %1883 = vmatpush2.msra.mxu0 0.0
        %1884 = vmatprep.subr.mxu0 0.0
        %1885 = vmatpush2.msra.mxu0 0.0
        %1886 = vmatprep.mubr.f32.mxu0 0.0
        %1887 = vmatmul.mubr.f32.gmra.mxu0 %v1821
        %v1888 = vpop.f32.mrf.mxu0
        %v1889 = vadd.f32 0.0, %v1888
        %v1890 = vpop.f32.mrf.mxu0
        %v1891 = vadd.f32 0.0, %v1890
        %1892 = vdwg.mxu0
        %1893 = vmatprep.subr.mxu0 0.0
        %1894 = vmatpush1.msra.mxu0 %v1649
        %1895 = vmatprep.subr.mxu0 0.0
        %1896 = vmatpush1.msra.mxu0 %v1646
        %1897 = vmatprep.subr.mxu0 0.0
        %1898 = vmatpush1.msra.mxu0 %v1643
        %1899 = vmatprep.subr.mxu0 0.0
        %1900 = vmatpush1.msra.mxu0 %v1640
        %1901 = vmatprep.subr.mxu0 0.0
        %1902 = vmatpush1.msra.mxu0 %v1637
        %1903 = vmatprep.subr.mxu0 0.0
        %1904 = vmatpush1.msra.mxu0 %v1634
        %1905 = vmatprep.subr.mxu0 0.0
        %1906 = vmatpush1.msra.mxu0 %v1631
        %1907 = vmatprep.subr.mxu0 0.0
        %1908 = vmatpush1.msra.mxu0 %v1628
        %1909 = vmatprep.subr.mxu0 0.0
        %1910 = vmatpush1.msra.mxu0 %v1625
        %1911 = vmatprep.subr.mxu0 0.0
        %1912 = vmatpush1.msra.mxu0 %v1622
        %1913 = vmatprep.subr.mxu0 0.0
        %1914 = vmatpush1.msra.mxu0 %v1619
        %1915 = vmatprep.subr.mxu0 0.0
        %1916 = vmatpush1.msra.mxu0 %v1616
        %1917 = vmatprep.subr.mxu0 0.0
        %1918 = vmatpush1.msra.mxu0 %v1613
        %1919 = vmatprep.subr.mxu0 0.0
        %1920 = vmatpush1.msra.mxu0 %v1610
        %1921 = vmatprep.subr.mxu0 0.0
        %1922 = vmatpush1.msra.mxu0 %v1607
        %1923 = vmatprep.subr.mxu0 0.0
        %1924 = vmatpush1.msra.mxu0 %v1604
        %1925 = vmatprep.subr.mxu0 0.0
        %1926 = vmatpush2.msra.mxu0 0.0
        %1927 = vmatprep.subr.mxu0 0.0
        %1928 = vmatpush2.msra.mxu0 0.0
        %1929 = vmatprep.subr.mxu0 0.0
        %1930 = vmatpush2.msra.mxu0 0.0
        %1931 = vmatprep.subr.mxu0 0.0
        %1932 = vmatpush2.msra.mxu0 0.0
        %1933 = vmatprep.subr.mxu0 0.0
        %1934 = vmatpush2.msra.mxu0 0.0
        %1935 = vmatprep.subr.mxu0 0.0
        %1936 = vmatpush2.msra.mxu0 0.0
        %1937 = vmatprep.subr.mxu0 0.0
        %1938 = vmatpush2.msra.mxu0 0.0
        %1939 = vmatprep.subr.mxu0 0.0
        %1940 = vmatpush2.msra.mxu0 0.0
        %1941 = vmatprep.subr.mxu0 0.0
        %1942 = vmatpush2.msra.mxu0 0.0
        %1943 = vmatprep.subr.mxu0 0.0
        %1944 = vmatpush2.msra.mxu0 0.0
        %1945 = vmatprep.subr.mxu0 0.0
        %1946 = vmatpush2.msra.mxu0 0.0
        %1947 = vmatprep.subr.mxu0 0.0
        %1948 = vmatpush2.msra.mxu0 0.0
        %1949 = vmatprep.subr.mxu0 0.0
        %1950 = vmatpush2.msra.mxu0 0.0
        %1951 = vmatprep.subr.mxu0 0.0
        %1952 = vmatpush2.msra.mxu0 0.0
        %1953 = vmatprep.subr.mxu0 0.0
        %1954 = vmatpush2.msra.mxu0 0.0
        %1955 = vmatprep.subr.mxu0 0.0
        %1956 = vmatpush2.msra.mxu0 0.0
        %1957 = vmatprep.mubr.f32.mxu0 0.0
        %1958 = vmatmul.mubr.f32.gmra.mxu0 %v1821
        %v1959 = vpop.f32.mrf.mxu0
        %v1960 = vadd.f32 0.0, %v1959
        %v1961 = vpop.f32.mrf.mxu0
        %1962 = vdwg.mxu0
        %v1963 = vadd.f32 %v1501, %v1889
        %v1964 = vxor.u32 %v1963, 2147483648
        %v1965 = vmul.f32 %v1964, 1.442695
        %v1966 = vpow.pop %v1965
        %v1967 = vadd.f32 %v1966, 1.0
        %v1968 = vrcp.pop %v1967
        %v1969 = vmul.f32 1.0, %v1968
        %v1970 = vadd.f32 %v1503, %v1891
        %v1971 = vxor.u32 %v1970, 2147483648
        %v1972 = vmul.f32 %v1971, 1.442695
        %v1973 = vpow.pop %v1972
        %v1974 = vadd.f32 %v1973, 1.0
        %v1975 = vrcp.pop %v1974
        %v1976 = vmul.f32 1.0, %v1975
        %v1977 = vadd.f32 %v1960, %v1812
        %v1978 = vmul.f32 %v1969, %v1977
        %v1979 = vadd.f32 %v1589, %v1978
        %v1980 = vtanh.pop %v1979
        %v1981 = vsub.f32 1.0, %v1976
        %v1982 = vmul.f32 %v1981, %v1980
        %v1983 = vmul.f32 %v1976, %v1821
        %v1984 = vadd.f32 %v1982, %v1983
        %1985 = vmatprep.subr.mxu0 %v1648
        %1986 = vmatpush1.msra.mxu0 %v1647
        %1987 = vmatprep.subr.mxu0 %v1645
        %1988 = vmatpush1.msra.mxu0 %v1644
        %1989 = vmatprep.subr.mxu0 %v1642
        %1990 = vmatpush1.msra.mxu0 %v1641
        %1991 = vmatprep.subr.mxu0 %v1639
        %1992 = vmatpush1.msra.mxu0 %v1638
        %1993 = vmatprep.subr.mxu0 %v1636
        %1994 = vmatpush1.msra.mxu0 %v1635
        %1995 = vmatprep.subr.mxu0 %v1633
        %1996 = vmatpush1.msra.mxu0 %v1632
        %1997 = vmatprep.subr.mxu0 %v1630
        %1998 = vmatpush1.msra.mxu0 %v1629
        %1999 = vmatprep.subr.mxu0 %v1627
        %2000 = vmatpush1.msra.mxu0 %v1626
        %2001 = vmatprep.subr.mxu0 %v1624
        %2002 = vmatpush1.msra.mxu0 %v1623
        %2003 = vmatprep.subr.mxu0 %v1621
        %2004 = vmatpush1.msra.mxu0 %v1620
        %2005 = vmatprep.subr.mxu0 %v1618
        %2006 = vmatpush1.msra.mxu0 %v1617
        %2007 = vmatprep.subr.mxu0 %v1615
        %2008 = vmatpush1.msra.mxu0 %v1614
        %2009 = vmatprep.subr.mxu0 %v1612
        %2010 = vmatpush1.msra.mxu0 %v1611
        %2011 = vmatprep.subr.mxu0 %v1609
        %2012 = vmatpush1.msra.mxu0 %v1608
        %2013 = vmatprep.subr.mxu0 %v1606
        %2014 = vmatpush1.msra.mxu0 %v1605
        %2015 = vmatprep.subr.mxu0 %v1603
        %2016 = vmatpush1.msra.mxu0 %v1602
        %2017 = vmatprep.subr.mxu0 0.0
        %2018 = vmatpush2.msra.mxu0 0.0
        %2019 = vmatprep.subr.mxu0 0.0
        %2020 = vmatpush2.msra.mxu0 0.0
        %2021 = vmatprep.subr.mxu0 0.0
        %2022 = vmatpush2.msra.mxu0 0.0
        %2023 = vmatprep.subr.mxu0 0.0
        %2024 = vmatpush2.msra.mxu0 0.0
        %2025 = vmatprep.subr.mxu0 0.0
        %2026 = vmatpush2.msra.mxu0 0.0
        %2027 = vmatprep.subr.mxu0 0.0
        %2028 = vmatpush2.msra.mxu0 0.0
        %2029 = vmatprep.subr.mxu0 0.0
        %2030 = vmatpush2.msra.mxu0 0.0
        %2031 = vmatprep.subr.mxu0 0.0
        %2032 = vmatpush2.msra.mxu0 0.0
        %2033 = vmatprep.subr.mxu0 0.0
        %2034 = vmatpush2.msra.mxu0 0.0
        %2035 = vmatprep.subr.mxu0 0.0
        %2036 = vmatpush2.msra.mxu0 0.0
        %2037 = vmatprep.subr.mxu0 0.0
        %2038 = vmatpush2.msra.mxu0 0.0
        %2039 = vmatprep.subr.mxu0 0.0
        %2040 = vmatpush2.msra.mxu0 0.0
        %2041 = vmatprep.subr.mxu0 0.0
        %2042 = vmatpush2.msra.mxu0 0.0
        %2043 = vmatprep.subr.mxu0 0.0
        %2044 = vmatpush2.msra.mxu0 0.0
        %2045 = vmatprep.subr.mxu0 0.0
        %2046 = vmatpush2.msra.mxu0 0.0
        %2047 = vmatprep.subr.mxu0 0.0
        %2048 = vmatpush2.msra.mxu0 0.0
        %2049 = vmatprep.mubr.f32.mxu0 0.0
        %2050 = vmatmul.mubr.f32.gmra.mxu0 %v1984
        %v2051 = vpop.f32.mrf.mxu0
        %v2052 = vadd.f32 0.0, %v2051
        %v2053 = vpop.f32.mrf.mxu0
        %v2054 = vadd.f32 0.0, %v2053
        %2055 = vdwg.mxu0
        %2056 = vmatprep.subr.mxu0 0.0
        %2057 = vmatpush1.msra.mxu0 %v1649
        %2058 = vmatprep.subr.mxu0 0.0
        %2059 = vmatpush1.msra.mxu0 %v1646
        %2060 = vmatprep.subr.mxu0 0.0
        %2061 = vmatpush1.msra.mxu0 %v1643
        %2062 = vmatprep.subr.mxu0 0.0
        %2063 = vmatpush1.msra.mxu0 %v1640
        %2064 = vmatprep.subr.mxu0 0.0
        %2065 = vmatpush1.msra.mxu0 %v1637
        %2066 = vmatprep.subr.mxu0 0.0
        %2067 = vmatpush1.msra.mxu0 %v1634
        %2068 = vmatprep.subr.mxu0 0.0
        %2069 = vmatpush1.msra.mxu0 %v1631
        %2070 = vmatprep.subr.mxu0 0.0
        %2071 = vmatpush1.msra.mxu0 %v1628
        %2072 = vmatprep.subr.mxu0 0.0
        %2073 = vmatpush1.msra.mxu0 %v1625
        %2074 = vmatprep.subr.mxu0 0.0
        %2075 = vmatpush1.msra.mxu0 %v1622
        %2076 = vmatprep.subr.mxu0 0.0
        %2077 = vmatpush1.msra.mxu0 %v1619
        %2078 = vmatprep.subr.mxu0 0.0
        %2079 = vmatpush1.msra.mxu0 %v1616
        %2080 = vmatprep.subr.mxu0 0.0
        %2081 = vmatpush1.msra.mxu0 %v1613
        %2082 = vmatprep.subr.mxu0 0.0
        %2083 = vmatpush1.msra.mxu0 %v1610
        %2084 = vmatprep.subr.mxu0 0.0
        %2085 = vmatpush1.msra.mxu0 %v1607
        %2086 = vmatprep.subr.mxu0 0.0
        %2087 = vmatpush1.msra.mxu0 %v1604
        %2088 = vmatprep.subr.mxu0 0.0
        %2089 = vmatpush2.msra.mxu0 0.0
        %2090 = vmatprep.subr.mxu0 0.0
        %2091 = vmatpush2.msra.mxu0 0.0
        %2092 = vmatprep.subr.mxu0 0.0
        %2093 = vmatpush2.msra.mxu0 0.0
        %2094 = vmatprep.subr.mxu0 0.0
        %2095 = vmatpush2.msra.mxu0 0.0
        %2096 = vmatprep.subr.mxu0 0.0
        %2097 = vmatpush2.msra.mxu0 0.0
        %2098 = vmatprep.subr.mxu0 0.0
        %2099 = vmatpush2.msra.mxu0 0.0
        %2100 = vmatprep.subr.mxu0 0.0
        %2101 = vmatpush2.msra.mxu0 0.0
        %2102 = vmatprep.subr.mxu0 0.0
        %2103 = vmatpush2.msra.mxu0 0.0
        %2104 = vmatprep.subr.mxu0 0.0
        %2105 = vmatpush2.msra.mxu0 0.0
        %2106 = vmatprep.subr.mxu0 0.0
        %2107 = vmatpush2.msra.mxu0 0.0
        %2108 = vmatprep.subr.mxu0 0.0
        %2109 = vmatpush2.msra.mxu0 0.0
        %2110 = vmatprep.subr.mxu0 0.0
        %2111 = vmatpush2.msra.mxu0 0.0
        %2112 = vmatprep.subr.mxu0 0.0
        %2113 = vmatpush2.msra.mxu0 0.0
        %2114 = vmatprep.subr.mxu0 0.0
        %2115 = vmatpush2.msra.mxu0 0.0
        %2116 = vmatprep.subr.mxu0 0.0
        %2117 = vmatpush2.msra.mxu0 0.0
        %2118 = vmatprep.subr.mxu0 0.0
        %2119 = vmatpush2.msra.mxu0 0.0
        %2120 = vmatprep.mubr.f32.mxu0 0.0
        %2121 = vmatmul.mubr.f32.gmra.mxu0 %v1984
        %v2122 = vpop.f32.mrf.mxu0
        %v2123 = vadd.f32 0.0, %v2122
        %v2124 = vpop.f32.mrf.mxu0
        %2125 = vdwg.mxu0
        %v2126 = vadd.f32 %v1507, %v2052
        %v2127 = vxor.u32 %v2126, 2147483648
        %v2128 = vmul.f32 %v2127, 1.442695
        %v2129 = vpow.pop %v2128
        %v2130 = vadd.f32 %v2129, 1.0
        %v2131 = vrcp.pop %v2130
        %v2132 = vmul.f32 1.0, %v2131
        %v2133 = vadd.f32 %v1509, %v2054
        %v2134 = vxor.u32 %v2133, 2147483648
        %v2135 = vmul.f32 %v2134, 1.442695
        %v2136 = vpow.pop %v2135
        %v2137 = vadd.f32 %v2136, 1.0
        %v2138 = vrcp.pop %v2137
        %v2139 = vmul.f32 1.0, %v2138
        %v2140 = vadd.f32 %v2123, %v1812
        %v2141 = vmul.f32 %v2132, %v2140
        %v2142 = vadd.f32 %v1594, %v2141
        %v2143 = vtanh.pop %v2142
        %v2144 = vsub.f32 1.0, %v2139
        %v2145 = vmul.f32 %v2144, %v2143
        %v2146 = vmul.f32 %v2139, %v1984
        %v2147 = vadd.f32 %v2145, %v2146
        %2148 = vmatprep.subr.mxu0 %v1648
        %2149 = vmatpush1.msra.mxu0 %v1647
        %2150 = vmatprep.subr.mxu0 %v1645
        %2151 = vmatpush1.msra.mxu0 %v1644
        %2152 = vmatprep.subr.mxu0 %v1642
        %2153 = vmatpush1.msra.mxu0 %v1641
        %2154 = vmatprep.subr.mxu0 %v1639
        %2155 = vmatpush1.msra.mxu0 %v1638
        %2156 = vmatprep.subr.mxu0 %v1636
        %2157 = vmatpush1.msra.mxu0 %v1635
        %2158 = vmatprep.subr.mxu0 %v1633
        %2159 = vmatpush1.msra.mxu0 %v1632
        %2160 = vmatprep.subr.mxu0 %v1630
        %2161 = vmatpush1.msra.mxu0 %v1629
        %2162 = vmatprep.subr.mxu0 %v1627
        %2163 = vmatpush1.msra.mxu0 %v1626
        %2164 = vmatprep.subr.mxu0 %v1624
        %2165 = vmatpush1.msra.mxu0 %v1623
        %2166 = vmatprep.subr.mxu0 %v1621
        %2167 = vmatpush1.msra.mxu0 %v1620
        %2168 = vmatprep.subr.mxu0 %v1618
        %2169 = vmatpush1.msra.mxu0 %v1617
        %2170 = vmatprep.subr.mxu0 %v1615
        %2171 = vmatpush1.msra.mxu0 %v1614
        %2172 = vmatprep.subr.mxu0 %v1612
        %2173 = vmatpush1.msra.mxu0 %v1611
        %2174 = vmatprep.subr.mxu0 %v1609
        %2175 = vmatpush1.msra.mxu0 %v1608
        %2176 = vmatprep.subr.mxu0 %v1606
        %2177 = vmatpush1.msra.mxu0 %v1605
        %2178 = vmatprep.subr.mxu0 %v1603
        %2179 = vmatpush1.msra.mxu0 %v1602
        %2180 = vmatprep.subr.mxu0 0.0
        %2181 = vmatpush2.msra.mxu0 0.0
        %2182 = vmatprep.subr.mxu0 0.0
        %2183 = vmatpush2.msra.mxu0 0.0
        %2184 = vmatprep.subr.mxu0 0.0
        %2185 = vmatpush2.msra.mxu0 0.0
        %2186 = vmatprep.subr.mxu0 0.0
        %2187 = vmatpush2.msra.mxu0 0.0
        %2188 = vmatprep.subr.mxu0 0.0
        %2189 = vmatpush2.msra.mxu0 0.0
        %2190 = vmatprep.subr.mxu0 0.0
        %2191 = vmatpush2.msra.mxu0 0.0
        %2192 = vmatprep.subr.mxu0 0.0
        %2193 = vmatpush2.msra.mxu0 0.0
        %2194 = vmatprep.subr.mxu0 0.0
        %2195 = vmatpush2.msra.mxu0 0.0
        %2196 = vmatprep.subr.mxu0 0.0
        %2197 = vmatpush2.msra.mxu0 0.0
        %2198 = vmatprep.subr.mxu0 0.0
        %2199 = vmatpush2.msra.mxu0 0.0
        %2200 = vmatprep.subr.mxu0 0.0
        %2201 = vmatpush2.msra.mxu0 0.0
        %2202 = vmatprep.subr.mxu0 0.0
        %2203 = vmatpush2.msra.mxu0 0.0
        %2204 = vmatprep.subr.mxu0 0.0
        %2205 = vmatpush2.msra.mxu0 0.0
        %2206 = vmatprep.subr.mxu0 0.0
        %2207 = vmatpush2.msra.mxu0 0.0
        %2208 = vmatprep.subr.mxu0 0.0
        %2209 = vmatpush2.msra.mxu0 0.0
        %2210 = vmatprep.subr.mxu0 0.0
        %2211 = vmatpush2.msra.mxu0 0.0
        %2212 = vmatprep.mubr.f32.mxu0 0.0
        %2213 = vmatmul.mubr.f32.gmra.mxu0 %v2147
        %v2214 = vpop.f32.mrf.mxu0
        %v2215 = vadd.f32 0.0, %v2214
        %v2216 = vpop.f32.mrf.mxu0
        %v2217 = vadd.f32 0.0, %v2216
        %2218 = vdwg.mxu0
        %2219 = vmatprep.subr.mxu0 0.0
        %2220 = vmatpush1.msra.mxu0 %v1649
        %2221 = vmatprep.subr.mxu0 0.0
        %2222 = vmatpush1.msra.mxu0 %v1646
        %2223 = vmatprep.subr.mxu0 0.0
        %2224 = vmatpush1.msra.mxu0 %v1643
        %2225 = vmatprep.subr.mxu0 0.0
        %2226 = vmatpush1.msra.mxu0 %v1640
        %2227 = vmatprep.subr.mxu0 0.0
        %2228 = vmatpush1.msra.mxu0 %v1637
        %2229 = vmatprep.subr.mxu0 0.0
        %2230 = vmatpush1.msra.mxu0 %v1634
        %2231 = vmatprep.subr.mxu0 0.0
        %2232 = vmatpush1.msra.mxu0 %v1631
        %2233 = vmatprep.subr.mxu0 0.0
        %2234 = vmatpush1.msra.mxu0 %v1628
        %2235 = vmatprep.subr.mxu0 0.0
        %2236 = vmatpush1.msra.mxu0 %v1625
        %2237 = vmatprep.subr.mxu0 0.0
        %2238 = vmatpush1.msra.mxu0 %v1622
        %2239 = vmatprep.subr.mxu0 0.0
        %2240 = vmatpush1.msra.mxu0 %v1619
        %2241 = vmatprep.subr.mxu0 0.0
        %2242 = vmatpush1.msra.mxu0 %v1616
        %2243 = vmatprep.subr.mxu0 0.0
        %2244 = vmatpush1.msra.mxu0 %v1613
        %2245 = vmatprep.subr.mxu0 0.0
        %2246 = vmatpush1.msra.mxu0 %v1610
        %2247 = vmatprep.subr.mxu0 0.0
        %2248 = vmatpush1.msra.mxu0 %v1607
        %2249 = vmatprep.subr.mxu0 0.0
        %2250 = vmatpush1.msra.mxu0 %v1604
        %2251 = vmatprep.subr.mxu0 0.0
        %2252 = vmatpush2.msra.mxu0 0.0
        %2253 = vmatprep.subr.mxu0 0.0
        %2254 = vmatpush2.msra.mxu0 0.0
        %2255 = vmatprep.subr.mxu0 0.0
        %2256 = vmatpush2.msra.mxu0 0.0
        %2257 = vmatprep.subr.mxu0 0.0
        %2258 = vmatpush2.msra.mxu0 0.0
        %2259 = vmatprep.subr.mxu0 0.0
        %2260 = vmatpush2.msra.mxu0 0.0
        %2261 = vmatprep.subr.mxu0 0.0
        %2262 = vmatpush2.msra.mxu0 0.0
        %2263 = vmatprep.subr.mxu0 0.0
        %2264 = vmatpush2.msra.mxu0 0.0
        %2265 = vmatprep.subr.mxu0 0.0
        %2266 = vmatpush2.msra.mxu0 0.0
        %2267 = vmatprep.subr.mxu0 0.0
        %2268 = vmatpush2.msra.mxu0 0.0
        %2269 = vmatprep.subr.mxu0 0.0
        %2270 = vmatpush2.msra.mxu0 0.0
        %2271 = vmatprep.subr.mxu0 0.0
        %2272 = vmatpush2.msra.mxu0 0.0
        %2273 = vmatprep.subr.mxu0 0.0
        %2274 = vmatpush2.msra.mxu0 0.0
        %2275 = vmatprep.subr.mxu0 0.0
        %2276 = vmatpush2.msra.mxu0 0.0
        %2277 = vmatprep.subr.mxu0 0.0
        %2278 = vmatpush2.msra.mxu0 0.0
        %2279 = vmatprep.subr.mxu0 0.0
        %2280 = vmatpush2.msra.mxu0 0.0
        %2281 = vmatprep.subr.mxu0 0.0
        %2282 = vmatpush2.msra.mxu0 0.0
        %2283 = vmatprep.mubr.f32.mxu0 0.0
        %2284 = vmatmul.mubr.f32.gmra.mxu0 %v2147
        %v2285 = vpop.f32.mrf.mxu0
        %v2286 = vadd.f32 0.0, %v2285
        %v2287 = vpop.f32.mrf.mxu0
        %2288 = vdwg.mxu0
        %v2289 = vadd.f32 %v1513, %v2215
        %v2290 = vxor.u32 %v2289, 2147483648
        %v2291 = vmul.f32 %v2290, 1.442695
        %v2292 = vpow.pop %v2291
        %v2293 = vadd.f32 %v2292, 1.0
        %v2294 = vrcp.pop %v2293
        %v2295 = vmul.f32 1.0, %v2294
        %v2296 = vadd.f32 %v1515, %v2217
        %v2297 = vxor.u32 %v2296, 2147483648
        %v2298 = vmul.f32 %v2297, 1.442695
        %v2299 = vpow.pop %v2298
        %v2300 = vadd.f32 %v2299, 1.0
        %v2301 = vrcp.pop %v2300
        %v2302 = vmul.f32 1.0, %v2301
        %v2303 = vadd.f32 %v2286, %v1812
        %v2304 = vmul.f32 %v2295, %v2303
        %v2305 = vadd.f32 %v1599, %v2304
        %v2306 = vtanh.pop %v2305
        %v2307 = vsub.f32 1.0, %v2302
        %v2308 = vmul.f32 %v2307, %v2306
        %v2309 = vmul.f32 %v2302, %v2147
        %v2310 = vadd.f32 %v2308, %v2309
        %2311 = vst [vmem:[%s1651] sm:$0xff] %v2310
        %v2312 = vld [vmem:[%s9] sm:$0xff]
        %v2313 = vld [vmem:[%s9 + $0x8] sm:$0xff]
        %v2314 = vld [vmem:[%s9 + $0x10] sm:$0xff]
        %v2315 = vld [vmem:[%s9 + $0x18] sm:$0xff]
        %v2316 = vld [vmem:[%s9 + $0x20] sm:$0xff]
        %v2317 = vld [vmem:[%s9 + $0x28] sm:$0xff]
        %v2318 = vld [vmem:[%s9 + $0x30] sm:$0xff]
        %v2319 = vld [vmem:[%s9 + $0x38] sm:$0xff]
        %v2320 = vld [vmem:[%s9 + $0x40] sm:$0xff]
        %v2321 = vld [vmem:[%s9 + $0x48] sm:$0xff]
        %v2322 = vld [vmem:[%s9 + $0x50] sm:$0xff]
        %v2323 = vld [vmem:[%s9 + $0x58] sm:$0xff]
        %v2324 = vld [vmem:[%s9 + $0x60] sm:$0xff]
        %v2325 = vld [vmem:[%s9 + $0x68] sm:$0xff]
        %v2326 = vld [vmem:[%s9 + $0x70] sm:$0xff]
        %v2327 = vld [vmem:[%s9 + $0x78] sm:$0xff]
        %v2328 = vld [vmem:[%s10] sm:$0x1]
        %v2330 = vlaneseq
        %v2331 = vshrl.u32 %v2330, 7
        %v2332 = vsub.s32 0, %v2331
        %v2333 = vrot.slane %v2328, %v2332
        %2335 = vmatprep.subr.mxu0 0.0
        %2336 = vmatpush1.msra.mxu0 %v2327
        %2337 = vmatprep.subr.mxu0 0.0
        %2338 = vmatpush1.msra.mxu0 %v2326
        %2339 = vmatprep.subr.mxu0 0.0
        %2340 = vmatpush1.msra.mxu0 %v2325
        %2341 = vmatprep.subr.mxu0 0.0
        %2342 = vmatpush1.msra.mxu0 %v2324
        %2343 = vmatprep.subr.mxu0 0.0
        %2344 = vmatpush1.msra.mxu0 %v2323
        %2345 = vmatprep.subr.mxu0 0.0
        %2346 = vmatpush1.msra.mxu0 %v2322
        %2347 = vmatprep.subr.mxu0 0.0
        %2348 = vmatpush1.msra.mxu0 %v2321
        %2349 = vmatprep.subr.mxu0 0.0
        %2350 = vmatpush1.msra.mxu0 %v2320
        %2351 = vmatprep.subr.mxu0 0.0
        %2352 = vmatpush1.msra.mxu0 %v2319
        %2353 = vmatprep.subr.mxu0 0.0
        %2354 = vmatpush1.msra.mxu0 %v2318
        %2355 = vmatprep.subr.mxu0 0.0
        %2356 = vmatpush1.msra.mxu0 %v2317
        %2357 = vmatprep.subr.mxu0 0.0
        %2358 = vmatpush1.msra.mxu0 %v2316
        %2359 = vmatprep.subr.mxu0 0.0
        %2360 = vmatpush1.msra.mxu0 %v2315
        %2361 = vmatprep.subr.mxu0 0.0
        %2362 = vmatpush1.msra.mxu0 %v2314
        %2363 = vmatprep.subr.mxu0 0.0
        %2364 = vmatpush1.msra.mxu0 %v2313
        %2365 = vmatprep.subr.mxu0 0.0
        %2366 = vmatpush1.msra.mxu0 %v2312
        %2367 = vmatprep.subr.mxu0 0.0
        %2368 = vmatpush2.msra.mxu0 0.0
        %2369 = vmatprep.subr.mxu0 0.0
        %2370 = vmatpush2.msra.mxu0 0.0
        %2371 = vmatprep.subr.mxu0 0.0
        %2372 = vmatpush2.msra.mxu0 0.0
        %2373 = vmatprep.subr.mxu0 0.0
        %2374 = vmatpush2.msra.mxu0 0.0
        %2375 = vmatprep.subr.mxu0 0.0
        %2376 = vmatpush2.msra.mxu0 0.0
        %2377 = vmatprep.subr.mxu0 0.0
        %2378 = vmatpush2.msra.mxu0 0.0
        %2379 = vmatprep.subr.mxu0 0.0
        %2380 = vmatpush2.msra.mxu0 0.0
        %2381 = vmatprep.subr.mxu0 0.0
        %2382 = vmatpush2.msra.mxu0 0.0
        %2383 = vmatprep.subr.mxu0 0.0
        %2384 = vmatpush2.msra.mxu0 0.0
        %2385 = vmatprep.subr.mxu0 0.0
        %2386 = vmatpush2.msra.mxu0 0.0
        %2387 = vmatprep.subr.mxu0 0.0
        %2388 = vmatpush2.msra.mxu0 0.0
        %2389 = vmatprep.subr.mxu0 0.0
        %2390 = vmatpush2.msra.mxu0 0.0
        %2391 = vmatprep.subr.mxu0 0.0
        %2392 = vmatpush2.msra.mxu0 0.0
        %2393 = vmatprep.subr.mxu0 0.0
        %2394 = vmatpush2.msra.mxu0 0.0
        %2395 = vmatprep.subr.mxu0 0.0
        %2396 = vmatpush2.msra.mxu0 0.0
        %2397 = vmatprep.subr.mxu0 0.0
        %2398 = vmatpush2.msra.mxu0 0.0
        %2399 = vmatprep.mubr.f32.mxu0 0.0
        %2400 = vmatmul.mubr.f32.gmra.mxu0 %v1821
        %v2401 = vpop.f32.mrf.mxu0
        %v2402 = vadd.f32 %v2333, %v2401
        %v2403 = vpop.f32.mrf.mxu0
        %2404 = vmatprep.mubr.f32.mxu0 0.0
        %2405 = vmatmul.mubr.f32.gmra.mxu0 %v1984
        %v2406 = vpop.f32.mrf.mxu0
        %v2407 = vadd.f32 %v2333, %v2406
        %v2408 = vpop.f32.mrf.mxu0
        %2409 = vmatprep.mubr.f32.mxu0 0.0
        %2410 = vmatmul.mubr.f32.gmra.mxu0 %v2147
        %v2411 = vpop.f32.mrf.mxu0
        %v2412 = vadd.f32 %v2333, %v2411
        %v2413 = vpop.f32.mrf.mxu0
        %2414 = vmatprep.mubr.f32.mxu0 0.0
        %2415 = vmatmul.mubr.f32.gmra.mxu0 %v2310
        %v2416 = vpop.f32.mrf.mxu0
        %v2417 = vadd.f32 %v2333, %v2416
        %v2418 = vpop.f32.mrf.mxu0
        %2419 = vdwg.mxu0
        %v2420 = vxor.u32 %v2402, 2147483648
        %v2421 = vxor.u32 %v2407, 2147483648
        %v2422 = vxor.u32 %v2412, 2147483648
        %v2423 = vxor.u32 %v2417, 2147483648
        %v2424 = vmul.f32 %v2420, 1.442695
        %v2425 = vpow.pop %v2424
        %v2426 = vmul.f32 %v2421, 1.442695
        %v2427 = vpow.pop %v2426
        %v2428 = vmul.f32 %v2422, 1.442695
        %v2429 = vpow.pop %v2428
        %v2430 = vmul.f32 %v2423, 1.442695
        %v2431 = vpow.pop %v2430
        %v2432 = vadd.f32 %v2425, 1.0
        %v2433 = vadd.f32 %v2427, 1.0
        %v2434 = vadd.f32 %v2429, 1.0
        %v2435 = vadd.f32 %v2431, 1.0
        %v2436 = vrcp.pop %v2432
        %v2437 = vmul.f32 1.0, %v2436
        %v2438 = vrcp.pop %v2433
        %v2439 = vmul.f32 1.0, %v2438
        %v2440 = vrcp.pop %v2434
        %v2441 = vmul.f32 1.0, %v2440
        %v2442 = vrcp.pop %v2435
        %v2443 = vmul.f32 1.0, %v2442
        %2444 = vst [vmem:[%s432] sm:$0xff] %v2437
        %2445 = vst [vmem:[%s432 + $0x8] sm:$0xff] %v2439
        %2446 = vst [vmem:[%s432 + $0x10] sm:$0xff] %v2441
        %2447 = vst [vmem:[%s432 + $0x18] sm:$0xff] %v2443
        %s2448 = smul.u32 4, %s24
        %p2449 = scmp.lt.s32.totalorder %s2448, 7
        %s2450 = scalar_select %p2449, %s2448, 7
        %s2451 = smul.addr %s2450, 8
        %s2452 = scalar_lea.vmem %s11, %s2451
        // Predicated region
        $region81: #{gru_model_forward.1} parent=63 // pred_check
          %p2453 = pneg %p278
        $region82: #{gru_model_forward.1} parent=63 // pred_check_branch
          %2455 = sbr.rel (%p2453) target = $region84
        $region83: #{gru_model_forward.1} parent=63 // pred_region
          %s2456 = smul.u32 4, %s24
        $region84: #{gru_model_forward.1} parent=63 // pred_fallthru
          _
      $region64: #{gru_model_forward.1} parent=5 // pred_fallthru
        _
      %p2457 = scmp.le.s32.totalorder 2, %s19
      // Predicated region
      $region85: #{gru_model_forward.1} parent=5 // pred_check
        %p2458 = pneg %p2457
      $region86: #{gru_model_forward.1} parent=5 // pred_check_branch
        %2460 = sbr.rel (%p2458) target = $region88
      $region87: #{gru_model_forward.1} parent=5 // pred_region
        %s2461 = ssub.s32 %s19, 2
        // Predicated region
        $region89: #{gru_model_forward.1} parent=87 // pred_check
          %p2462 = pneg %p284
        $region90: #{gru_model_forward.1} parent=87 // pred_check_branch
          %2464 = sbr.rel (%p2462) target = $region92
        $region91: #{gru_model_forward.1} parent=87 // pred_region
          %s2465 = smul.u32 4, %s25
          %p2466 = scmp.lt.s32.totalorder %s2465, 7
          %s2467 = scalar_select %p2466, %s2465, 7
          %s2468 = smul.addr %s2467, 8
          %s2469 = scalar_lea.vmem %s11, %s2468
        $region92: #{gru_model_forward.1} parent=87 // pred_fallthru
          _
      $region88: #{gru_model_forward.1} parent=5 // pred_fallthru
        _
    $region6: #{gru_model_forward.1} parent=1 // loop_footer
      %s23 = sadd.s32 1, %s19
    $region7: #{gru_model_forward.1} parent=1 // loop_footer_branch
      %18 = sbr.rel target = $region3
    $region8: #{gru_model_forward.1} parent=1 // loop_exit
      _
    %2470 = vsyncpa [#allocation4], 1
    %s2471 = scalar_lea.sflag [#allocation4], 1
    %2472 = vsyncpa %s2471, 1
    %2473 = vsyncpa [#allocation6], 1

</llo_original>
